<compile_context>
chip_gen: v5e
topology: v5e:2x2
jax: 0.10.0
libtpu: 0.0.40
codegen_flags: <defaults>
</compile_context>

<pallas_src>
import functools

import jax
import jax.numpy as jnp
from jax.experimental import pallas as pl
from jax.experimental.pallas import tpu as pltpu

ACT_DTYPE = jnp.bfloat16
LN_EPS = 1e-5


def _hw_config():
    """Generation-aware tile caps / scoped-VMEM limit (v5e/v6e: 128 MiB VMEM, v7x: 64 MiB)."""
    try:
        vmem_bytes = int(pltpu.get_tpu_info().vmem_capacity_bytes)
    except Exception:
        vmem_bytes = 64 * 1024 * 1024  # conservative default
    if vmem_bytes >= 128 * 1024 * 1024:  # v5e / v6e
        return {"vmem_limit": 64 * 1024 * 1024, "tm_cap": 512, "tn_cap": 512, "tk_cap": 1024}
    # v7x (64 MiB per TensorCore) or unknown
    return {"vmem_limit": 40 * 1024 * 1024, "tm_cap": 256, "tn_cap": 256, "tk_cap": 512}


_CFG = _hw_config()


def _choose_tile(dim, cap, align):
    """Largest divisor of `dim` that is <= cap and a multiple of `align` (else full dim)."""
    if dim <= cap:
        return dim
    start = cap - (cap % align)
    for t in range(start, align - 1, -align):
        if dim % t == 0:
            return t
    # TODO(synk): switch to a cdiv grid with masked edge blocks for awkward dims instead
    # of falling back to a single full-dim tile.
    return dim


def _choose_row_tile_dividing(seq_len, cap):
    """Largest tile that divides seq_len, is a multiple of 8 and <= cap (pos-emb row reuse)."""
    best = None
    t = 8
    while t <= min(seq_len, cap):
        if seq_len % t == 0:
            best = t
        t += 8
    return best if best is not None else seq_len


# ----------------------------- tiled linear (+bias, +ReLU / +pos-emb) -------------------

def _matmul_kernel(x_ref, w_ref, b_ref, o_ref, acc_ref, *, relu):
    @pl.when(pl.program_id(2) == 0)
    def _init():
        acc_ref[...] = jnp.zeros_like(acc_ref)

    acc_ref[...] += jnp.dot(x_ref[...], w_ref[...], preferred_element_type=jnp.float32)

    @pl.when(pl.program_id(2) == pl.num_programs(2) - 1)
    def _finalize():
        out = acc_ref[...] + b_ref[...].astype(jnp.float32)
        if relu:
            out = jnp.maximum(out, 0.0)
        o_ref[...] = out.astype(o_ref.dtype)


def _matmul_pos_kernel(x_ref, w_ref, b_ref, pos_ref, o_ref, acc_ref):
    @pl.when(pl.program_id(2) == 0)
    def _init():
        acc_ref[...] = jnp.zeros_like(acc_ref)

    acc_ref[...] += jnp.dot(x_ref[...], w_ref[...], preferred_element_type=jnp.float32)

    @pl.when(pl.program_id(2) == pl.num_programs(2) - 1)
    def _finalize():
        out = (acc_ref[...] + b_ref[...].astype(jnp.float32)
               + pos_ref[...].astype(jnp.float32))
        o_ref[...] = out.astype(o_ref.dtype)


def linear(x, w, b, relu=False, pos=None, seq_len=None):
    """x: [M, K] (bf16), w: [K, N] ([in, out], bf16), b: [N] (f32).

    If `pos` ([seq_len, N]) is given, fuses the position-embedding add into the finalize
    step (the row tile is chosen to divide seq_len so each row tile maps to one pos tile).
    """
    M, K = x.shape
    N = w.shape[1]
    cfg = _CFG
    if pos is None:
        tm = _choose_tile(M, cfg["tm_cap"], 8)
    else:
        tm = _choose_row_tile_dividing(seq_len, cfg["tm_cap"])
    tn = _choose_tile(N, cfg["tn_cap"], 128)
    tk = _choose_tile(K, cfg["tk_cap"], 128)
    grid = (M // tm, N // tn, K // tk)

    if pos is None:
        kernel = functools.partial(_matmul_kernel, relu=relu)
        in_specs = [pl.BlockSpec((tm, tk), lambda i, j, k: (i, k)),
                    pl.BlockSpec((tk, tn), lambda i, j, k: (k, j)),
                    pl.BlockSpec((1, tn), lambda i, j, k: (0, j))]
        args = (x, w, b.reshape(1, N))
    else:
        n_pos_blocks = seq_len // tm
        kernel = _matmul_pos_kernel
        in_specs = [pl.BlockSpec((tm, tk), lambda i, j, k: (i, k)),
                    pl.BlockSpec((tk, tn), lambda i, j, k: (k, j)),
                    pl.BlockSpec((1, tn), lambda i, j, k: (0, j)),
                    pl.BlockSpec((tm, tn), lambda i, j, k: (i % n_pos_blocks, j))]
        args = (x, w, b.reshape(1, N), pos)

    return pl.pallas_call(
        kernel,
        out_shape=jax.ShapeDtypeStruct((M, N), x.dtype),
        grid=grid,
        in_specs=in_specs,
        out_specs=pl.BlockSpec((tm, tn), lambda i, j, k: (i, j)),
        scratch_shapes=[pltpu.VMEM((tm, tn), jnp.float32)],
        compiler_params=pltpu.CompilerParams(
            dimension_semantics=("parallel", "parallel", "arbitrary"),
            vmem_limit_bytes=cfg["vmem_limit"]),
    )(*args)


# ------------------- tiled linear fused with residual-add + LayerNorm ------------------

def _matmul_res_ln_kernel(x_ref, w_ref, b_ref, res_ref, g_ref, be_ref, o_ref, acc_ref, *, eps):
    @pl.when(pl.program_id(1) == 0)
    def _init():
        acc_ref[...] = jnp.zeros_like(acc_ref)

    acc_ref[...] += jnp.dot(x_ref[...], w_ref[...], preferred_element_type=jnp.float32)

    @pl.when(pl.program_id(1) == pl.num_programs(1) - 1)
    def _finalize():
        h = acc_ref[...] + b_ref[...].astype(jnp.float32) + res_ref[...].astype(jnp.float32)
        mu = jnp.mean(h, axis=-1, keepdims=True)
        var = jnp.mean(jnp.square(h - mu), axis=-1, keepdims=True)  # biased, matches torch LN
        y = (h - mu) * jax.lax.rsqrt(var + eps)
        o_ref[...] = (y * g_ref[...].astype(jnp.float32)
                      + be_ref[...].astype(jnp.float32)).astype(o_ref.dtype)


def linear_residual_ln(x, w, b, res, gamma, beta, eps=LN_EPS):
    """LayerNorm(res + x @ w + b) with the full feature axis resident per output tile."""
    M, K = x.shape
    N = w.shape[1]
    cfg = _CFG
    tm = _choose_tile(M, cfg["tm_cap"], 8)
    tk = _choose_tile(K, cfg["tk_cap"], 128)
    grid = (M // tm, K // tk)
    return pl.pallas_call(
        functools.partial(_matmul_res_ln_kernel, eps=eps),
        out_shape=jax.ShapeDtypeStruct((M, N), x.dtype),
        grid=grid,
        in_specs=[pl.BlockSpec((tm, tk), lambda i, k: (i, k)),
                  pl.BlockSpec((tk, N), lambda i, k: (k, 0)),
                  pl.BlockSpec((1, N), lambda i, k: (0, 0)),
                  pl.BlockSpec((tm, N), lambda i, k: (i, 0)),
                  pl.BlockSpec((1, N), lambda i, k: (0, 0)),
                  pl.BlockSpec((1, N), lambda i, k: (0, 0))],
        out_specs=pl.BlockSpec((tm, N), lambda i, k: (i, 0)),
        scratch_shapes=[pltpu.VMEM((tm, N), jnp.float32)],
        compiler_params=pltpu.CompilerParams(
            dimension_semantics=("parallel", "arbitrary"),
            vmem_limit_bytes=cfg["vmem_limit"]),
    )(x, w, b.reshape(1, N), res, gamma.reshape(1, N), beta.reshape(1, N))


# --------- fused multi-head attention + out_proj + residual-add + LayerNorm -------------

def _attn_outproj_ln_kernel(q_ref, k_ref, v_ref, w_ref, b_ref, res_ref, g_ref, be_ref,
                            o_ref, acc_ref, *, eps):
    # One (batch, head) per grid step.  q already carries the 1/sqrt(Dh) scale (folded
    # into the Q columns of in_proj at param-prep time).
    h = pl.program_id(1)

    @pl.when(h == 0)
    def _init():
        acc_ref[...] = jnp.zeros_like(acc_ref)

    q = q_ref[...]                                     # [L, Dh] bf16
    k = k_ref[...]
    v = v_ref[...]
    # q @ k^T; contraction on k's last dim may cost one XLU transpose per head (cheap
    # relative to the MXU work; XLU slot is otherwise idle here).
    s = jax.lax.dot_general(q, k, (((1,), (1,)), ((), ())),
                            preferred_element_type=jnp.float32)          # [L, L] f32
    m = jnp.max(s, axis=-1, keepdims=True)
    p = jnp.exp(s - m)                                                   # unnormalized probs
    denom = jnp.sum(p, axis=-1, keepdims=True)
    ctx = jnp.dot(p.astype(v.dtype), v, preferred_element_type=jnp.float32)  # [L, Dh]
    ctx = ctx * pl.reciprocal(denom, approx=True)      # deferred softmax normalization
    # Accumulate this head's contribution to out_proj: ctx_h @ W_out[h*Dh:(h+1)*Dh, :]
    acc_ref[...] += jnp.dot(ctx.astype(w_ref.dtype), w_ref[...],
                            preferred_element_type=jnp.float32)          # [L, E]

    @pl.when(h == pl.num_programs(1) - 1)
    def _finalize():
        hsum = (acc_ref[...] + b_ref[...].astype(jnp.float32)
                + res_ref[...].astype(jnp.float32))
        mu = jnp.mean(hsum, axis=-1, keepdims=True)
        var = jnp.mean(jnp.square(hsum - mu), axis=-1, keepdims=True)
        y = (hsum - mu) * jax.lax.rsqrt(var + eps)
        o_ref[...] = (y * g_ref[...].astype(jnp.float32)
                      + be_ref[...].astype(jnp.float32)).astype(o_ref.dtype)


def attn_outproj_residual_ln(qkv, w_out, b_out, res, gamma, beta, B, L, num_heads,
                             eps=LN_EPS):
    """LayerNorm(res + out_proj(MHA(qkv))) without materializing the attention output in HBM.

    qkv: [B*L, 3E] with columns [Q | K | V], head-major within each block.
    """
    M, threeE = qkv.shape
    E = threeE // 3
    H = num_heads
    Dh = E // H
    assert E % H == 0
    # (8,128) tiling rule for the per-head column blocks / per-batch row blocks.
    # TODO(synk): add an in-kernel head-loop fallback for Dh not a multiple of 128.
    assert Dh % 128 == 0, "head_dim must be lane-aligned (multiple of 128)"
    assert L % 8 == 0 or M == L, "sequence length must be a multiple of 8"
    cfg = _CFG
    return pl.pallas_call(
        functools.partial(_attn_outproj_ln_kernel, eps=eps),
        out_shape=jax.ShapeDtypeStruct((M, E), qkv.dtype),
        grid=(B, H),
        in_specs=[
            pl.BlockSpec((L, Dh), lambda b, h: (b, h)),            # Q head h
            pl.BlockSpec((L, Dh), lambda b, h: (b, H + h)),        # K head h
            pl.BlockSpec((L, Dh), lambda b, h: (b, 2 * H + h)),    # V head h
            pl.BlockSpec((Dh, E), lambda b, h: (h, 0)),            # out_proj rows for head h
            pl.BlockSpec((1, E), lambda b, h: (0, 0)),             # out_proj bias
            pl.BlockSpec((L, E), lambda b, h: (b, 0)),             # residual (resident per b)
            pl.BlockSpec((1, E), lambda b, h: (0, 0)),             # LN gamma
            pl.BlockSpec((1, E), lambda b, h: (0, 0)),             # LN beta
        ],
        out_specs=pl.BlockSpec((L, E), lambda b, h: (b, 0)),
        scratch_shapes=[pltpu.VMEM((L, E), jnp.float32)],
        compiler_params=pltpu.CompilerParams(
            dimension_semantics=("parallel", "arbitrary"),
            vmem_limit_bytes=cfg["vmem_limit"]),
    )(qkv, qkv, qkv, w_out, b_out.reshape(1, E), res,
      gamma.reshape(1, E), beta.reshape(1, E))


# ------------------------- parameters & forward -----------------------------

def init_params(key, input_dim, embed_dim, num_heads, num_layers, max_length,
                dtype=ACT_DTYPE):
    assert embed_dim % num_heads == 0
    E = embed_dim
    head_dim = E // num_heads
    q_scale = 1.0 / (head_dim ** 0.5)  # PyTorch MultiheadAttention query scaling

    def nrm(k, shape, scale=0.02):
        return (scale * jax.random.normal(k, shape, dtype=jnp.float32)).astype(dtype)

    keys = jax.random.split(key, 4 + num_layers)
    params = {
        # weights stored pre-transposed as [in, out] in bf16 (MXU inputs);
        # biases / LN affine params kept in f32 (added in the f32 epilogue).
        "in_emb_w": nrm(keys[0], (input_dim, E)),
        "in_emb_b": jnp.zeros((E,), jnp.float32),
        "pos_emb": nrm(keys[1], (max_length, E)),
        "coord_w": 0.02 * jax.random.normal(keys[2], (E, 2), dtype=jnp.float32),
        "coord_b": jnp.zeros((2,), jnp.float32),
        "layers": [],
    }
    for li in range(num_layers):
        lk = jax.random.split(keys[4 + li], 4)
        in_proj_w = nrm(lk[0], (E, 3 * E))            # columns = [Wq^T | Wk^T | Wv^T]
        in_proj_b = jnp.zeros((3 * E,), jnp.float32)
        # Fold the 1/sqrt(head_dim) query scale into the Q columns (and bias) so the
        # attention kernel never scales the [L, L] score matrix.
        in_proj_w = in_proj_w.at[:, :E].multiply(jnp.asarray(q_scale, in_proj_w.dtype))
        in_proj_b = in_proj_b.at[:E].multiply(q_scale)
        params["layers"].append({
            "in_proj_w": in_proj_w,
            "in_proj_b": in_proj_b,
            "out_proj_w": nrm(lk[1], (E, E)),
            "out_proj_b": jnp.zeros((E,), jnp.float32),
            "lin1_w": nrm(lk[2], (E, 4 * E)),
            "lin1_b": jnp.zeros((4 * E,), jnp.float32),
            "lin2_w": nrm(lk[3], (4 * E, E)),
            "lin2_b": jnp.zeros((E,), jnp.float32),
            "ln1_g": jnp.ones((E,), jnp.float32),
            "ln1_b": jnp.zeros((E,), jnp.float32),
            "ln2_g": jnp.ones((E,), jnp.float32),
            "ln2_b": jnp.zeros((E,), jnp.float32),
        })
    return params


def coordinate_transformer_forward(params, features, num_heads, aggregate=False):
    # TODO(synk): dropout layers are identity here (inference semantics); the
    # all-True key-padding mask of the reference forward is a no-op and elided.
    B, L, D = features.shape
    E = params["in_emb_w"].shape[1]
    dtype = params["in_emb_w"].dtype

    # input embedding with the position-embedding add fused into the matmul epilogue
    pos = params["pos_emb"][:L]
    x = linear(features.reshape(B * L, D).astype(dtype),
               params["in_emb_w"], params["in_emb_b"],
               pos=pos, seq_len=L)                                        # [B*L, E]

    # post-norm transformer encoder layers
    for lp in params["layers"]:
        qkv = linear(x, lp["in_proj_w"], lp["in_proj_b"])                 # [B*L, 3E]
        x = attn_outproj_residual_ln(qkv, lp["out_proj_w"], lp["out_proj_b"],
                                     x, lp["ln1_g"], lp["ln1_b"],
                                     B=B, L=L, num_heads=num_heads)       # LN(x + out_proj(MHA))
        ff = linear(x, lp["lin1_w"], lp["lin1_b"], relu=True)             # [B*L, 4E]
        x = linear_residual_ln(ff, lp["lin2_w"], lp["lin2_b"],
                               x, lp["ln2_g"], lp["ln2_b"])               # LN(x + lin2(ff))

    # coordinate head (N=2 sliver) in plain JAX: avoids masked partial stores / MXU waste.
    coords = (jnp.dot(x.astype(jnp.float32), params["coord_w"],
                      preferred_element_type=jnp.float32)
              + params["coord_b"]).reshape(B, L, 2)
    if L > 1:
        coords = coords.at[:, 0, :].set(jnp.array([0.0, 0.0], coords.dtype))
        coords = coords.at[:, -1, :].set(jnp.array([600.0, 0.0], coords.dtype))
    out = coords[:, :, 0] + coords[:, :, 1]
    return out.mean(axis=1) if aggregate else out


# ---------------------------------- main ------------------------------------

if __name__ == "__main__":
    # Small shapes consistent with the module (real model: 1024/1024/8 heads -> head_dim 128;
    # here 256/256/2 heads keeps head_dim=128 so the per-head blocking matches production).
    INPUT_DIM, EMBED_DIM, NUM_HEADS, NUM_LAYERS, MAX_LEN = 256, 256, 2, 2, 16
    B, L = 2, 8

    key = jax.random.PRNGKey(0)
    pkey, xkey = jax.random.split(key)
    params = init_params(pkey, INPUT_DIM, EMBED_DIM, NUM_HEADS, NUM_LAYERS, MAX_LEN)
    features = jax.random.normal(xkey, (B, L, INPUT_DIM), dtype=jnp.float32)

    fwd = jax.jit(functools.partial(coordinate_transformer_forward,
                                    num_heads=NUM_HEADS, aggregate=False))
    out = jax.block_until_ready(fwd(params, features))
    assert out.shape == (B, L), out.shape
    assert bool(jnp.all(jnp.isfinite(out)))
    print("KERNEL_OK")
</pallas_src>

<mosaic_0001>
module attributes {stable_mosaic.version = 11 : i64} {
  func.func @_matmul_pos_kernel(%arg0: i32, %arg1: i32, %arg2: i32, %arg3: memref<8x256xbf16, #tpu.memory_space<vmem>>, %arg4: memref<256x256xbf16, #tpu.memory_space<vmem>>, %arg5: memref<1x256xf32, #tpu.memory_space<vmem>>, %arg6: memref<8x256xbf16, #tpu.memory_space<vmem>>, %arg7: memref<8x256xbf16, #tpu.memory_space<vmem>>, %arg8: memref<8x256xf32, #tpu.memory_space<vmem>>) attributes {dimension_semantics = [#tpu.dimension_semantics<parallel>, #tpu.dimension_semantics<parallel>, #tpu.dimension_semantics<arbitrary>], iteration_bounds = array<i64: 2, 1, 1>, scalar_prefetch = 0 : i64, scratch_operands = 1 : i64, tpu.core_type = #tpu.core_type<tc>, window_params = [{transform_indices = @transform_0, window_bounds = array<i64: 8, 256>}, {transform_indices = @transform_1, window_bounds = array<i64: 256, 256>}, {transform_indices = @transform_2, window_bounds = array<i64: 1, 256>}, {transform_indices = @transform_3, window_bounds = array<i64: 8, 256>}, {transform_indices = @transform_4, window_bounds = array<i64: 8, 256>}]} {
    %c0_i32 = arith.constant 0 : i32
    %0 = arith.cmpi eq, %arg2, %c0_i32 : i32
    %1 = arith.extui %0 : i1 to i32
    %c0_i32_0 = arith.constant 0 : i32
    %2 = arith.cmpi ne, %1, %c0_i32_0 : i32
    scf.if %2 {
      %cst_10 = arith.constant 0.000000e+00 : f32
      %12 = vector.broadcast %cst_10 : f32 to vector<8x256xf32>
      %c0_11 = arith.constant 0 : index
      %c0_12 = arith.constant 0 : index
      %13 = vector.load %arg8[%c0_11, %c0_12] : memref<8x256xf32, #tpu.memory_space<vmem>>, vector<8x256xf32>
      tpu.vector_store %arg8[%c0_11, %c0_12], %12 {strides = array<i32>} : memref<8x256xf32, #tpu.memory_space<vmem>>, vector<8x256xf32>,
    } else {
    }
    %c0 = arith.constant 0 : index
    %c0_1 = arith.constant 0 : index
    %3 = vector.load %arg8[%c0, %c0_1] : memref<8x256xf32, #tpu.memory_space<vmem>>, vector<8x256xf32>
    %c0_2 = arith.constant 0 : index
    %c0_3 = arith.constant 0 : index
    %4 = vector.load %arg3[%c0_2, %c0_3] : memref<8x256xbf16, #tpu.memory_space<vmem>>, vector<8x256xbf16>
    %c0_4 = arith.constant 0 : index
    %c0_5 = arith.constant 0 : index
    %5 = vector.load %arg4[%c0_4, %c0_5] : memref<256x256xbf16, #tpu.memory_space<vmem>>, vector<256x256xbf16>
    %cst = arith.constant dense<0.000000e+00> : vector<8x256xf32>
    %6 = tpu.matmul %4, %5, %cst {dimension_numbers = #tpu.dot_dimension_numbers<[1], [0], [0], [1], [0, 0, 1, 1], [], []>} : vector<8x256xbf16>, vector<256x256xbf16>, vector<8x256xf32> -> vector<8x256xf32>
    %7 = arith.addf %3, %6 : vector<8x256xf32>
    %c0_6 = arith.constant 0 : index
    %c0_7 = arith.constant 0 : index
    %8 = vector.load %arg8[%c0_6, %c0_7] : memref<8x256xf32, #tpu.memory_space<vmem>>, vector<8x256xf32>
    tpu.vector_store %arg8[%c0_6, %c0_7], %7 {strides = array<i32>} : memref<8x256xf32, #tpu.memory_space<vmem>>, vector<8x256xf32>,
    %c0_i32_8 = arith.constant 0 : i32
    %9 = arith.cmpi eq, %arg2, %c0_i32_8 : i32
    %10 = arith.extui %9 : i1 to i32
    %c0_i32_9 = arith.constant 0 : i32
    %11 = arith.cmpi ne, %10, %c0_i32_9 : i32
    scf.if %11 {
      %c0_10 = arith.constant 0 : index
      %c0_11 = arith.constant 0 : index
      %12 = vector.load %arg8[%c0_10, %c0_11] : memref<8x256xf32, #tpu.memory_space<vmem>>, vector<8x256xf32>
      %c0_12 = arith.constant 0 : index
      %c0_13 = arith.constant 0 : index
      %13 = vector.load %arg5[%c0_12, %c0_13] : memref<1x256xf32, #tpu.memory_space<vmem>>, vector<1x256xf32>
      %14 = vector.broadcast %13 : vector<1x256xf32> to vector<8x256xf32>
      %15 = arith.addf %12, %14 : vector<8x256xf32>
      %c0_14 = arith.constant 0 : index
      %c0_15 = arith.constant 0 : index
      %16 = vector.load %arg6[%c0_14, %c0_15] : memref<8x256xbf16, #tpu.memory_space<vmem>>, vector<8x256xbf16>
      %17 = arith.extf %16 : vector<8x256xbf16> to vector<8x256xf32>
      %18 = arith.addf %15, %17 : vector<8x256xf32>
      %19 = arith.truncf %18 : vector<8x256xf32> to vector<8x256xbf16>
      %c0_16 = arith.constant 0 : index
      %c0_17 = arith.constant 0 : index
      %20 = vector.load %arg7[%c0_16, %c0_17] : memref<8x256xbf16, #tpu.memory_space<vmem>>, vector<8x256xbf16>
      tpu.vector_store %arg7[%c0_16, %c0_17], %19 {strides = array<i32>} : memref<8x256xbf16, #tpu.memory_space<vmem>>, vector<8x256xbf16>,
    } else {
    }
    return
  }
  func.func @transform_0(%arg0: i32, %arg1: i32, %arg2: i32) -> (i32, i32) {
    %c0_i32 = arith.constant 0 : i32
    return %arg0, %arg2 : i32, i32
  }
  func.func @transform_1(%arg0: i32, %arg1: i32, %arg2: i32) -> (i32, i32) {
    %c0_i32 = arith.constant 0 : i32
    return %arg2, %arg1 : i32, i32
  }
  func.func @transform_2(%arg0: i32, %arg1: i32, %arg2: i32) -> (i32, i32) {
    %c0_i32 = arith.constant 0 : i32
    %c0_i32_0 = arith.constant 0 : i32
    return %c0_i32, %arg1 : i32, i32
  }
  func.func @transform_3(%arg0: i32, %arg1: i32, %arg2: i32) -> (i32, i32) {
    %c1_i32 = arith.constant 1 : i32
    %c0_i32 = arith.constant 0 : i32
    %0 = arith.cmpi eq, %c1_i32, %c0_i32 : i32
    %c1_i32_0 = arith.constant 1 : i32
    %1 = arith.select %0, %c1_i32_0, %c1_i32 : i32
    %2 = arith.remsi %arg0, %1 : i32
    %c0_i32_1 = arith.constant 0 : i32
    %3 = arith.cmpi ne, %2, %c0_i32_1 : i32
    %c0_i32_2 = arith.constant 0 : i32
    %4 = arith.cmpi slt, %2, %c0_i32_2 : i32
    %c0_i32_3 = arith.constant 0 : i32
    %5 = arith.cmpi slt, %1, %c0_i32_3 : i32
    %6 = arith.xori %4, %5 : i1
    %7 = arith.andi %6, %3 : i1
    %8 = arith.addi %2, %1 : i32
    %9 = arith.select %7, %8, %2 : i32
    %c0_i32_4 = arith.constant 0 : i32
    return %9, %arg1 : i32, i32
  }
  func.func @transform_4(%arg0: i32, %arg1: i32, %arg2: i32) -> (i32, i32) {
    %c0_i32 = arith.constant 0 : i32
    return %arg0, %arg1 : i32, i32
  }
}

module attributes {stable_mosaic.version = 11 : i64} {
  func.func @_matmul_kernel(%arg0: i32, %arg1: i32, %arg2: i32, %arg3: memref<16x256xbf16, #tpu.memory_space<vmem>>, %arg4: memref<256x256xbf16, #tpu.memory_space<vmem>>, %arg5: memref<1x256xf32, #tpu.memory_space<vmem>>, %arg6: memref<16x256xbf16, #tpu.memory_space<vmem>>, %arg7: memref<16x256xf32, #tpu.memory_space<vmem>>) attributes {dimension_semantics = [#tpu.dimension_semantics<parallel>, #tpu.dimension_semantics<parallel>, #tpu.dimension_semantics<arbitrary>], iteration_bounds = array<i64: 1, 3, 1>, scalar_prefetch = 0 : i64, scratch_operands = 1 : i64, tpu.core_type = #tpu.core_type<tc>, window_params = [{transform_indices = @transform_0, window_bounds = array<i64: 16, 256>}, {transform_indices = @transform_1, window_bounds = array<i64: 256, 256>}, {transform_indices = @transform_2, window_bounds = array<i64: 1, 256>}, {transform_indices = @transform_3, window_bounds = array<i64: 16, 256>}]} {
    %c0_i32 = arith.constant 0 : i32
    %0 = arith.cmpi eq, %arg2, %c0_i32 : i32
    %1 = arith.extui %0 : i1 to i32
    %c0_i32_0 = arith.constant 0 : i32
    %2 = arith.cmpi ne, %1, %c0_i32_0 : i32
    scf.if %2 {
      %cst_10 = arith.constant 0.000000e+00 : f32
      %12 = vector.broadcast %cst_10 : f32 to vector<16x256xf32>
      %c0_11 = arith.constant 0 : index
      %c0_12 = arith.constant 0 : index
      %13 = vector.load %arg7[%c0_11, %c0_12] : memref<16x256xf32, #tpu.memory_space<vmem>>, vector<16x256xf32>
      tpu.vector_store %arg7[%c0_11, %c0_12], %12 {strides = array<i32>} : memref<16x256xf32, #tpu.memory_space<vmem>>, vector<16x256xf32>,
    } else {
    }
    %c0 = arith.constant 0 : index
    %c0_1 = arith.constant 0 : index
    %3 = vector.load %arg7[%c0, %c0_1] : memref<16x256xf32, #tpu.memory_space<vmem>>, vector<16x256xf32>
    %c0_2 = arith.constant 0 : index
    %c0_3 = arith.constant 0 : index
    %4 = vector.load %arg3[%c0_2, %c0_3] : memref<16x256xbf16, #tpu.memory_space<vmem>>, vector<16x256xbf16>
    %c0_4 = arith.constant 0 : index
    %c0_5 = arith.constant 0 : index
    %5 = vector.load %arg4[%c0_4, %c0_5] : memref<256x256xbf16, #tpu.memory_space<vmem>>, vector<256x256xbf16>
    %cst = arith.constant dense<0.000000e+00> : vector<16x256xf32>
    %6 = tpu.matmul %4, %5, %cst {dimension_numbers = #tpu.dot_dimension_numbers<[1], [0], [0], [1], [0, 0, 1, 1], [], []>} : vector<16x256xbf16>, vector<256x256xbf16>, vector<16x256xf32> -> vector<16x256xf32>
    %7 = arith.addf %3, %6 : vector<16x256xf32>
    %c0_6 = arith.constant 0 : index
    %c0_7 = arith.constant 0 : index
    %8 = vector.load %arg7[%c0_6, %c0_7] : memref<16x256xf32, #tpu.memory_space<vmem>>, vector<16x256xf32>
    tpu.vector_store %arg7[%c0_6, %c0_7], %7 {strides = array<i32>} : memref<16x256xf32, #tpu.memory_space<vmem>>, vector<16x256xf32>,
    %c0_i32_8 = arith.constant 0 : i32
    %9 = arith.cmpi eq, %arg2, %c0_i32_8 : i32
    %10 = arith.extui %9 : i1 to i32
    %c0_i32_9 = arith.constant 0 : i32
    %11 = arith.cmpi ne, %10, %c0_i32_9 : i32
    scf.if %11 {
      %c0_10 = arith.constant 0 : index
      %c0_11 = arith.constant 0 : index
      %12 = vector.load %arg7[%c0_10, %c0_11] : memref<16x256xf32, #tpu.memory_space<vmem>>, vector<16x256xf32>
      %c0_12 = arith.constant 0 : index
      %c0_13 = arith.constant 0 : index
      %13 = vector.load %arg5[%c0_12, %c0_13] : memref<1x256xf32, #tpu.memory_space<vmem>>, vector<1x256xf32>
      %14 = vector.broadcast %13 : vector<1x256xf32> to vector<16x256xf32>
      %15 = arith.addf %12, %14 : vector<16x256xf32>
      %16 = arith.truncf %15 : vector<16x256xf32> to vector<16x256xbf16>
      %c0_14 = arith.constant 0 : index
      %c0_15 = arith.constant 0 : index
      %17 = vector.load %arg6[%c0_14, %c0_15] : memref<16x256xbf16, #tpu.memory_space<vmem>>, vector<16x256xbf16>
      tpu.vector_store %arg6[%c0_14, %c0_15], %16 {strides = array<i32>} : memref<16x256xbf16, #tpu.memory_space<vmem>>, vector<16x256xbf16>,
    } else {
    }
    return
  }
  func.func @transform_0(%arg0: i32, %arg1: i32, %arg2: i32) -> (i32, i32) {
    %c0_i32 = arith.constant 0 : i32
    return %arg0, %arg2 : i32, i32
  }
  func.func @transform_1(%arg0: i32, %arg1: i32, %arg2: i32) -> (i32, i32) {
    %c0_i32 = arith.constant 0 : i32
    return %arg2, %arg1 : i32, i32
  }
  func.func @transform_2(%arg0: i32, %arg1: i32, %arg2: i32) -> (i32, i32) {
    %c0_i32 = arith.constant 0 : i32
    %c0_i32_0 = arith.constant 0 : i32
    return %c0_i32, %arg1 : i32, i32
  }
  func.func @transform_3(%arg0: i32, %arg1: i32, %arg2: i32) -> (i32, i32) {
    %c0_i32 = arith.constant 0 : i32
    return %arg0, %arg1 : i32, i32
  }
}

module attributes {stable_mosaic.version = 11 : i64} {
  func.func @_attn_outproj_ln_kernel(%arg0: i32, %arg1: i32, %arg2: memref<8x128xbf16, #tpu.memory_space<vmem>>, %arg3: memref<8x128xbf16, #tpu.memory_space<vmem>>, %arg4: memref<8x128xbf16, #tpu.memory_space<vmem>>, %arg5: memref<128x256xbf16, #tpu.memory_space<vmem>>, %arg6: memref<1x256xf32, #tpu.memory_space<vmem>>, %arg7: memref<8x256xbf16, #tpu.memory_space<vmem>>, %arg8: memref<1x256xf32, #tpu.memory_space<vmem>>, %arg9: memref<1x256xf32, #tpu.memory_space<vmem>>, %arg10: memref<8x256xbf16, #tpu.memory_space<vmem>>, %arg11: memref<8x256xf32, #tpu.memory_space<vmem>>) attributes {dimension_semantics = [#tpu.dimension_semantics<parallel>, #tpu.dimension_semantics<arbitrary>], iteration_bounds = array<i64: 2, 2>, scalar_prefetch = 0 : i64, scratch_operands = 1 : i64, tpu.core_type = #tpu.core_type<tc>, window_params = [{transform_indices = @transform_0, window_bounds = array<i64: 8, 128>}, {transform_indices = @transform_1, window_bounds = array<i64: 8, 128>}, {transform_indices = @transform_2, window_bounds = array<i64: 8, 128>}, {transform_indices = @transform_3, window_bounds = array<i64: 128, 256>}, {pipeline_mode = #tpu.pipeline_mode<synchronous>, transform_indices = @transform_4, window_bounds = array<i64: 1, 256>}, {transform_indices = @transform_5, window_bounds = array<i64: 8, 256>}, {pipeline_mode = #tpu.pipeline_mode<synchronous>, transform_indices = @transform_6, window_bounds = array<i64: 1, 256>}, {pipeline_mode = #tpu.pipeline_mode<synchronous>, transform_indices = @transform_7, window_bounds = array<i64: 1, 256>}, {transform_indices = @transform_8, window_bounds = array<i64: 8, 256>}]} {
    %c0_i32 = arith.constant 0 : i32
    %0 = arith.cmpi eq, %arg1, %c0_i32 : i32
    %1 = arith.extui %0 : i1 to i32
    %c0_i32_0 = arith.constant 0 : i32
    %2 = arith.cmpi ne, %1, %c0_i32_0 : i32
    scf.if %2 {
      %cst_17 = arith.constant 0.000000e+00 : f32
      %28 = vector.broadcast %cst_17 : f32 to vector<8x256xf32>
      %c0_18 = arith.constant 0 : index
      %c0_19 = arith.constant 0 : index
      %29 = vector.load %arg11[%c0_18, %c0_19] : memref<8x256xf32, #tpu.memory_space<vmem>>, vector<8x256xf32>
      tpu.vector_store %arg11[%c0_18, %c0_19], %28 {strides = array<i32>} : memref<8x256xf32, #tpu.memory_space<vmem>>, vector<8x256xf32>,
    } else {
    }
    %c0 = arith.constant 0 : index
    %c0_1 = arith.constant 0 : index
    %3 = vector.load %arg2[%c0, %c0_1] : memref<8x128xbf16, #tpu.memory_space<vmem>>, vector<8x128xbf16>
    %c0_2 = arith.constant 0 : index
    %c0_3 = arith.constant 0 : index
    %4 = vector.load %arg3[%c0_2, %c0_3] : memref<8x128xbf16, #tpu.memory_space<vmem>>, vector<8x128xbf16>
    %c0_4 = arith.constant 0 : index
    %c0_5 = arith.constant 0 : index
    %5 = vector.load %arg4[%c0_4, %c0_5] : memref<8x128xbf16, #tpu.memory_space<vmem>>, vector<8x128xbf16>
    %cst = arith.constant dense<0.000000e+00> : vector<8x8xf32>
    %6 = tpu.matmul %3, %4, %cst {dimension_numbers = #tpu.dot_dimension_numbers<[1], [1], [0], [0], [0, 0, 1, 0], [], []>} : vector<8x128xbf16>, vector<8x128xbf16>, vector<8x8xf32> -> vector<8x8xf32>
    %cst_6 = arith.constant dense<0xFF800000> : vector<8xf32>
    %7 = vector.multi_reduction <maximumf>, %6, %cst_6 [1] : vector<8x8xf32> to vector<8xf32>
    %8 = vector.shape_cast %7 : vector<8xf32> to vector<8x1xf32>
    %9 = vector.broadcast %8 : vector<8x1xf32> to vector<8x8xf32>
    %10 = arith.subf %6, %9 : vector<8x8xf32>
    %11 = math.exp %10 : vector<8x8xf32>
    %cst_7 = arith.constant dense<0.000000e+00> : vector<8xf32>
    %12 = vector.multi_reduction <add>, %11, %cst_7 [1] : vector<8x8xf32> to vector<8xf32>
    %13 = vector.shape_cast %12 : vector<8xf32> to vector<8x1xf32>
    %14 = arith.truncf %11 : vector<8x8xf32> to vector<8x8xbf16>
    %cst_8 = arith.constant dense<0.000000e+00> : vector<8x128xf32>
    %15 = tpu.matmul %14, %5, %cst_8 {dimension_numbers = #tpu.dot_dimension_numbers<[1], [0], [0], [1], [0, 0, 1, 1], [], []>} : vector<8x8xbf16>, vector<8x128xbf16>, vector<8x128xf32> -> vector<8x128xf32>
    %16 = tpu.reciprocal %13 {approx = true} : vector<8x1xf32> -> vector<8x1xf32>
    %17 = vector.broadcast %16 : vector<8x1xf32> to vector<8x128xf32>
    %18 = arith.mulf %15, %17 : vector<8x128xf32>
    %c0_9 = arith.constant 0 : index
    %c0_10 = arith.constant 0 : index
    %19 = vector.load %arg11[%c0_9, %c0_10] : memref<8x256xf32, #tpu.memory_space<vmem>>, vector<8x256xf32>
    %20 = arith.truncf %18 : vector<8x128xf32> to vector<8x128xbf16>
    %c0_11 = arith.constant 0 : index
    %c0_12 = arith.constant 0 : index
    %21 = vector.load %arg5[%c0_11, %c0_12] : memref<128x256xbf16, #tpu.memory_space<vmem>>, vector<128x256xbf16>
    %cst_13 = arith.constant dense<0.000000e+00> : vector<8x256xf32>
    %22 = tpu.matmul %20, %21, %cst_13 {dimension_numbers = #tpu.dot_dimension_numbers<[1], [0], [0], [1], [0, 0, 1, 1], [], []>} : vector<8x128xbf16>, vector<128x256xbf16>, vector<8x256xf32> -> vector<8x256xf32>
    %23 = arith.addf %19, %22 : vector<8x256xf32>
    %c0_14 = arith.constant 0 : index
    %c0_15 = arith.constant 0 : index
    %24 = vector.load %arg11[%c0_14, %c0_15] : memref<8x256xf32, #tpu.memory_space<vmem>>, vector<8x256xf32>
    tpu.vector_store %arg11[%c0_14, %c0_15], %23 {strides = array<i32>} : memref<8x256xf32, #tpu.memory_space<vmem>>, vector<8x256xf32>,
    %c1_i32 = arith.constant 1 : i32
    %25 = arith.cmpi eq, %arg1, %c1_i32 : i32
    %26 = arith.extui %25 : i1 to i32
    %c0_i32_16 = arith.constant 0 : i32
    %27 = arith.cmpi ne, %26, %c0_i32_16 : i32
    scf.if %27 {
      %c0_17 = arith.constant 0 : index
      %c0_18 = arith.constant 0 : index
      %28 = vector.load %arg11[%c0_17, %c0_18] : memref<8x256xf32, #tpu.memory_space<vmem>>, vector<8x256xf32>
      %c0_19 = arith.constant 0 : index
      %c0_20 = arith.constant 0 : index
      %29 = vector.load %arg6[%c0_19, %c0_20] : memref<1x256xf32, #tpu.memory_space<vmem>>, vector<1x256xf32>
      %30 = vector.broadcast %29 : vector<1x256xf32> to vector<8x256xf32>
      %31 = arith.addf %28, %30 : vector<8x256xf32>
      %c0_21 = arith.constant 0 : index
      %c0_22 = arith.constant 0 : index
      %32 = vector.load %arg7[%c0_21, %c0_22] : memref<8x256xbf16, #tpu.memory_space<vmem>>, vector<8x256xbf16>
      %33 = arith.extf %32 : vector<8x256xbf16> to vector<8x256xf32>
      %34 = arith.addf %31, %33 : vector<8x256xf32>
      %cst_23 = arith.constant dense<0.000000e+00> : vector<8xf32>
      %35 = vector.multi_reduction <add>, %34, %cst_23 [1] : vector<8x256xf32> to vector<8xf32>
      %36 = vector.shape_cast %35 : vector<8xf32> to vector<8x1xf32>
      %cst_24 = arith.constant 2.560000e+02 : f32
      %37 = vector.broadcast %cst_24 : f32 to vector<8x1xf32>
      %38 = arith.divf %36, %37 : vector<8x1xf32>
      %39 = vector.broadcast %38 : vector<8x1xf32> to vector<8x256xf32>
      %40 = arith.subf %34, %39 : vector<8x256xf32>
      %41 = arith.mulf %40, %40 : vector<8x256xf32>
      %cst_25 = arith.constant dense<0.000000e+00> : vector<8xf32>
      %42 = vector.multi_reduction <add>, %41, %cst_25 [1] : vector<8x256xf32> to vector<8xf32>
      %43 = vector.shape_cast %42 : vector<8xf32> to vector<8x1xf32>
      %cst_26 = arith.constant 2.560000e+02 : f32
      %44 = vector.broadcast %cst_26 : f32 to vector<8x1xf32>
      %45 = arith.divf %43, %44 : vector<8x1xf32>
      %46 = vector.broadcast %38 : vector<8x1xf32> to vector<8x256xf32>
      %47 = arith.subf %34, %46 : vector<8x256xf32>
      %cst_27 = arith.constant 9.99999974E-6 : f32
      %48 = vector.broadcast %cst_27 : f32 to vector<8x1xf32>
      %49 = arith.addf %45, %48 : vector<8x1xf32>
      %50 = math.rsqrt %49 : vector<8x1xf32>
      %51 = vector.broadcast %50 : vector<8x1xf32> to vector<8x256xf32>
      %52 = arith.mulf %47, %51 : vector<8x256xf32>
      %c0_28 = arith.constant 0 : index
      %c0_29 = arith.constant 0 : index
      %53 = vector.load %arg8[%c0_28, %c0_29] : memref<1x256xf32, #tpu.memory_space<vmem>>, vector<1x256xf32>
      %54 = vector.broadcast %53 : vector<1x256xf32> to vector<8x256xf32>
      %55 = arith.mulf %52, %54 : vector<8x256xf32>
      %c0_30 = arith.constant 0 : index
      %c0_31 = arith.constant 0 : index
      %56 = vector.load %arg9[%c0_30, %c0_31] : memref<1x256xf32, #tpu.memory_space<vmem>>, vector<1x256xf32>
      %57 = vector.broadcast %56 : vector<1x256xf32> to vector<8x256xf32>
      %58 = arith.addf %55, %57 : vector<8x256xf32>
      %59 = arith.truncf %58 : vector<8x256xf32> to vector<8x256xbf16>
      %c0_32 = arith.constant 0 : index
      %c0_33 = arith.constant 0 : index
      %60 = vector.load %arg10[%c0_32, %c0_33] : memref<8x256xbf16, #tpu.memory_space<vmem>>, vector<8x256xbf16>
      tpu.vector_store %arg10[%c0_32, %c0_33], %59 {strides = array<i32>} : memref<8x256xbf16, #tpu.memory_space<vmem>>, vector<8x256xbf16>,
    } else {
    }
    return
  }
  func.func @transform_0(%arg0: i32, %arg1: i32) -> (i32, i32) {
    %c0_i32 = arith.constant 0 : i32
    return %arg0, %arg1 : i32, i32
  }
  func.func @transform_1(%arg0: i32, %arg1: i32) -> (i32, i32) {
    %c2_i32 = arith.constant 2 : i32
    %0 = arith.addi %c2_i32, %arg1 : i32
    %c0_i32 = arith.constant 0 : i32
    return %arg0, %0 : i32, i32
  }
  func.func @transform_2(%arg0: i32, %arg1: i32) -> (i32, i32) {
    %c4_i32 = arith.constant 4 : i32
    %0 = arith.addi %c4_i32, %arg1 : i32
    %c0_i32 = arith.constant 0 : i32
    return %arg0, %0 : i32, i32
  }
  func.func @transform_3(%arg0: i32, %arg1: i32) -> (i32, i32) {
    %c0_i32 = arith.constant 0 : i32
    %c0_i32_0 = arith.constant 0 : i32
    return %arg1, %c0_i32 : i32, i32
  }
  func.func @transform_4(%arg0: i32, %arg1: i32) -> (i32, i32) {
    %c0_i32 = arith.constant 0 : i32
    %c0_i32_0 = arith.constant 0 : i32
    %c0_i32_1 = arith.constant 0 : i32
    return %c0_i32, %c0_i32_0 : i32, i32
  }
  func.func @transform_5(%arg0: i32, %arg1: i32) -> (i32, i32) {
    %c0_i32 = arith.constant 0 : i32
    %c0_i32_0 = arith.constant 0 : i32
    return %arg0, %c0_i32 : i32, i32
  }
  func.func @transform_6(%arg0: i32, %arg1: i32) -> (i32, i32) {
    %c0_i32 = arith.constant 0 : i32
    %c0_i32_0 = arith.constant 0 : i32
    %c0_i32_1 = arith.constant 0 : i32
    return %c0_i32, %c0_i32_0 : i32, i32
  }
  func.func @transform_7(%arg0: i32, %arg1: i32) -> (i32, i32) {
    %c0_i32 = arith.constant 0 : i32
    %c0_i32_0 = arith.constant 0 : i32
    %c0_i32_1 = arith.constant 0 : i32
    return %c0_i32, %c0_i32_0 : i32, i32
  }
  func.func @transform_8(%arg0: i32, %arg1: i32) -> (i32, i32) {
    %c0_i32 = arith.constant 0 : i32
    %c0_i32_0 = arith.constant 0 : i32
    return %arg0, %c0_i32 : i32, i32
  }
}

module attributes {stable_mosaic.version = 11 : i64} {
  func.func @_matmul_kernel(%arg0: i32, %arg1: i32, %arg2: i32, %arg3: memref<16x256xbf16, #tpu.memory_space<vmem>>, %arg4: memref<256x256xbf16, #tpu.memory_space<vmem>>, %arg5: memref<1x256xf32, #tpu.memory_space<vmem>>, %arg6: memref<16x256xbf16, #tpu.memory_space<vmem>>, %arg7: memref<16x256xf32, #tpu.memory_space<vmem>>) attributes {dimension_semantics = [#tpu.dimension_semantics<parallel>, #tpu.dimension_semantics<parallel>, #tpu.dimension_semantics<arbitrary>], iteration_bounds = array<i64: 1, 4, 1>, scalar_prefetch = 0 : i64, scratch_operands = 1 : i64, tpu.core_type = #tpu.core_type<tc>, window_params = [{transform_indices = @transform_0, window_bounds = array<i64: 16, 256>}, {transform_indices = @transform_1, window_bounds = array<i64: 256, 256>}, {transform_indices = @transform_2, window_bounds = array<i64: 1, 256>}, {transform_indices = @transform_3, window_bounds = array<i64: 16, 256>}]} {
    %c0_i32 = arith.constant 0 : i32
    %0 = arith.cmpi eq, %arg2, %c0_i32 : i32
    %1 = arith.extui %0 : i1 to i32
    %c0_i32_0 = arith.constant 0 : i32
    %2 = arith.cmpi ne, %1, %c0_i32_0 : i32
    scf.if %2 {
      %cst_10 = arith.constant 0.000000e+00 : f32
      %12 = vector.broadcast %cst_10 : f32 to vector<16x256xf32>
      %c0_11 = arith.constant 0 : index
      %c0_12 = arith.constant 0 : index
      %13 = vector.load %arg7[%c0_11, %c0_12] : memref<16x256xf32, #tpu.memory_space<vmem>>, vector<16x256xf32>
      tpu.vector_store %arg7[%c0_11, %c0_12], %12 {strides = array<i32>} : memref<16x256xf32, #tpu.memory_space<vmem>>, vector<16x256xf32>,
    } else {
    }
    %c0 = arith.constant 0 : index
    %c0_1 = arith.constant 0 : index
    %3 = vector.load %arg7[%c0, %c0_1] : memref<16x256xf32, #tpu.memory_space<vmem>>, vector<16x256xf32>
    %c0_2 = arith.constant 0 : index
    %c0_3 = arith.constant 0 : index
    %4 = vector.load %arg3[%c0_2, %c0_3] : memref<16x256xbf16, #tpu.memory_space<vmem>>, vector<16x256xbf16>
    %c0_4 = arith.constant 0 : index
    %c0_5 = arith.constant 0 : index
    %5 = vector.load %arg4[%c0_4, %c0_5] : memref<256x256xbf16, #tpu.memory_space<vmem>>, vector<256x256xbf16>
    %cst = arith.constant dense<0.000000e+00> : vector<16x256xf32>
    %6 = tpu.matmul %4, %5, %cst {dimension_numbers = #tpu.dot_dimension_numbers<[1], [0], [0], [1], [0, 0, 1, 1], [], []>} : vector<16x256xbf16>, vector<256x256xbf16>, vector<16x256xf32> -> vector<16x256xf32>
    %7 = arith.addf %3, %6 : vector<16x256xf32>
    %c0_6 = arith.constant 0 : index
    %c0_7 = arith.constant 0 : index
    %8 = vector.load %arg7[%c0_6, %c0_7] : memref<16x256xf32, #tpu.memory_space<vmem>>, vector<16x256xf32>
    tpu.vector_store %arg7[%c0_6, %c0_7], %7 {strides = array<i32>} : memref<16x256xf32, #tpu.memory_space<vmem>>, vector<16x256xf32>,
    %c0_i32_8 = arith.constant 0 : i32
    %9 = arith.cmpi eq, %arg2, %c0_i32_8 : i32
    %10 = arith.extui %9 : i1 to i32
    %c0_i32_9 = arith.constant 0 : i32
    %11 = arith.cmpi ne, %10, %c0_i32_9 : i32
    scf.if %11 {
      %c0_10 = arith.constant 0 : index
      %c0_11 = arith.constant 0 : index
      %12 = vector.load %arg7[%c0_10, %c0_11] : memref<16x256xf32, #tpu.memory_space<vmem>>, vector<16x256xf32>
      %c0_12 = arith.constant 0 : index
      %c0_13 = arith.constant 0 : index
      %13 = vector.load %arg5[%c0_12, %c0_13] : memref<1x256xf32, #tpu.memory_space<vmem>>, vector<1x256xf32>
      %14 = vector.broadcast %13 : vector<1x256xf32> to vector<16x256xf32>
      %15 = arith.addf %12, %14 : vector<16x256xf32>
      %cst_14 = arith.constant 0.000000e+00 : f32
      %16 = vector.broadcast %cst_14 : f32 to vector<16x256xf32>
      %17 = arith.maximumf %15, %16 : vector<16x256xf32>
      %18 = arith.truncf %17 : vector<16x256xf32> to vector<16x256xbf16>
      %c0_15 = arith.constant 0 : index
      %c0_16 = arith.constant 0 : index
      %19 = vector.load %arg6[%c0_15, %c0_16] : memref<16x256xbf16, #tpu.memory_space<vmem>>, vector<16x256xbf16>
      tpu.vector_store %arg6[%c0_15, %c0_16], %18 {strides = array<i32>} : memref<16x256xbf16, #tpu.memory_space<vmem>>, vector<16x256xbf16>,
    } else {
    }
    return
  }
  func.func @transform_0(%arg0: i32, %arg1: i32, %arg2: i32) -> (i32, i32) {
    %c0_i32 = arith.constant 0 : i32
    return %arg0, %arg2 : i32, i32
  }
  func.func @transform_1(%arg0: i32, %arg1: i32, %arg2: i32) -> (i32, i32) {
    %c0_i32 = arith.constant 0 : i32
    return %arg2, %arg1 : i32, i32
  }
  func.func @transform_2(%arg0: i32, %arg1: i32, %arg2: i32) -> (i32, i32) {
    %c0_i32 = arith.constant 0 : i32
    %c0_i32_0 = arith.constant 0 : i32
    return %c0_i32, %arg1 : i32, i32
  }
  func.func @transform_3(%arg0: i32, %arg1: i32, %arg2: i32) -> (i32, i32) {
    %c0_i32 = arith.constant 0 : i32
    return %arg0, %arg1 : i32, i32
  }
}

module attributes {stable_mosaic.version = 11 : i64} {
  func.func @_matmul_res_ln_kernel(%arg0: i32, %arg1: i32, %arg2: memref<16x512xbf16, #tpu.memory_space<vmem>>, %arg3: memref<512x256xbf16, #tpu.memory_space<vmem>>, %arg4: memref<1x256xf32, #tpu.memory_space<vmem>>, %arg5: memref<16x256xbf16, #tpu.memory_space<vmem>>, %arg6: memref<1x256xf32, #tpu.memory_space<vmem>>, %arg7: memref<1x256xf32, #tpu.memory_space<vmem>>, %arg8: memref<16x256xbf16, #tpu.memory_space<vmem>>, %arg9: memref<16x256xf32, #tpu.memory_space<vmem>>) attributes {dimension_semantics = [#tpu.dimension_semantics<parallel>, #tpu.dimension_semantics<arbitrary>], iteration_bounds = array<i64: 1, 2>, scalar_prefetch = 0 : i64, scratch_operands = 1 : i64, tpu.core_type = #tpu.core_type<tc>, window_params = [{transform_indices = @transform_0, window_bounds = array<i64: 16, 512>}, {transform_indices = @transform_1, window_bounds = array<i64: 512, 256>}, {pipeline_mode = #tpu.pipeline_mode<synchronous>, transform_indices = @transform_2, window_bounds = array<i64: 1, 256>}, {transform_indices = @transform_3, window_bounds = array<i64: 16, 256>}, {pipeline_mode = #tpu.pipeline_mode<synchronous>, transform_indices = @transform_4, window_bounds = array<i64: 1, 256>}, {pipeline_mode = #tpu.pipeline_mode<synchronous>, transform_indices = @transform_5, window_bounds = array<i64: 1, 256>}, {transform_indices = @transform_6, window_bounds = array<i64: 16, 256>}]} {
    %c0_i32 = arith.constant 0 : i32
    %0 = arith.cmpi eq, %arg1, %c0_i32 : i32
    %1 = arith.extui %0 : i1 to i32
    %c0_i32_0 = arith.constant 0 : i32
    %2 = arith.cmpi ne, %1, %c0_i32_0 : i32
    scf.if %2 {
      %cst_9 = arith.constant 0.000000e+00 : f32
      %12 = vector.broadcast %cst_9 : f32 to vector<16x256xf32>
      %c0_10 = arith.constant 0 : index
      %c0_11 = arith.constant 0 : index
      %13 = vector.load %arg9[%c0_10, %c0_11] : memref<16x256xf32, #tpu.memory_space<vmem>>, vector<16x256xf32>
      tpu.vector_store %arg9[%c0_10, %c0_11], %12 {strides = array<i32>} : memref<16x256xf32, #tpu.memory_space<vmem>>, vector<16x256xf32>,
    } else {
    }
    %c0 = arith.constant 0 : index
    %c0_1 = arith.constant 0 : index
    %3 = vector.load %arg9[%c0, %c0_1] : memref<16x256xf32, #tpu.memory_space<vmem>>, vector<16x256xf32>
    %c0_2 = arith.constant 0 : index
    %c0_3 = arith.constant 0 : index
    %4 = vector.load %arg2[%c0_2, %c0_3] : memref<16x512xbf16, #tpu.memory_space<vmem>>, vector<16x512xbf16>
    %c0_4 = arith.constant 0 : index
    %c0_5 = arith.constant 0 : index
    %5 = vector.load %arg3[%c0_4, %c0_5] : memref<512x256xbf16, #tpu.memory_space<vmem>>, vector<512x256xbf16>
    %cst = arith.constant dense<0.000000e+00> : vector<16x256xf32>
    %6 = tpu.matmul %4, %5, %cst {dimension_numbers = #tpu.dot_dimension_numbers<[1], [0], [0], [1], [0, 0, 1, 1], [], []>} : vector<16x512xbf16>, vector<512x256xbf16>, vector<16x256xf32> -> vector<16x256xf32>
    %7 = arith.addf %3, %6 : vector<16x256xf32>
    %c0_6 = arith.constant 0 : index
    %c0_7 = arith.constant 0 : index
    %8 = vector.load %arg9[%c0_6, %c0_7] : memref<16x256xf32, #tpu.memory_space<vmem>>, vector<16x256xf32>
    tpu.vector_store %arg9[%c0_6, %c0_7], %7 {strides = array<i32>} : memref<16x256xf32, #tpu.memory_space<vmem>>, vector<16x256xf32>,
    %c1_i32 = arith.constant 1 : i32
    %9 = arith.cmpi eq, %arg1, %c1_i32 : i32
    %10 = arith.extui %9 : i1 to i32
    %c0_i32_8 = arith.constant 0 : i32
    %11 = arith.cmpi ne, %10, %c0_i32_8 : i32
    scf.if %11 {
      %c0_9 = arith.constant 0 : index
      %c0_10 = arith.constant 0 : index
      %12 = vector.load %arg9[%c0_9, %c0_10] : memref<16x256xf32, #tpu.memory_space<vmem>>, vector<16x256xf32>
      %c0_11 = arith.constant 0 : index
      %c0_12 = arith.constant 0 : index
      %13 = vector.load %arg4[%c0_11, %c0_12] : memref<1x256xf32, #tpu.memory_space<vmem>>, vector<1x256xf32>
      %14 = vector.broadcast %13 : vector<1x256xf32> to vector<16x256xf32>
      %15 = arith.addf %12, %14 : vector<16x256xf32>
      %c0_13 = arith.constant 0 : index
      %c0_14 = arith.constant 0 : index
      %16 = vector.load %arg5[%c0_13, %c0_14] : memref<16x256xbf16, #tpu.memory_space<vmem>>, vector<16x256xbf16>
      %17 = arith.extf %16 : vector<16x256xbf16> to vector<16x256xf32>
      %18 = arith.addf %15, %17 : vector<16x256xf32>
      %cst_15 = arith.constant dense<0.000000e+00> : vector<16xf32>
      %19 = vector.multi_reduction <add>, %18, %cst_15 [1] : vector<16x256xf32> to vector<16xf32>
      %20 = vector.shape_cast %19 : vector<16xf32> to vector<16x1xf32>
      %cst_16 = arith.constant 2.560000e+02 : f32
      %21 = vector.broadcast %cst_16 : f32 to vector<16x1xf32>
      %22 = arith.divf %20, %21 : vector<16x1xf32>
      %23 = vector.broadcast %22 : vector<16x1xf32> to vector<16x256xf32>
      %24 = arith.subf %18, %23 : vector<16x256xf32>
      %25 = arith.mulf %24, %24 : vector<16x256xf32>
      %cst_17 = arith.constant dense<0.000000e+00> : vector<16xf32>
      %26 = vector.multi_reduction <add>, %25, %cst_17 [1] : vector<16x256xf32> to vector<16xf32>
      %27 = vector.shape_cast %26 : vector<16xf32> to vector<16x1xf32>
      %cst_18 = arith.constant 2.560000e+02 : f32
      %28 = vector.broadcast %cst_18 : f32 to vector<16x1xf32>
      %29 = arith.divf %27, %28 : vector<16x1xf32>
      %30 = vector.broadcast %22 : vector<16x1xf32> to vector<16x256xf32>
      %31 = arith.subf %18, %30 : vector<16x256xf32>
      %cst_19 = arith.constant 9.99999974E-6 : f32
      %32 = vector.broadcast %cst_19 : f32 to vector<16x1xf32>
      %33 = arith.addf %29, %32 : vector<16x1xf32>
      %34 = math.rsqrt %33 : vector<16x1xf32>
      %35 = vector.broadcast %34 : vector<16x1xf32> to vector<16x256xf32>
      %36 = arith.mulf %31, %35 : vector<16x256xf32>
      %c0_20 = arith.constant 0 : index
      %c0_21 = arith.constant 0 : index
      %37 = vector.load %arg6[%c0_20, %c0_21] : memref<1x256xf32, #tpu.memory_space<vmem>>, vector<1x256xf32>
      %38 = vector.broadcast %37 : vector<1x256xf32> to vector<16x256xf32>
      %39 = arith.mulf %36, %38 : vector<16x256xf32>
      %c0_22 = arith.constant 0 : index
      %c0_23 = arith.constant 0 : index
      %40 = vector.load %arg7[%c0_22, %c0_23] : memref<1x256xf32, #tpu.memory_space<vmem>>, vector<1x256xf32>
      %41 = vector.broadcast %40 : vector<1x256xf32> to vector<16x256xf32>
      %42 = arith.addf %39, %41 : vector<16x256xf32>
      %43 = arith.truncf %42 : vector<16x256xf32> to vector<16x256xbf16>
      %c0_24 = arith.constant 0 : index
      %c0_25 = arith.constant 0 : index
      %44 = vector.load %arg8[%c0_24, %c0_25] : memref<16x256xbf16, #tpu.memory_space<vmem>>, vector<16x256xbf16>
      tpu.vector_store %arg8[%c0_24, %c0_25], %43 {strides = array<i32>} : memref<16x256xbf16, #tpu.memory_space<vmem>>, vector<16x256xbf16>,
    } else {
    }
    return
  }
  func.func @transform_0(%arg0: i32, %arg1: i32) -> (i32, i32) {
    %c0_i32 = arith.constant 0 : i32
    return %arg0, %arg1 : i32, i32
  }
  func.func @transform_1(%arg0: i32, %arg1: i32) -> (i32, i32) {
    %c0_i32 = arith.constant 0 : i32
    %c0_i32_0 = arith.constant 0 : i32
    return %arg1, %c0_i32 : i32, i32
  }
  func.func @transform_2(%arg0: i32, %arg1: i32) -> (i32, i32) {
    %c0_i32 = arith.constant 0 : i32
    %c0_i32_0 = arith.constant 0 : i32
    %c0_i32_1 = arith.constant 0 : i32
    return %c0_i32, %c0_i32_0 : i32, i32
  }
  func.func @transform_3(%arg0: i32, %arg1: i32) -> (i32, i32) {
    %c0_i32 = arith.constant 0 : i32
    %c0_i32_0 = arith.constant 0 : i32
    return %arg0, %c0_i32 : i32, i32
  }
  func.func @transform_4(%arg0: i32, %arg1: i32) -> (i32, i32) {
    %c0_i32 = arith.constant 0 : i32
    %c0_i32_0 = arith.constant 0 : i32
    %c0_i32_1 = arith.constant 0 : i32
    return %c0_i32, %c0_i32_0 : i32, i32
  }
  func.func @transform_5(%arg0: i32, %arg1: i32) -> (i32, i32) {
    %c0_i32 = arith.constant 0 : i32
    %c0_i32_0 = arith.constant 0 : i32
    %c0_i32_1 = arith.constant 0 : i32
    return %c0_i32, %c0_i32_0 : i32, i32
  }
  func.func @transform_6(%arg0: i32, %arg1: i32) -> (i32, i32) {
    %c0_i32 = arith.constant 0 : i32
    %c0_i32_0 = arith.constant 0 : i32
    return %arg0, %c0_i32 : i32, i32
  }
}

</mosaic_0001>

<llo_original>
// kernel: coordinate_transformer_forward.11
$region0: #{coordinate_transformer_forward.11}
  #allocation0 [shape = 'u32[]', space=smem, size = 0x4, offset = 0x4, fixed_abs, tag = 'smem constant byte address 0x4 - core index']
  #allocation1 [shape = 'u32[72,128]{1,0:T(1,128)}', space=vmem, size = 0x9000, scoped, tag = 'internal scratch']
  #allocation2 [shape = 'f32[8,256]{1,0:T(8,128)}', space=vmem, size = 0x2000, scoped, tag = 'scratch operand']
  %s0 = inlined_call_operand.vmem [shape: bf16[16,768], index: 0, kind: input, shape index: {}, may-alias: {0,1,2}]
  %s1 = inlined_call_operand.vmem [shape: bf16[16,768], index: 1, kind: input, shape index: {}, may-alias: {0,1,2}]
  %s2 = inlined_call_operand.vmem [shape: bf16[16,768], index: 2, kind: input, shape index: {}, may-alias: {0,1,2}]
  %s3 = inlined_call_operand.hbm [shape: bf16[256,256], index: 3, kind: input, shape index: {}]
  %s4 = inlined_call_operand.vmem [shape: f32[1,256], index: 4, kind: input, shape index: {}]
  %s5 = inlined_call_operand.vmem [shape: bf16[16,256], index: 5, kind: input, shape index: {}]
  %s6 = inlined_call_operand.vmem [shape: f32[1,256], index: 6, kind: input, shape index: {}]
  %s7 = inlined_call_operand.vmem [shape: f32[1,256], index: 7, kind: input, shape index: {}]
  %s8 = inlined_call_operand.vmem [shape: bf16[16,256], index: 8, kind: output, shape index: {}]
  %s9 = sld [smem:[#allocation0]]
  $region77: #{coordinate_transformer_forward.11} parent=0
    _
  %s11 = ssub.s32 1, %s9
  %s12 = scalar_select 0, %s11, %s9
  $region1: #{coordinate_transformer_forward.11} parent=0
    #allocation3 [shape = 'u8[131072]{0}', space=vmem, size = 0x20000, scoped, tag = 'input window, operand 3']
    #allocation4 [shape = 's32[2]{0}', space=sflag, size = 0x8, scoped, tag = 'scoped memory for coordinate_transformer_forward.11']
    %13 = vsyncpa [#allocation4], 0
    %s14 = scalar_lea.sflag [#allocation4], 1
    %15 = vsyncpa %s14, 0
    loop: start=0, step=1, limit=6
    $region2: #{coordinate_transformer_forward.11} parent=1 // loop_pre_header
      _
    $region3: #{coordinate_transformer_forward.11} parent=1 // loop_header
      %s17 = sphi 0, %s21
      %p18 = scmp.ge.s32.totalorder %s17, 6
      %s24 = sphi 0, %s36
      %s25 = sphi 0, %s32
      %s26 = sphi 0, %s24
      %s27 = sphi 0, %s25
      %s28 = sphi 0, %s26
      %s29 = sphi 0, %s27
      %s41 = sphi 0, %s43
      %s44 = sphi 0, %s41
      %s45 = sphi 0, %s44
      %s61 = sphi 0, %s45
      %s71 = sphi 0, %s73
      %s74 = sphi 0, %s71
      %s75 = sphi 0, %s74
      %s91 = sphi 0, %s75
      %s101 = sphi 0, %s103
      %s104 = sphi 0, %s101
      %s105 = sphi 0, %s104
      %s121 = sphi 0, %s105
      %s127 = sphi 0, %s129
      %s130 = sphi 0, %s127
      %s131 = sphi 0, %s130
      %s147 = sphi 0, %s131
      %s151 = sphi 0, %s151
      %s153 = sphi 0, %s151
      %s154 = sphi 0, %s153
      %s168 = sphi 0, %s154
      %s174 = sphi 0, %s176
      %s177 = sphi 0, %s174
      %s178 = sphi 0, %s177
      %s194 = sphi 0, %s178
      %s198 = sphi 0, %s198
      %s200 = sphi 0, %s198
      %s201 = sphi 0, %s200
      %s215 = sphi 0, %s201
      %s219 = sphi 0, %s219
      %s221 = sphi 0, %s219
      %s222 = sphi 0, %s221
      %s236 = sphi 0, %s222
      %s242 = sphi 0, %s244
      %s245 = sphi 0, %s242
      %s246 = sphi 0, %s245
      %s262 = sphi 0, %s246
    $region4: #{coordinate_transformer_forward.11} parent=1 // loop_header_branch
      %20 = sbr.rel (%p18) target = $region8
    $region5: #{coordinate_transformer_forward.11} parent=1 // loop_body
      %s22 = ssub.s32 %s17, 1
      %s23 = ssub.s32 %s17, 2
      %s30 = sadd.s32 1, %s25
      %p31 = scmp.ge.s32.totalorder %s30, 2
      %s32 = scalar_select %p31, 0, %s30
      %s33 = sadd.s32 1, %s24
      %s34 = scalar_select %p31, %s33, %s24
      %p35 = scmp.ge.s32.totalorder %s34, 2
      %s36 = scalar_select %p35, 0, %s34
      %s37 = ssub.s32 %s24, %s36
      %s38 = ssub.s32 %s25, %s32
      %s39 = sor.u32 %s37, %s38
      %p40 = scmp.eq.s32.totalorder %s39, 0
      %s42 = sadd.s32 %s41, 1
      %s43 = scalar_select %p40, %s41, %s42
      %p46 = pneg %p40
      %p47 = scmp.eq.s32.totalorder %s17, 3
      %p48 = por %p46, %p47
      %p49 = scmp.ne.s32.totalorder %s41, %s44
      %p50 = scmp.eq.s32.totalorder %s17, 0
      %p51 = por %p49, %p50
      %p52 = scmp.ne.s32.totalorder %s41, %s44
      %p53 = scmp.eq.s32.totalorder %s22, 3
      %p54 = por %p52, %p53
      %p55 = scmp.ne.s32.totalorder %s44, %s45
      %p56 = scmp.eq.s32.totalorder %s22, 0
      %p57 = por %p55, %p56
      %p58 = scmp.ne.s32.totalorder %s44, %s45
      %p59 = scmp.eq.s32.totalorder %s23, 3
      %p60 = por %p58, %p59
      %p62 = scmp.ne.s32.totalorder %s45, %s61
      %p63 = scmp.eq.s32.totalorder %s23, 0
      %p64 = por %p62, %p63
      %s65 = sadd.s32 %s25, 2
      %s66 = sadd.s32 %s32, 2
      %s67 = ssub.s32 %s24, %s36
      %s68 = ssub.s32 %s65, %s66
      %s69 = sor.u32 %s67, %s68
      %p70 = scmp.eq.s32.totalorder %s69, 0
      %s72 = sadd.s32 %s71, 1
      %s73 = scalar_select %p70, %s71, %s72
      %p76 = pneg %p70
      %p77 = scmp.eq.s32.totalorder %s17, 3
      %p78 = por %p76, %p77
      %p79 = scmp.ne.s32.totalorder %s71, %s74
      %p80 = scmp.eq.s32.totalorder %s17, 0
      %p81 = por %p79, %p80
      %p82 = scmp.ne.s32.totalorder %s71, %s74
      %p83 = scmp.eq.s32.totalorder %s22, 3
      %p84 = por %p82, %p83
      %p85 = scmp.ne.s32.totalorder %s74, %s75
      %p86 = scmp.eq.s32.totalorder %s22, 0
      %p87 = por %p85, %p86
      %p88 = scmp.ne.s32.totalorder %s74, %s75
      %p89 = scmp.eq.s32.totalorder %s23, 3
      %p90 = por %p88, %p89
      %p92 = scmp.ne.s32.totalorder %s75, %s91
      %p93 = scmp.eq.s32.totalorder %s23, 0
      %p94 = por %p92, %p93
      %s95 = sadd.s32 %s25, 4
      %s96 = sadd.s32 %s32, 4
      %s97 = ssub.s32 %s24, %s36
      %s98 = ssub.s32 %s95, %s96
      %s99 = sor.u32 %s97, %s98
      %p100 = scmp.eq.s32.totalorder %s99, 0
      %s102 = sadd.s32 %s101, 1
      %s103 = scalar_select %p100, %s101, %s102
      %p106 = pneg %p100
      %p107 = scmp.eq.s32.totalorder %s17, 3
      %p108 = por %p106, %p107
      %p109 = scmp.ne.s32.totalorder %s101, %s104
      %p110 = scmp.eq.s32.totalorder %s17, 0
      %p111 = por %p109, %p110
      %p112 = scmp.ne.s32.totalorder %s101, %s104
      %p113 = scmp.eq.s32.totalorder %s22, 3
      %p114 = por %p112, %p113
      %p115 = scmp.ne.s32.totalorder %s104, %s105
      %p116 = scmp.eq.s32.totalorder %s22, 0
      %p117 = por %p115, %p116
      %p118 = scmp.ne.s32.totalorder %s104, %s105
      %p119 = scmp.eq.s32.totalorder %s23, 3
      %p120 = por %p118, %p119
      %p122 = scmp.ne.s32.totalorder %s105, %s121
      %p123 = scmp.eq.s32.totalorder %s23, 0
      %p124 = por %p122, %p123
      %s125 = ssub.s32 %s25, %s32
      %p126 = scmp.eq.s32.totalorder %s125, 0
      %s128 = sadd.s32 %s127, 1
      %s129 = scalar_select %p126, %s127, %s128
      %p132 = pneg %p126
      %p133 = scmp.eq.s32.totalorder %s17, 3
      %p134 = por %p132, %p133
      %p135 = scmp.ne.s32.totalorder %s127, %s130
      %p136 = scmp.eq.s32.totalorder %s17, 0
      %p137 = por %p135, %p136
      %p138 = scmp.ne.s32.totalorder %s127, %s130
      %p139 = scmp.eq.s32.totalorder %s22, 3
      %p140 = por %p138, %p139
      %p141 = scmp.ne.s32.totalorder %s130, %s131
      %p142 = scmp.eq.s32.totalorder %s22, 0
      %p143 = por %p141, %p142
      %p144 = scmp.ne.s32.totalorder %s130, %s131
      %p145 = scmp.eq.s32.totalorder %s23, 3
      %p146 = por %p144, %p145
      %p148 = scmp.ne.s32.totalorder %s131, %s147
      %p149 = scmp.eq.s32.totalorder %s23, 0
      %p150 = por %p148, %p149
      %s152 = sadd.s32 %s151, 1
      %p155 = scmp.eq.s32.totalorder %s17, 3
      %p156 = scmp.ne.s32.totalorder %s151, %s153
      %p157 = scmp.eq.s32.totalorder %s17, 0
      %p158 = por %p156, %p157
      %p159 = scmp.ne.s32.totalorder %s151, %s153
      %p160 = scmp.eq.s32.totalorder %s22, 3
      %p161 = por %p159, %p160
      %p162 = scmp.ne.s32.totalorder %s153, %s154
      %p163 = scmp.eq.s32.totalorder %s22, 0
      %p164 = por %p162, %p163
      %p165 = scmp.ne.s32.totalorder %s153, %s154
      %p166 = scmp.eq.s32.totalorder %s23, 3
      %p167 = por %p165, %p166
      %p169 = scmp.ne.s32.totalorder %s154, %s168
      %p170 = scmp.eq.s32.totalorder %s23, 0
      %p171 = por %p169, %p170
      %s172 = ssub.s32 %s24, %s36
      %p173 = scmp.eq.s32.totalorder %s172, 0
      %s175 = sadd.s32 %s174, 1
      %s176 = scalar_select %p173, %s174, %s175
      %p179 = pneg %p173
      %p180 = scmp.eq.s32.totalorder %s17, 3
      %p181 = por %p179, %p180
      %p182 = scmp.ne.s32.totalorder %s174, %s177
      %p183 = scmp.eq.s32.totalorder %s17, 0
      %p184 = por %p182, %p183
      %p185 = scmp.ne.s32.totalorder %s174, %s177
      %p186 = scmp.eq.s32.totalorder %s22, 3
      %p187 = por %p185, %p186
      %p188 = scmp.ne.s32.totalorder %s177, %s178
      %p189 = scmp.eq.s32.totalorder %s22, 0
      %p190 = por %p188, %p189
      %p191 = scmp.ne.s32.totalorder %s177, %s178
      %p192 = scmp.eq.s32.totalorder %s23, 3
      %p193 = por %p191, %p192
      %p195 = scmp.ne.s32.totalorder %s178, %s194
      %p196 = scmp.eq.s32.totalorder %s23, 0
      %p197 = por %p195, %p196
      %s199 = sadd.s32 %s198, 1
      %p202 = scmp.eq.s32.totalorder %s17, 3
      %p203 = scmp.ne.s32.totalorder %s198, %s200
      %p204 = scmp.eq.s32.totalorder %s17, 0
      %p205 = por %p203, %p204
      %p206 = scmp.ne.s32.totalorder %s198, %s200
      %p207 = scmp.eq.s32.totalorder %s22, 3
      %p208 = por %p206, %p207
      %p209 = scmp.ne.s32.totalorder %s200, %s201
      %p210 = scmp.eq.s32.totalorder %s22, 0
      %p211 = por %p209, %p210
      %p212 = scmp.ne.s32.totalorder %s200, %s201
      %p213 = scmp.eq.s32.totalorder %s23, 3
      %p214 = por %p212, %p213
      %p216 = scmp.ne.s32.totalorder %s201, %s215
      %p217 = scmp.eq.s32.totalorder %s23, 0
      %p218 = por %p216, %p217
      %s220 = sadd.s32 %s219, 1
      %p223 = scmp.eq.s32.totalorder %s17, 3
      %p224 = scmp.ne.s32.totalorder %s219, %s221
      %p225 = scmp.eq.s32.totalorder %s17, 0
      %p226 = por %p224, %p225
      %p227 = scmp.ne.s32.totalorder %s219, %s221
      %p228 = scmp.eq.s32.totalorder %s22, 3
      %p229 = por %p227, %p228
      %p230 = scmp.ne.s32.totalorder %s221, %s222
      %p231 = scmp.eq.s32.totalorder %s22, 0
      %p232 = por %p230, %p231
      %p233 = scmp.ne.s32.totalorder %s221, %s222
      %p234 = scmp.eq.s32.totalorder %s23, 3
      %p235 = por %p233, %p234
      %p237 = scmp.ne.s32.totalorder %s222, %s236
      %p238 = scmp.eq.s32.totalorder %s23, 0
      %p239 = por %p237, %p238
      %s240 = ssub.s32 %s24, %s36
      %p241 = scmp.eq.s32.totalorder %s240, 0
      %s243 = sadd.s32 %s242, 1
      %s244 = scalar_select %p241, %s242, %s243
      %p247 = pneg %p241
      %p248 = scmp.eq.s32.totalorder %s17, 3
      %p249 = por %p247, %p248
      %p250 = scmp.ne.s32.totalorder %s242, %s245
      %p251 = scmp.eq.s32.totalorder %s17, 0
      %p252 = por %p250, %p251
      %p253 = scmp.ne.s32.totalorder %s242, %s245
      %p254 = scmp.eq.s32.totalorder %s22, 3
      %p255 = por %p253, %p254
      %p256 = scmp.ne.s32.totalorder %s245, %s246
      %p257 = scmp.eq.s32.totalorder %s22, 0
      %p258 = por %p256, %p257
      %p259 = scmp.ne.s32.totalorder %s245, %s246
      %p260 = scmp.eq.s32.totalorder %s23, 3
      %p261 = por %p259, %p260
      %p263 = scmp.ne.s32.totalorder %s246, %s262
      %p264 = scmp.eq.s32.totalorder %s23, 0
      %p265 = por %p263, %p264
      %p266 = scmp.le.s32.totalorder 1, %s17
      %p267 = scmp.lt.s32.totalorder %s17, 5
      %p268 = pnand %p266, %p267
      %p269 = pneg %p268
      // Predicated region
      $region9: #{coordinate_transformer_forward.11} parent=5 // pred_check
        _
      $region10: #{coordinate_transformer_forward.11} parent=5 // pred_check_branch
        %271 = sbr.rel (%p268) target = $region12
      $region11: #{coordinate_transformer_forward.11} parent=5 // pred_region
        %s272 = ssub.s32 %s17, 1
        // Predicated region
        $region13: #{coordinate_transformer_forward.11} parent=11 // pred_check
          %p273 = pneg %p164
        $region14: #{coordinate_transformer_forward.11} parent=11 // pred_check_branch
          %275 = sbr.rel (%p273) target = $region16
        $region15: #{coordinate_transformer_forward.11} parent=11 // pred_region
          _
        $region16: #{coordinate_transformer_forward.11} parent=11 // pred_fallthru
          _
        // Predicated region
        $region17: #{coordinate_transformer_forward.11} parent=11 // pred_check
          %p276 = pneg %p211
        $region18: #{coordinate_transformer_forward.11} parent=11 // pred_check_branch
          %278 = sbr.rel (%p276) target = $region20
        $region19: #{coordinate_transformer_forward.11} parent=11 // pred_region
          _
        $region20: #{coordinate_transformer_forward.11} parent=11 // pred_fallthru
          _
        // Predicated region
        $region21: #{coordinate_transformer_forward.11} parent=11 // pred_check
          %p279 = pneg %p232
        $region22: #{coordinate_transformer_forward.11} parent=11 // pred_check_branch
          %281 = sbr.rel (%p279) target = $region24
        $region23: #{coordinate_transformer_forward.11} parent=11 // pred_region
          _
        $region24: #{coordinate_transformer_forward.11} parent=11 // pred_fallthru
          _
      $region12: #{coordinate_transformer_forward.11} parent=5 // pred_fallthru
        _
      %p282 = scmp.lt.s32.totalorder %s17, 4
      // Predicated region
      $region25: #{coordinate_transformer_forward.11} parent=5 // pred_check
        %p283 = pneg %p282
      $region26: #{coordinate_transformer_forward.11} parent=5 // pred_check_branch
        %285 = sbr.rel (%p283) target = $region28
      $region27: #{coordinate_transformer_forward.11} parent=5 // pred_region
        // Predicated region
        $region29: #{coordinate_transformer_forward.11} parent=27 // pred_check
          %p286 = pneg %p51
        $region30: #{coordinate_transformer_forward.11} parent=27 // pred_check_branch
          %288 = sbr.rel (%p286) target = $region32
        $region31: #{coordinate_transformer_forward.11} parent=27 // pred_region
          %p289 = scmp.lt.s32.totalorder %s24, 1
          %s290 = scalar_select %p289, %s24, 1
          %p291 = scmp.lt.s32.totalorder %s25, 5
          %s292 = scalar_select %p291, %s25, 5
          %s293 = smul.addr %s290, 6
          %s294 = sadd.s32 %s292, %s293
          %s295 = smul.addr %s294, 4
          %s296 = scalar_lea.vmem %s0, %s295
        $region32: #{coordinate_transformer_forward.11} parent=27 // pred_fallthru
          _
        // Predicated region
        $region33: #{coordinate_transformer_forward.11} parent=27 // pred_check
          %p297 = pneg %p81
        $region34: #{coordinate_transformer_forward.11} parent=27 // pred_check_branch
          %299 = sbr.rel (%p297) target = $region36
        $region35: #{coordinate_transformer_forward.11} parent=27 // pred_region
          %s300 = sadd.s32 %s25, 2
          %p301 = scmp.lt.s32.totalorder %s24, 1
          %s302 = scalar_select %p301, %s24, 1
          %p303 = scmp.lt.s32.totalorder %s300, 5
          %s304 = scalar_select %p303, %s300, 5
          %s305 = smul.addr %s302, 6
          %s306 = sadd.s32 %s304, %s305
          %s307 = smul.addr %s306, 4
          %s308 = scalar_lea.vmem %s1, %s307
          %s309 = sadd.s32 %s25, 2
        $region36: #{coordinate_transformer_forward.11} parent=27 // pred_fallthru
          _
        // Predicated region
        $region37: #{coordinate_transformer_forward.11} parent=27 // pred_check
          %p310 = pneg %p111
        $region38: #{coordinate_transformer_forward.11} parent=27 // pred_check_branch
          %312 = sbr.rel (%p310) target = $region40
        $region39: #{coordinate_transformer_forward.11} parent=27 // pred_region
          %s313 = sadd.s32 %s25, 4
          %p314 = scmp.lt.s32.totalorder %s24, 1
          %s315 = scalar_select %p314, %s24, 1
          %p316 = scmp.lt.s32.totalorder %s313, 5
          %s317 = scalar_select %p316, %s313, 5
          %s318 = smul.addr %s315, 6
          %s319 = sadd.s32 %s317, %s318
          %s320 = smul.addr %s319, 4
          %s321 = scalar_lea.vmem %s2, %s320
          %s322 = sadd.s32 %s25, 4
        $region40: #{coordinate_transformer_forward.11} parent=27 // pred_fallthru
          _
        // Predicated region
        $region41: #{coordinate_transformer_forward.11} parent=27 // pred_check
          %p323 = pneg %p137
        $region42: #{coordinate_transformer_forward.11} parent=27 // pred_check_branch
          %325 = sbr.rel (%p323) target = $region44
        $region43: #{coordinate_transformer_forward.11} parent=27 // pred_region
          %s326 = sand.u32 %s127, 1
          %s327 = scalar_lea.sflag [#allocation4], %s326
          %s328 = sand.u32 %s127, 1
          %s329 = smul.addr %s328, 128
          %s330 = scalar_lea.vmem [#allocation3], %s329
          %s331 = smul.u32 16, %s25
          %333 = vsyncadd %s327, 0
          %s334 = smul.addr %s331, 2
          %s335 = smul.addr %s334, 4
          %s336 = scalar_lea.hbm %s3, %s335
          %s337 = sshll.u32 %s336, 4
          %s338 = int_to_ptr.hbm [resolvable:$true] %s337
          %s339 = sshll.u32 %s330, 4
          %s340 = int_to_ptr.vmem [resolvable:$true] %s339
          %345 = dma.hbm_to_vmem [thread:$0]  %s338, 2048, %s340, %s327, 128, 128, 8
        $region44: #{coordinate_transformer_forward.11} parent=27 // pred_fallthru
          _
        // Predicated region
        $region45: #{coordinate_transformer_forward.11} parent=27 // pred_check
          %p346 = pneg %p184
        $region46: #{coordinate_transformer_forward.11} parent=27 // pred_check_branch
          %348 = sbr.rel (%p346) target = $region48
        $region47: #{coordinate_transformer_forward.11} parent=27 // pred_region
          %p349 = scmp.lt.s32.totalorder %s24, 1
          %s350 = scalar_select %p349, %s24, 1
          %s351 = smul.addr %s350, 2
          %s352 = smul.addr %s351, 4
          %s353 = scalar_lea.vmem %s5, %s352
        $region48: #{coordinate_transformer_forward.11} parent=27 // pred_fallthru
          _
      $region28: #{coordinate_transformer_forward.11} parent=5 // pred_fallthru
        _
      %p354 = scmp.le.s32.totalorder 1, %s17
      %p355 = scmp.lt.s32.totalorder %s17, 5
      %p356 = pnand %p354, %p355
      %p357 = pneg %p356
      // Predicated region
      $region49: #{coordinate_transformer_forward.11} parent=5 // pred_check
        _
      $region50: #{coordinate_transformer_forward.11} parent=5 // pred_check_branch
        %359 = sbr.rel (%p356) target = $region52
      $region51: #{coordinate_transformer_forward.11} parent=5 // pred_region
        %s360 = ssub.s32 %s17, 1
        %s361 = sand.u32 %s130, 1
        %s362 = scalar_lea.sflag [#allocation4], %s361
        %s363 = sand.u32 %s130, 1
        %s364 = smul.addr %s363, 128
        %s365 = scalar_lea.vmem [#allocation3], %s364
        // Predicated region
        $region53: #{coordinate_transformer_forward.11} parent=51 // pred_check
          %p366 = pneg %p143
        $region54: #{coordinate_transformer_forward.11} parent=51 // pred_check_branch
          %368 = sbr.rel (%p366) target = $region56
        $region55: #{coordinate_transformer_forward.11} parent=51 // pred_region
          %370 = dma.done %s362, 2048
        $region56: #{coordinate_transformer_forward.11} parent=51 // pred_fallthru
          _
        %p371 = scmp.lt.s32.totalorder %s26, 1
        %s372 = scalar_select %p371, %s26, 1
        %p373 = scmp.lt.s32.totalorder %s27, 5
        %s374 = scalar_select %p373, %s27, 5
        %s375 = smul.addr %s372, 6
        %s376 = sadd.s32 %s374, %s375
        %s377 = smul.addr %s376, 4
        %s378 = scalar_lea.vmem %s0, %s377
        %p379 = pneg %p57
        %p380 = pneg %p54
        %s381 = sadd.s32 %s27, 2
        %p382 = scmp.lt.s32.totalorder %s26, 1
        %s383 = scalar_select %p382, %s26, 1
        %p384 = scmp.lt.s32.totalorder %s381, 5
        %s385 = scalar_select %p384, %s381, 5
        %s386 = smul.addr %s383, 6
        %s387 = sadd.s32 %s385, %s386
        %s388 = smul.addr %s387, 4
        %s389 = scalar_lea.vmem %s1, %s388
        %p390 = pneg %p87
        %p391 = pneg %p84
        %s392 = sadd.s32 %s27, 4
        %p393 = scmp.lt.s32.totalorder %s26, 1
        %s394 = scalar_select %p393, %s26, 1
        %p395 = scmp.lt.s32.totalorder %s392, 5
        %s396 = scalar_select %p395, %s392, 5
        %s397 = smul.addr %s394, 6
        %s398 = sadd.s32 %s396, %s397
        %s399 = smul.addr %s398, 4
        %s400 = scalar_lea.vmem %s2, %s399
        %p401 = pneg %p117
        %p402 = pneg %p114
        %s403 = sand.u32 %s130, 1
        %s404 = scalar_lea.sflag [#allocation4], %s403
        %s405 = sand.u32 %s130, 1
        %s406 = smul.addr %s405, 128
        %s407 = scalar_lea.vmem [#allocation3], %s406
        %p408 = pneg %p143
        %p409 = pneg %p140
        %p410 = pneg %p164
        %p411 = pneg %p161
        %p412 = scmp.lt.s32.totalorder %s26, 1
        %s413 = scalar_select %p412, %s26, 1
        %s414 = smul.addr %s413, 2
        %s415 = smul.addr %s414, 4
        %s416 = scalar_lea.vmem %s5, %s415
        %p417 = pneg %p190
        %p418 = pneg %p187
        %p419 = pneg %p211
        %p420 = pneg %p208
        %p421 = pneg %p232
        %p422 = pneg %p229
        %p423 = pneg %p258
        %p424 = pneg %p255
        %p425 = scmp.lt.s32.totalorder %s26, 1
        %s426 = scalar_select %p425, %s26, 1
        %s427 = smul.addr %s426, 2
        %s428 = smul.addr %s427, 4
        %s429 = scalar_lea.vmem %s8, %s428
        %p430 = scmp.lt.s32.totalorder %s26, 1
        %s431 = scalar_select %p430, %s26, 1
        %p432 = scmp.lt.s32.totalorder %s27, 5
        %s433 = scalar_select %p432, %s27, 5
        %s434 = smul.addr %s431, 6
        %s435 = sadd.s32 %s433, %s434
        %s436 = smul.addr %s435, 4
        %s437 = scalar_lea.vmem %s0, %s436
        %s438 = sadd.s32 %s27, 2
        %p439 = scmp.lt.s32.totalorder %s26, 1
        %s440 = scalar_select %p439, %s26, 1
        %p441 = scmp.lt.s32.totalorder %s438, 5
        %s442 = scalar_select %p441, %s438, 5
        %s443 = smul.addr %s440, 6
        %s444 = sadd.s32 %s442, %s443
        %s445 = smul.addr %s444, 4
        %s446 = scalar_lea.vmem %s1, %s445
        %s447 = sadd.s32 %s27, 2
        %s448 = sadd.s32 %s27, 4
        %p449 = scmp.lt.s32.totalorder %s26, 1
        %s450 = scalar_select %p449, %s26, 1
        %p451 = scmp.lt.s32.totalorder %s448, 5
        %s452 = scalar_select %p451, %s448, 5
        %s453 = smul.addr %s450, 6
        %s454 = sadd.s32 %s452, %s453
        %s455 = smul.addr %s454, 4
        %s456 = scalar_lea.vmem %s2, %s455
        %s457 = sadd.s32 %s27, 4
        %s458 = smul.u32 16, %s27
        %p459 = scmp.lt.s32.totalorder %s26, 1
        %s460 = scalar_select %p459, %s26, 1
        %s461 = smul.addr %s460, 2
        %s462 = smul.addr %s461, 4
        %s463 = scalar_lea.vmem %s5, %s462
        %p464 = scmp.lt.s32.totalorder %s26, 1
        %s465 = scalar_select %p464, %s26, 1
        %s466 = smul.addr %s465, 2
        %s467 = smul.addr %s466, 4
        %s468 = scalar_lea.vmem %s8, %s467
        %p470 = scmp.eq.s32.totalorder %s27, 0
        // Predicated region
        $region57: #{coordinate_transformer_forward.11} parent=51 // pred_check
          %p471 = pneg %p470
        $region58: #{coordinate_transformer_forward.11} parent=51 // pred_check_branch
          %473 = sbr.rel (%p471) target = $region60
        $region59: #{coordinate_transformer_forward.11} parent=51 // pred_region
          %474 = vst [vmem:[#allocation2] sm:$0xff] 0.0
          %475 = vst [vmem:[#allocation2 + $0x8] sm:$0xff] 0.0
        $region60: #{coordinate_transformer_forward.11} parent=51 // pred_fallthru
          _
        %v476 = vld [vmem:[%s437] sm:$0xf]
        %v477 = vld [vmem:[%s446] sm:$0xf]
        %v478 = vld [vmem:[%s456] sm:$0xf]
        %479 = vmatpush.bf16.xpose.msra.mxu0 0
        %480 = vmatpush.bf16.xpose.msra.mxu0 0
        %481 = vmatpush.bf16.xpose.msra.mxu0 0
        %482 = vmatpush.bf16.xpose.msra.mxu0 0
        %483 = vmatpush.bf16.xpose.msra.mxu0 0
        %484 = vmatpush.bf16.xpose.msra.mxu0 0
        %485 = vmatpush.bf16.xpose.msra.mxu0 0
        %486 = vmatpush.bf16.xpose.msra.mxu0 %v477
        %487 = vmatmul.bf16.gmra.mxu0 %v476
        %v488 = vpop.f32.mrf.mxu0
        %v489 = vadd.f32 0.0, %v488
        %v490 = vpop.f32.mrf.mxu0
        %491 = vdwg.mxu0
        %vm492 = vcmask 64512
        %v493 = vsel %vm492, %v489, -inf
        %494 = vmax.xlane.f32.xlu0 %v493
        %v495 = vpop.xlane.xlu0 %494
        %v496 = vsub.f32 %v489, %v495
        %v497 = vmul.f32 %v496, 1.442695
        %v498 = vpow.pop %v497
        %v499 = vsel %vm492, %v498, 0.0
        %500 = vadd.xlane.f32.xlu0 %v499
        %v501 = vpop.xlane.xlu0 %500
        %v502 = vpack.c.bf16 %v498, %v498
        %v504 = vsel %vm492, %v502, 0
        %vm506 = vcmask 1043456
        %v508 = vsel %vm506, %v478, 0
        %510 = vmatpush.bf16.msra.mxu0 0
        %511 = vmatpush.bf16.msra.mxu0 0
        %512 = vmatpush.bf16.msra.mxu0 0
        %513 = vmatpush.bf16.msra.mxu0 0
        %514 = vmatpush.bf16.msra.mxu0 0
        %515 = vmatpush.bf16.msra.mxu0 0
        %516 = vmatpush.bf16.msra.mxu0 0
        %517 = vmatpush.bf16.msra.mxu0 %v508
        %518 = vmatmul.bf16.gmra.mxu0 %v504
        %v519 = vpop.f32.mrf.mxu0
        %v520 = vadd.f32 0.0, %v519
        %v521 = vpop.f32.mrf.mxu0
        %522 = vdwg.mxu0
        %v523 = vrcp.pop %v501
        %v524 = vmul.f32 %v520, %v523
        %v525 = vld [vmem:[#allocation2] sm:$0xff]
        %v526 = vld [vmem:[#allocation2 + $0x8] sm:$0xff]
        %v527 = vpack.c.bf16 %v524, %v524
        %v528 = vld [vmem:[%s365] sm:$0xff]
        %v529 = vld [vmem:[%s365 + $0x8] sm:$0xff]
        %v530 = vld [vmem:[%s365 + $0x10] sm:$0xff]
        %v531 = vld [vmem:[%s365 + $0x18] sm:$0xff]
        %v532 = vld [vmem:[%s365 + $0x20] sm:$0xff]
        %v533 = vld [vmem:[%s365 + $0x28] sm:$0xff]
        %v534 = vld [vmem:[%s365 + $0x30] sm:$0xff]
        %v535 = vld [vmem:[%s365 + $0x38] sm:$0xff]
        %v536 = vld [vmem:[%s365 + $0x40] sm:$0xff]
        %v537 = vld [vmem:[%s365 + $0x48] sm:$0xff]
        %v538 = vld [vmem:[%s365 + $0x50] sm:$0xff]
        %v539 = vld [vmem:[%s365 + $0x58] sm:$0xff]
        %v540 = vld [vmem:[%s365 + $0x60] sm:$0xff]
        %v541 = vld [vmem:[%s365 + $0x68] sm:$0xff]
        %v542 = vld [vmem:[%s365 + $0x70] sm:$0xff]
        %v543 = vld [vmem:[%s365 + $0x78] sm:$0xff]
        %v560 = vunpack.c.l.b16 %v528
        %v561 = vunpack.c.h.b16 %v528
        %v562 = vunpack.c.l.b16 %v529
        %v563 = vunpack.c.h.b16 %v529
        %v564 = vunpack.c.l.b16 %v530
        %v565 = vunpack.c.h.b16 %v530
        %v566 = vunpack.c.l.b16 %v531
        %v567 = vunpack.c.h.b16 %v531
        %v568 = vunpack.c.l.b16 %v532
        %v569 = vunpack.c.h.b16 %v532
        %v570 = vunpack.c.l.b16 %v533
        %v571 = vunpack.c.h.b16 %v533
        %v572 = vunpack.c.l.b16 %v534
        %v573 = vunpack.c.h.b16 %v534
        %v574 = vunpack.c.l.b16 %v535
        %v575 = vunpack.c.h.b16 %v535
        %v576 = vunpack.c.l.b16 %v536
        %v577 = vunpack.c.h.b16 %v536
        %v578 = vunpack.c.l.b16 %v537
        %v579 = vunpack.c.h.b16 %v537
        %v580 = vunpack.c.l.b16 %v538
        %v581 = vunpack.c.h.b16 %v538
        %v582 = vunpack.c.l.b16 %v539
        %v583 = vunpack.c.h.b16 %v539
        %v584 = vunpack.c.l.b16 %v540
        %v585 = vunpack.c.h.b16 %v540
        %v586 = vunpack.c.l.b16 %v541
        %v587 = vunpack.c.h.b16 %v541
        %v588 = vunpack.c.l.b16 %v542
        %v589 = vunpack.c.h.b16 %v542
        %v590 = vunpack.c.l.b16 %v543
        %v591 = vunpack.c.h.b16 %v543
        %v592 = vpack.c.b16 %v562, %v560
        %v593 = vpack.c.b16 %v563, %v561
        %v594 = vpack.c.b16 %v566, %v564
        %v595 = vpack.c.b16 %v567, %v565
        %v596 = vpack.c.b16 %v570, %v568
        %v597 = vpack.c.b16 %v571, %v569
        %v598 = vpack.c.b16 %v574, %v572
        %v599 = vpack.c.b16 %v575, %v573
        %v600 = vpack.c.b16 %v578, %v576
        %v601 = vpack.c.b16 %v579, %v577
        %v602 = vpack.c.b16 %v582, %v580
        %v603 = vpack.c.b16 %v583, %v581
        %v604 = vpack.c.b16 %v586, %v584
        %v605 = vpack.c.b16 %v587, %v585
        %v606 = vpack.c.b16 %v590, %v588
        %v607 = vpack.c.b16 %v591, %v589
        %624 = vmatpush.bf16.msra.mxu0 %v606
        %625 = vmatpush.bf16.msra.mxu0 %v604
        %626 = vmatpush.bf16.msra.mxu0 %v602
        %627 = vmatpush.bf16.msra.mxu0 %v600
        %628 = vmatpush.bf16.msra.mxu0 %v598
        %629 = vmatpush.bf16.msra.mxu0 %v596
        %630 = vmatpush.bf16.msra.mxu0 %v594
        %631 = vmatpush.bf16.msra.mxu0 %v592
        %632 = vmatmul.bf16.gmra.mxu0 %v527
        %v633 = vpop.f32.mrf.mxu0
        %v634 = vadd.f32 0.0, %v633
        %v635 = vpop.f32.mrf.mxu0
        %636 = vdwg.mxu0
        %637 = vmatpush.bf16.msra.mxu0 %v607
        %638 = vmatpush.bf16.msra.mxu0 %v605
        %639 = vmatpush.bf16.msra.mxu0 %v603
        %640 = vmatpush.bf16.msra.mxu0 %v601
        %641 = vmatpush.bf16.msra.mxu0 %v599
        %642 = vmatpush.bf16.msra.mxu0 %v597
        %643 = vmatpush.bf16.msra.mxu0 %v595
        %644 = vmatpush.bf16.msra.mxu0 %v593
        %645 = vmatmul.bf16.gmra.mxu0 %v527
        %v646 = vpop.f32.mrf.mxu0
        %v647 = vadd.f32 0.0, %v646
        %v648 = vpop.f32.mrf.mxu0
        %649 = vdwg.mxu0
        %v650 = vadd.f32 %v525, %v634
        %v651 = vadd.f32 %v526, %v647
        %652 = vst [vmem:[#allocation2] sm:$0xff] %v650
        %653 = vst [vmem:[#allocation2 + $0x8] sm:$0xff] %v651
        %p654 = scmp.eq.s32.totalorder %s27, 1
        // Predicated region
        $region61: #{coordinate_transformer_forward.11} parent=51 // pred_check
          %p655 = pneg %p654
        $region62: #{coordinate_transformer_forward.11} parent=51 // pred_check_branch
          %657 = sbr.rel (%p655) target = $region64
        $region63: #{coordinate_transformer_forward.11} parent=51 // pred_region
          %v658 = vld [vmem:[#allocation2] sm:$0xff]
          %v659 = vld [vmem:[#allocation2 + $0x8] sm:$0xff]
          %v660 = vld [vmem:[%s4] sm:$0x3]
          %v662 = vperm.slane %v660, 0
          %v663 = vperm.slane %v660, 1
          %v666 = vadd.f32 %v658, %v662
          %v667 = vadd.f32 %v659, %v663
          %v668 = vld [vmem:[%s463] sm:$0xff]
          %v669 = vunpack.c.l.bf16 %v668
          %v670 = vunpack.c.h.bf16 %v668
          %v671 = vadd.f32 %v666, %v669
          %v672 = vadd.f32 %v667, %v670
          %v673 = vadd.f32 %v671, %v672
          %674 = vadd.xlane.f32.xlu0 %v673
          %v675 = vpop.xlane.xlu0 %674
          %v676 = vrcp.pop 256.0
          %v677 = vmul.f32 256.0, %v676
          %v678 = vsub.f32 1.0, %v677
          %v679 = vmul.f32 %v676, %v678
          %v680 = vadd.f32 %v676, %v679
          %vm681 = vweird.f32 %v676
          %v682 = vsel %vm681, %v676, %v680
          %v683 = vmul.f32 %v675, %v682
          %v684 = vsub.f32 %v671, %v683
          %v685 = vsub.f32 %v672, %v683
          %v686 = vmul.f32 %v684, %v684
          %v687 = vmul.f32 %v685, %v685
          %v688 = vadd.f32 %v686, %v687
          %689 = vadd.xlane.f32.xlu0 %v688
          %v690 = vpop.xlane.xlu0 %689
          %v691 = vmul.f32 %v690, %v682
          %v692 = vadd.f32 %v691, 1e-05
          %v693 = vrsqrt.pop %v692
          %v694 = vmul.f32 %v693, %v692
          %v695 = vmul.f32 %v694, %v693
          %v696 = vmul.f32 0.5, %v695
          %v697 = vsub.f32 1.5, %v696
          %v698 = vmul.f32 %v693, %v697
          %vm699 = vweird.f32 %v692
          %vm700 = vweird.f32 %v693
          %vm701 = vmor %vm699, %vm700
          %v702 = vsel %vm701, %v693, %v698
          %v703 = vmul.f32 %v684, %v702
          %v704 = vmul.f32 %v685, %v702
          %v705 = vld [vmem:[%s6] sm:$0x3]
          %v707 = vperm.slane %v705, 0
          %v708 = vperm.slane %v705, 1
          %v711 = vmul.f32 %v703, %v707
          %v712 = vmul.f32 %v704, %v708
          %v713 = vld [vmem:[%s7] sm:$0x3]
          %v715 = vperm.slane %v713, 0
          %v716 = vperm.slane %v713, 1
          %v719 = vadd.f32 %v711, %v715
          %v720 = vadd.f32 %v712, %v716
          %v721 = vpack.c.bf16 %v720, %v719
          %722 = vst [vmem:[%s468] sm:$0xff] %v721
        $region64: #{coordinate_transformer_forward.11} parent=51 // pred_fallthru
          _
        %p723 = scmp.lt.s32.totalorder %s26, 1
        %s724 = scalar_select %p723, %s26, 1
        %s725 = smul.addr %s724, 2
        %s726 = smul.addr %s725, 4
        %s727 = scalar_lea.vmem %s8, %s726
        // Predicated region
        $region65: #{coordinate_transformer_forward.11} parent=51 // pred_check
          %p728 = pneg %p255
        $region66: #{coordinate_transformer_forward.11} parent=51 // pred_check_branch
          %730 = sbr.rel (%p728) target = $region68
        $region67: #{coordinate_transformer_forward.11} parent=51 // pred_region
          _
        $region68: #{coordinate_transformer_forward.11} parent=51 // pred_fallthru
          _
      $region52: #{coordinate_transformer_forward.11} parent=5 // pred_fallthru
        _
      %p731 = scmp.le.s32.totalorder 2, %s17
      // Predicated region
      $region69: #{coordinate_transformer_forward.11} parent=5 // pred_check
        %p732 = pneg %p731
      $region70: #{coordinate_transformer_forward.11} parent=5 // pred_check_branch
        %734 = sbr.rel (%p732) target = $region72
      $region71: #{coordinate_transformer_forward.11} parent=5 // pred_region
        %s735 = ssub.s32 %s17, 2
        // Predicated region
        $region73: #{coordinate_transformer_forward.11} parent=71 // pred_check
          %p736 = pneg %p261
        $region74: #{coordinate_transformer_forward.11} parent=71 // pred_check_branch
          %738 = sbr.rel (%p736) target = $region76
        $region75: #{coordinate_transformer_forward.11} parent=71 // pred_region
          %p739 = scmp.lt.s32.totalorder %s28, 1
          %s740 = scalar_select %p739, %s28, 1
          %s741 = smul.addr %s740, 2
          %s742 = smul.addr %s741, 4
          %s743 = scalar_lea.vmem %s8, %s742
        $region76: #{coordinate_transformer_forward.11} parent=71 // pred_fallthru
          _
      $region72: #{coordinate_transformer_forward.11} parent=5 // pred_fallthru
        _
    $region6: #{coordinate_transformer_forward.11} parent=1 // loop_footer
      %s21 = sadd.s32 1, %s17
    $region7: #{coordinate_transformer_forward.11} parent=1 // loop_footer_branch
      %16 = sbr.rel target = $region3
    $region8: #{coordinate_transformer_forward.11} parent=1 // loop_exit
      _
    %744 = vsyncpa [#allocation4], 1
    %s745 = scalar_lea.sflag [#allocation4], 1
    %746 = vsyncpa %s745, 1

// kernel: coordinate_transformer_forward.12
$region0: #{coordinate_transformer_forward.12}
  #allocation0 [shape = 'u32[]', space=smem, size = 0x4, offset = 0x4, fixed_abs, tag = 'smem constant byte address 0x4 - core index']
  #allocation1 [shape = 'u32[72,128]{1,0:T(1,128)}', space=vmem, size = 0x9000, scoped, tag = 'internal scratch']
  #allocation2 [shape = 'f32[16,256]{1,0:T(8,128)}', space=vmem, size = 0x4000, scoped, tag = 'scratch operand']
  %s0 = inlined_call_operand.vmem [shape: bf16[16,256], index: 0, kind: input, shape index: {}]
  %s1 = inlined_call_operand.hbm [shape: bf16[256,1024], index: 1, kind: input, shape index: {}]
  %s2 = inlined_call_operand.vmem [shape: f32[1,1024], index: 2, kind: input, shape index: {}]
  %s3 = inlined_call_operand.vmem [shape: bf16[16,1024], index: 3, kind: output, shape index: {}]
  %s4 = sld [smem:[#allocation0]]
  $region91: #{coordinate_transformer_forward.12} parent=0
    _
  %s6 = ssub.s32 1, %s4
  %s7 = scalar_select 0, %s6, %s4
  $region1: #{coordinate_transformer_forward.12} parent=0
    #allocation3 [shape = 'u8[262144]{0}', space=vmem, size = 0x40000, scoped, tag = 'input window, operand 1']
    #allocation4 [shape = 's32[2]{0}', space=sflag, size = 0x8, scoped, tag = 'scoped memory for coordinate_transformer_forward.12']
    #allocation5 [shape = 'u8[16384]{0}', space=vmem, size = 0x4000, scoped, tag = 'output window, operand 0']
    %8 = vsyncpa [#allocation4], 0
    %s9 = scalar_lea.sflag [#allocation4], 1
    %10 = vsyncpa %s9, 0
    loop: start=0, step=1, limit=6
    $region2: #{coordinate_transformer_forward.12} parent=1 // loop_pre_header
      _
    $region3: #{coordinate_transformer_forward.12} parent=1 // loop_header
      %s12 = sphi 0, %s16
      %p13 = scmp.ge.s32.totalorder %s12, 6
      %s19 = sphi 0, %s38
      %s20 = sphi 0, %s34
      %s21 = sphi 0, %s30
      %s22 = sphi 0, %s19
      %s23 = sphi 0, %s20
      %s24 = sphi 0, %s21
      %s25 = sphi 0, %s22
      %s26 = sphi 0, %s23
      %s27 = sphi 0, %s24
      %s43 = sphi 0, %s45
      %s46 = sphi 0, %s43
      %s47 = sphi 0, %s46
      %s63 = sphi 0, %s47
      %s71 = sphi 0, %s73
      %s74 = sphi 0, %s71
      %s75 = sphi 0, %s74
      %s91 = sphi 0, %s75
      %s97 = sphi 0, %s99
      %s100 = sphi 0, %s97
      %s101 = sphi 0, %s100
      %s117 = sphi 0, %s101
      %s125 = sphi 0, %s127
      %s128 = sphi 0, %s125
      %s129 = sphi 0, %s128
      %s145 = sphi 0, %s129
    $region4: #{coordinate_transformer_forward.12} parent=1 // loop_header_branch
      %15 = sbr.rel (%p13) target = $region8
    $region5: #{coordinate_transformer_forward.12} parent=1 // loop_body
      %s17 = ssub.s32 %s12, 1
      %s18 = ssub.s32 %s12, 2
      %s28 = sadd.s32 1, %s21
      %p29 = scmp.ge.s32.totalorder %s28, 1
      %s30 = scalar_select %p29, 0, %s28
      %s31 = sadd.s32 1, %s20
      %s32 = scalar_select %p29, %s31, %s20
      %p33 = scmp.ge.s32.totalorder %s32, 4
      %s34 = scalar_select %p33, 0, %s32
      %s35 = sadd.s32 1, %s19
      %s36 = scalar_select %p33, %s35, %s19
      %p37 = scmp.ge.s32.totalorder %s36, 1
      %s38 = scalar_select %p37, 0, %s36
      %s39 = ssub.s32 %s19, %s38
      %s40 = ssub.s32 %s21, %s30
      %s41 = sor.u32 %s39, %s40
      %p42 = scmp.eq.s32.totalorder %s41, 0
      %s44 = sadd.s32 %s43, 1
      %s45 = scalar_select %p42, %s43, %s44
      %p48 = pneg %p42
      %p49 = scmp.eq.s32.totalorder %s12, 3
      %p50 = por %p48, %p49
      %p51 = scmp.ne.s32.totalorder %s43, %s46
      %p52 = scmp.eq.s32.totalorder %s12, 0
      %p53 = por %p51, %p52
      %p54 = scmp.ne.s32.totalorder %s43, %s46
      %p55 = scmp.eq.s32.totalorder %s17, 3
      %p56 = por %p54, %p55
      %p57 = scmp.ne.s32.totalorder %s46, %s47
      %p58 = scmp.eq.s32.totalorder %s17, 0
      %p59 = por %p57, %p58
      %p60 = scmp.ne.s32.totalorder %s46, %s47
      %p61 = scmp.eq.s32.totalorder %s18, 3
      %p62 = por %p60, %p61
      %p64 = scmp.ne.s32.totalorder %s47, %s63
      %p65 = scmp.eq.s32.totalorder %s18, 0
      %p66 = por %p64, %p65
      %s67 = ssub.s32 %s21, %s30
      %s68 = ssub.s32 %s20, %s34
      %s69 = sor.u32 %s67, %s68
      %p70 = scmp.eq.s32.totalorder %s69, 0
      %s72 = sadd.s32 %s71, 1
      %s73 = scalar_select %p70, %s71, %s72
      %p76 = pneg %p70
      %p77 = scmp.eq.s32.totalorder %s12, 3
      %p78 = por %p76, %p77
      %p79 = scmp.ne.s32.totalorder %s71, %s74
      %p80 = scmp.eq.s32.totalorder %s12, 0
      %p81 = por %p79, %p80
      %p82 = scmp.ne.s32.totalorder %s71, %s74
      %p83 = scmp.eq.s32.totalorder %s17, 3
      %p84 = por %p82, %p83
      %p85 = scmp.ne.s32.totalorder %s74, %s75
      %p86 = scmp.eq.s32.totalorder %s17, 0
      %p87 = por %p85, %p86
      %p88 = scmp.ne.s32.totalorder %s74, %s75
      %p89 = scmp.eq.s32.totalorder %s18, 3
      %p90 = por %p88, %p89
      %p92 = scmp.ne.s32.totalorder %s75, %s91
      %p93 = scmp.eq.s32.totalorder %s18, 0
      %p94 = por %p92, %p93
      %s95 = ssub.s32 %s20, %s34
      %p96 = scmp.eq.s32.totalorder %s95, 0
      %s98 = sadd.s32 %s97, 1
      %s99 = scalar_select %p96, %s97, %s98
      %p102 = pneg %p96
      %p103 = scmp.eq.s32.totalorder %s12, 3
      %p104 = por %p102, %p103
      %p105 = scmp.ne.s32.totalorder %s97, %s100
      %p106 = scmp.eq.s32.totalorder %s12, 0
      %p107 = por %p105, %p106
      %p108 = scmp.ne.s32.totalorder %s97, %s100
      %p109 = scmp.eq.s32.totalorder %s17, 3
      %p110 = por %p108, %p109
      %p111 = scmp.ne.s32.totalorder %s100, %s101
      %p112 = scmp.eq.s32.totalorder %s17, 0
      %p113 = por %p111, %p112
      %p114 = scmp.ne.s32.totalorder %s100, %s101
      %p115 = scmp.eq.s32.totalorder %s18, 3
      %p116 = por %p114, %p115
      %p118 = scmp.ne.s32.totalorder %s101, %s117
      %p119 = scmp.eq.s32.totalorder %s18, 0
      %p120 = por %p118, %p119
      %s121 = ssub.s32 %s19, %s38
      %s122 = ssub.s32 %s20, %s34
      %s123 = sor.u32 %s121, %s122
      %p124 = scmp.eq.s32.totalorder %s123, 0
      %s126 = sadd.s32 %s125, 1
      %s127 = scalar_select %p124, %s125, %s126
      %p130 = pneg %p124
      %p131 = scmp.eq.s32.totalorder %s12, 3
      %p132 = por %p130, %p131
      %p133 = scmp.ne.s32.totalorder %s125, %s128
      %p134 = scmp.eq.s32.totalorder %s12, 0
      %p135 = por %p133, %p134
      %p136 = scmp.ne.s32.totalorder %s125, %s128
      %p137 = scmp.eq.s32.totalorder %s17, 3
      %p138 = por %p136, %p137
      %p139 = scmp.ne.s32.totalorder %s128, %s129
      %p140 = scmp.eq.s32.totalorder %s17, 0
      %p141 = por %p139, %p140
      %p142 = scmp.ne.s32.totalorder %s128, %s129
      %p143 = scmp.eq.s32.totalorder %s18, 3
      %p144 = por %p142, %p143
      %p146 = scmp.ne.s32.totalorder %s129, %s145
      %p147 = scmp.eq.s32.totalorder %s18, 0
      %p148 = por %p146, %p147
      %p149 = scmp.le.s32.totalorder 1, %s12
      %p150 = scmp.lt.s32.totalorder %s12, 5
      %p151 = pnand %p149, %p150
      %p152 = pneg %p151
      // Predicated region
      $region9: #{coordinate_transformer_forward.12} parent=5 // pred_check
        _
      $region10: #{coordinate_transformer_forward.12} parent=5 // pred_check_branch
        %154 = sbr.rel (%p151) target = $region12
      $region11: #{coordinate_transformer_forward.12} parent=5 // pred_region
        %s155 = ssub.s32 %s12, 1
        // Predicated region
        $region13: #{coordinate_transformer_forward.12} parent=11 // pred_check
          %p156 = pneg %p59
        $region14: #{coordinate_transformer_forward.12} parent=11 // pred_check_branch
          %158 = sbr.rel (%p156) target = $region16
        $region15: #{coordinate_transformer_forward.12} parent=11 // pred_region
          %s159 = smul.u32 2, %s22
          %s160 = smul.u32 2, %s24
          %p161 = scmp.lt.s32.totalorder %s159, 1
          %s162 = scalar_select %p161, %s159, 1
          %p163 = scmp.lt.s32.totalorder %s160, 1
          %s164 = scalar_select %p163, %s160, 1
          %s165 = smul.addr %s162, 2
          %s166 = sadd.s32 %s164, %s165
          %s167 = smul.addr %s166, 4
          %s168 = scalar_lea.vmem %s0, %s167
          %s169 = smul.u32 2, %s22
          %s170 = smul.u32 2, %s24
        $region16: #{coordinate_transformer_forward.12} parent=11 // pred_fallthru
          _
      $region12: #{coordinate_transformer_forward.12} parent=5 // pred_fallthru
        _
      %p171 = scmp.lt.s32.totalorder %s12, 4
      // Predicated region
      $region17: #{coordinate_transformer_forward.12} parent=5 // pred_check
        %p172 = pneg %p171
      $region18: #{coordinate_transformer_forward.12} parent=5 // pred_check_branch
        %174 = sbr.rel (%p172) target = $region20
      $region19: #{coordinate_transformer_forward.12} parent=5 // pred_region
        // Predicated region
        $region21: #{coordinate_transformer_forward.12} parent=19 // pred_check
          %p175 = pneg %p81
        $region22: #{coordinate_transformer_forward.12} parent=19 // pred_check_branch
          %177 = sbr.rel (%p175) target = $region24
        $region23: #{coordinate_transformer_forward.12} parent=19 // pred_region
          %s178 = sand.u32 %s71, 1
          %s179 = scalar_lea.sflag [#allocation4], %s178
          %s180 = sand.u32 %s71, 1
          %s181 = smul.addr %s180, 256
          %s182 = scalar_lea.vmem [#allocation3], %s181
          %s183 = smul.u32 32, %s21
          %s184 = smul.u32 2, %s20
          %186 = vsyncadd %s179, 0
          %s187 = smul.addr %s183, 8
          %s188 = sadd.s32 %s184, %s187
          %s189 = smul.addr %s188, 4
          %s190 = scalar_lea.hbm %s1, %s189
          %s191 = sshll.u32 %s190, 4
          %s192 = int_to_ptr.hbm [resolvable:$true] %s191
          %s193 = sshll.u32 %s182, 4
          %s194 = int_to_ptr.vmem [resolvable:$true] %s193
          %199 = dma.hbm_to_vmem [thread:$0]  %s192, 4096, %s194, %s179, 512, 128, 8
        $region24: #{coordinate_transformer_forward.12} parent=19 // pred_fallthru
          _
        // Predicated region
        $region25: #{coordinate_transformer_forward.12} parent=19 // pred_check
          %p200 = pneg %p107
        $region26: #{coordinate_transformer_forward.12} parent=19 // pred_check_branch
          %202 = sbr.rel (%p200) target = $region28
        $region27: #{coordinate_transformer_forward.12} parent=19 // pred_region
          %s203 = smul.u32 2, %s20
          %p204 = scmp.lt.s32.totalorder %s203, 7
          %s205 = scalar_select %p204, %s203, 7
          %s206 = scalar_lea.vmem %s2, %s205
          %s207 = smul.u32 2, %s20
        $region28: #{coordinate_transformer_forward.12} parent=19 // pred_fallthru
          _
      $region20: #{coordinate_transformer_forward.12} parent=5 // pred_fallthru
        _
      %p208 = scmp.le.s32.totalorder 1, %s12
      %p209 = scmp.lt.s32.totalorder %s12, 5
      %p210 = pnand %p208, %p209
      %p211 = pneg %p210
      // Predicated region
      $region29: #{coordinate_transformer_forward.12} parent=5 // pred_check
        _
      $region30: #{coordinate_transformer_forward.12} parent=5 // pred_check_branch
        %213 = sbr.rel (%p210) target = $region32
      $region31: #{coordinate_transformer_forward.12} parent=5 // pred_region
        %s214 = ssub.s32 %s12, 1
        %s215 = sand.u32 %s74, 1
        %s216 = scalar_lea.sflag [#allocation4], %s215
        %s217 = sand.u32 %s74, 1
        %s218 = smul.addr %s217, 256
        %s219 = scalar_lea.vmem [#allocation3], %s218
        // Predicated region
        $region33: #{coordinate_transformer_forward.12} parent=31 // pred_check
          %p220 = pneg %p87
        $region34: #{coordinate_transformer_forward.12} parent=31 // pred_check_branch
          %222 = sbr.rel (%p220) target = $region36
        $region35: #{coordinate_transformer_forward.12} parent=31 // pred_region
          %224 = dma.done %s216, 4096
        $region36: #{coordinate_transformer_forward.12} parent=31 // pred_fallthru
          _
        %s225 = smul.u32 2, %s22
        %s226 = smul.u32 2, %s24
        %p227 = scmp.lt.s32.totalorder %s225, 1
        %s228 = scalar_select %p227, %s225, 1
        %p229 = scmp.lt.s32.totalorder %s226, 1
        %s230 = scalar_select %p229, %s226, 1
        %s231 = smul.addr %s228, 2
        %s232 = sadd.s32 %s230, %s231
        %s233 = smul.addr %s232, 4
        %s234 = scalar_lea.vmem %s0, %s233
        %p235 = pneg %p59
        %p236 = pneg %p56
        %s237 = sand.u32 %s74, 1
        %s238 = scalar_lea.sflag [#allocation4], %s237
        %s239 = sand.u32 %s74, 1
        %s240 = smul.addr %s239, 256
        %s241 = scalar_lea.vmem [#allocation3], %s240
        %p242 = pneg %p87
        %p243 = pneg %p84
        %s244 = smul.u32 2, %s23
        %p245 = scmp.lt.s32.totalorder %s244, 7
        %s246 = scalar_select %p245, %s244, 7
        %s247 = scalar_lea.vmem %s2, %s246
        %p248 = pneg %p113
        %p249 = pneg %p110
        %p250 = pneg %p141
        %p251 = pneg %p138
        %s252 = sand.u32 %s128, 1
        %s253 = sand.u32 %s128, 1
        %s254 = smul.addr %s253, 16
        %s255 = scalar_lea.vmem [#allocation5], %s254
        %s256 = smul.u32 2, %s22
        %s257 = smul.u32 2, %s24
        %p258 = scmp.lt.s32.totalorder %s256, 1
        %s259 = scalar_select %p258, %s256, 1
        %p260 = scmp.lt.s32.totalorder %s257, 1
        %s261 = scalar_select %p260, %s257, 1
        %s262 = smul.addr %s259, 2
        %s263 = sadd.s32 %s261, %s262
        %s264 = smul.addr %s263, 4
        %s265 = scalar_lea.vmem %s0, %s264
        %s266 = smul.u32 2, %s22
        %s267 = smul.u32 2, %s24
        %s268 = smul.u32 32, %s24
        %s269 = smul.u32 2, %s23
        %s270 = smul.u32 2, %s23
        %p271 = scmp.lt.s32.totalorder %s270, 7
        %s272 = scalar_select %p271, %s270, 7
        %s273 = scalar_lea.vmem %s2, %s272
        %s274 = smul.u32 2, %s23
        %s275 = smul.u32 2, %s22
        %s276 = smul.u32 2, %s23
        %p277 = scmp.eq.s32.totalorder %s24, 0
        // Predicated region
        $region37: #{coordinate_transformer_forward.12} parent=31 // pred_check
          %p278 = pneg %p277
        $region38: #{coordinate_transformer_forward.12} parent=31 // pred_check_branch
          %280 = sbr.rel (%p278) target = $region40
        $region39: #{coordinate_transformer_forward.12} parent=31 // pred_region
          %281 = vst [vmem:[#allocation2] sm:$0xff] 0.0
          %282 = vst [vmem:[#allocation2 + $0x8] sm:$0xff] 0.0
          %283 = vst [vmem:[#allocation2 + $0x10] sm:$0xff] 0.0
          %284 = vst [vmem:[#allocation2 + $0x18] sm:$0xff] 0.0
        $region40: #{coordinate_transformer_forward.12} parent=31 // pred_fallthru
          _
        %v285 = vld [vmem:[#allocation2] sm:$0xff]
        %v286 = vld [vmem:[#allocation2 + $0x8] sm:$0xff]
        %v287 = vld [vmem:[#allocation2 + $0x10] sm:$0xff]
        %v288 = vld [vmem:[#allocation2 + $0x18] sm:$0xff]
        %v289 = vld [vmem:[%s265] sm:$0xff]
        %v290 = vld [vmem:[%s265 + $0x8] sm:$0xff]
        %v291 = vld [vmem:[%s219] sm:$0xff]
        %v292 = vld [vmem:[%s219 + $0x8] sm:$0xff]
        %v293 = vld [vmem:[%s219 + $0x10] sm:$0xff]
        %v294 = vld [vmem:[%s219 + $0x18] sm:$0xff]
        %v295 = vld [vmem:[%s219 + $0x20] sm:$0xff]
        %v296 = vld [vmem:[%s219 + $0x28] sm:$0xff]
        %v297 = vld [vmem:[%s219 + $0x30] sm:$0xff]
        %v298 = vld [vmem:[%s219 + $0x38] sm:$0xff]
        %v299 = vld [vmem:[%s219 + $0x40] sm:$0xff]
        %v300 = vld [vmem:[%s219 + $0x48] sm:$0xff]
        %v301 = vld [vmem:[%s219 + $0x50] sm:$0xff]
        %v302 = vld [vmem:[%s219 + $0x58] sm:$0xff]
        %v303 = vld [vmem:[%s219 + $0x60] sm:$0xff]
        %v304 = vld [vmem:[%s219 + $0x68] sm:$0xff]
        %v305 = vld [vmem:[%s219 + $0x70] sm:$0xff]
        %v306 = vld [vmem:[%s219 + $0x78] sm:$0xff]
        %v307 = vld [vmem:[%s219 + $0x80] sm:$0xff]
        %v308 = vld [vmem:[%s219 + $0x88] sm:$0xff]
        %v309 = vld [vmem:[%s219 + $0x90] sm:$0xff]
        %v310 = vld [vmem:[%s219 + $0x98] sm:$0xff]
        %v311 = vld [vmem:[%s219 + $0xa0] sm:$0xff]
        %v312 = vld [vmem:[%s219 + $0xa8] sm:$0xff]
        %v313 = vld [vmem:[%s219 + $0xb0] sm:$0xff]
        %v314 = vld [vmem:[%s219 + $0xb8] sm:$0xff]
        %v315 = vld [vmem:[%s219 + $0xc0] sm:$0xff]
        %v316 = vld [vmem:[%s219 + $0xc8] sm:$0xff]
        %v317 = vld [vmem:[%s219 + $0xd0] sm:$0xff]
        %v318 = vld [vmem:[%s219 + $0xd8] sm:$0xff]
        %v319 = vld [vmem:[%s219 + $0xe0] sm:$0xff]
        %v320 = vld [vmem:[%s219 + $0xe8] sm:$0xff]
        %v321 = vld [vmem:[%s219 + $0xf0] sm:$0xff]
        %v322 = vld [vmem:[%s219 + $0xf8] sm:$0xff]
        %v325 = vunpack.c.l.b16 %v289
        %v326 = vunpack.c.h.b16 %v289
        %v327 = vunpack.c.l.b16 %v290
        %v328 = vunpack.c.h.b16 %v290
        %v329 = vpack.c.b16 %v327, %v325
        %v330 = vpack.c.b16 %v328, %v326
        %v365 = vunpack.c.l.b16 %v291
        %v366 = vunpack.c.h.b16 %v291
        %v367 = vunpack.c.l.b16 %v292
        %v368 = vunpack.c.h.b16 %v292
        %v369 = vunpack.c.l.b16 %v293
        %v370 = vunpack.c.h.b16 %v293
        %v371 = vunpack.c.l.b16 %v294
        %v372 = vunpack.c.h.b16 %v294
        %v373 = vunpack.c.l.b16 %v295
        %v374 = vunpack.c.h.b16 %v295
        %v375 = vunpack.c.l.b16 %v296
        %v376 = vunpack.c.h.b16 %v296
        %v377 = vunpack.c.l.b16 %v297
        %v378 = vunpack.c.h.b16 %v297
        %v379 = vunpack.c.l.b16 %v298
        %v380 = vunpack.c.h.b16 %v298
        %v381 = vunpack.c.l.b16 %v299
        %v382 = vunpack.c.h.b16 %v299
        %v383 = vunpack.c.l.b16 %v300
        %v384 = vunpack.c.h.b16 %v300
        %v385 = vunpack.c.l.b16 %v301
        %v386 = vunpack.c.h.b16 %v301
        %v387 = vunpack.c.l.b16 %v302
        %v388 = vunpack.c.h.b16 %v302
        %v389 = vunpack.c.l.b16 %v303
        %v390 = vunpack.c.h.b16 %v303
        %v391 = vunpack.c.l.b16 %v304
        %v392 = vunpack.c.h.b16 %v304
        %v393 = vunpack.c.l.b16 %v305
        %v394 = vunpack.c.h.b16 %v305
        %v395 = vunpack.c.l.b16 %v306
        %v396 = vunpack.c.h.b16 %v306
        %v397 = vunpack.c.l.b16 %v307
        %v398 = vunpack.c.h.b16 %v307
        %v399 = vunpack.c.l.b16 %v308
        %v400 = vunpack.c.h.b16 %v308
        %v401 = vunpack.c.l.b16 %v309
        %v402 = vunpack.c.h.b16 %v309
        %v403 = vunpack.c.l.b16 %v310
        %v404 = vunpack.c.h.b16 %v310
        %v405 = vunpack.c.l.b16 %v311
        %v406 = vunpack.c.h.b16 %v311
        %v407 = vunpack.c.l.b16 %v312
        %v408 = vunpack.c.h.b16 %v312
        %v409 = vunpack.c.l.b16 %v313
        %v410 = vunpack.c.h.b16 %v313
        %v411 = vunpack.c.l.b16 %v314
        %v412 = vunpack.c.h.b16 %v314
        %v413 = vunpack.c.l.b16 %v315
        %v414 = vunpack.c.h.b16 %v315
        %v415 = vunpack.c.l.b16 %v316
        %v416 = vunpack.c.h.b16 %v316
        %v417 = vunpack.c.l.b16 %v317
        %v418 = vunpack.c.h.b16 %v317
        %v419 = vunpack.c.l.b16 %v318
        %v420 = vunpack.c.h.b16 %v318
        %v421 = vunpack.c.l.b16 %v319
        %v422 = vunpack.c.h.b16 %v319
        %v423 = vunpack.c.l.b16 %v320
        %v424 = vunpack.c.h.b16 %v320
        %v425 = vunpack.c.l.b16 %v321
        %v426 = vunpack.c.h.b16 %v321
        %v427 = vunpack.c.l.b16 %v322
        %v428 = vunpack.c.h.b16 %v322
        %v429 = vpack.c.b16 %v367, %v365
        %v430 = vpack.c.b16 %v368, %v366
        %v431 = vpack.c.b16 %v371, %v369
        %v432 = vpack.c.b16 %v372, %v370
        %v433 = vpack.c.b16 %v375, %v373
        %v434 = vpack.c.b16 %v376, %v374
        %v435 = vpack.c.b16 %v379, %v377
        %v436 = vpack.c.b16 %v380, %v378
        %v437 = vpack.c.b16 %v383, %v381
        %v438 = vpack.c.b16 %v384, %v382
        %v439 = vpack.c.b16 %v387, %v385
        %v440 = vpack.c.b16 %v388, %v386
        %v441 = vpack.c.b16 %v391, %v389
        %v442 = vpack.c.b16 %v392, %v390
        %v443 = vpack.c.b16 %v395, %v393
        %v444 = vpack.c.b16 %v396, %v394
        %v445 = vpack.c.b16 %v399, %v397
        %v446 = vpack.c.b16 %v400, %v398
        %v447 = vpack.c.b16 %v403, %v401
        %v448 = vpack.c.b16 %v404, %v402
        %v449 = vpack.c.b16 %v407, %v405
        %v450 = vpack.c.b16 %v408, %v406
        %v451 = vpack.c.b16 %v411, %v409
        %v452 = vpack.c.b16 %v412, %v410
        %v453 = vpack.c.b16 %v415, %v413
        %v454 = vpack.c.b16 %v416, %v414
        %v455 = vpack.c.b16 %v419, %v417
        %v456 = vpack.c.b16 %v420, %v418
        %v457 = vpack.c.b16 %v423, %v421
        %v458 = vpack.c.b16 %v424, %v422
        %v459 = vpack.c.b16 %v427, %v425
        %v460 = vpack.c.b16 %v428, %v426
        %493 = vmatpush.bf16.msra.mxu0 %v443
        %494 = vmatpush.bf16.msra.mxu0 %v441
        %495 = vmatpush.bf16.msra.mxu0 %v439
        %496 = vmatpush.bf16.msra.mxu0 %v437
        %497 = vmatpush.bf16.msra.mxu0 %v435
        %498 = vmatpush.bf16.msra.mxu0 %v433
        %499 = vmatpush.bf16.msra.mxu0 %v431
        %500 = vmatpush.bf16.msra.mxu0 %v429
        %501 = vmatmul.bf16.gmra.mxu0 %v329
        %v502 = vpop.f32.mrf.mxu0
        %v503 = vadd.f32 0.0, %v502
        %v504 = vpop.f32.mrf.mxu0
        %v505 = vadd.f32 0.0, %v504
        %506 = vdwg.mxu0
        %507 = vmatpush.bf16.msra.mxu0 %v459
        %508 = vmatpush.bf16.msra.mxu0 %v457
        %509 = vmatpush.bf16.msra.mxu0 %v455
        %510 = vmatpush.bf16.msra.mxu0 %v453
        %511 = vmatpush.bf16.msra.mxu0 %v451
        %512 = vmatpush.bf16.msra.mxu0 %v449
        %513 = vmatpush.bf16.msra.mxu0 %v447
        %514 = vmatpush.bf16.msra.mxu0 %v445
        %515 = vmatmul.bf16.gmra.mxu0 %v330
        %v516 = vpop.f32.mrf.mxu0
        %v517 = vadd.f32 %v503, %v516
        %v518 = vpop.f32.mrf.mxu0
        %v519 = vadd.f32 %v505, %v518
        %520 = vdwg.mxu0
        %521 = vmatpush.bf16.msra.mxu0 %v444
        %522 = vmatpush.bf16.msra.mxu0 %v442
        %523 = vmatpush.bf16.msra.mxu0 %v440
        %524 = vmatpush.bf16.msra.mxu0 %v438
        %525 = vmatpush.bf16.msra.mxu0 %v436
        %526 = vmatpush.bf16.msra.mxu0 %v434
        %527 = vmatpush.bf16.msra.mxu0 %v432
        %528 = vmatpush.bf16.msra.mxu0 %v430
        %529 = vmatmul.bf16.gmra.mxu0 %v329
        %v530 = vpop.f32.mrf.mxu0
        %v531 = vadd.f32 0.0, %v530
        %v532 = vpop.f32.mrf.mxu0
        %v533 = vadd.f32 0.0, %v532
        %534 = vdwg.mxu0
        %535 = vmatpush.bf16.msra.mxu0 %v460
        %536 = vmatpush.bf16.msra.mxu0 %v458
        %537 = vmatpush.bf16.msra.mxu0 %v456
        %538 = vmatpush.bf16.msra.mxu0 %v454
        %539 = vmatpush.bf16.msra.mxu0 %v452
        %540 = vmatpush.bf16.msra.mxu0 %v450
        %541 = vmatpush.bf16.msra.mxu0 %v448
        %542 = vmatpush.bf16.msra.mxu0 %v446
        %543 = vmatmul.bf16.gmra.mxu0 %v330
        %v544 = vpop.f32.mrf.mxu0
        %v545 = vadd.f32 %v531, %v544
        %v546 = vpop.f32.mrf.mxu0
        %v547 = vadd.f32 %v533, %v546
        %548 = vdwg.mxu0
        %v549 = vadd.f32 %v285, %v517
        %v550 = vadd.f32 %v286, %v545
        %v551 = vadd.f32 %v287, %v519
        %v552 = vadd.f32 %v288, %v547
        %553 = vst [vmem:[#allocation2] sm:$0xff] %v549
        %554 = vst [vmem:[#allocation2 + $0x8] sm:$0xff] %v550
        %555 = vst [vmem:[#allocation2 + $0x10] sm:$0xff] %v551
        %556 = vst [vmem:[#allocation2 + $0x18] sm:$0xff] %v552
        // Predicated region
        $region41: #{coordinate_transformer_forward.12} parent=31 // pred_check
          %p557 = pneg %p277
        $region42: #{coordinate_transformer_forward.12} parent=31 // pred_check_branch
          %559 = sbr.rel (%p557) target = $region44
        $region43: #{coordinate_transformer_forward.12} parent=31 // pred_region
          %v560 = vld [vmem:[#allocation2] sm:$0xff]
          %v561 = vld [vmem:[#allocation2 + $0x8] sm:$0xff]
          %v562 = vld [vmem:[#allocation2 + $0x10] sm:$0xff]
          %v563 = vld [vmem:[#allocation2 + $0x18] sm:$0xff]
          %v564 = vld [vmem:[%s273] sm:$0x3]
          %v566 = vperm.slane %v564, 0
          %v567 = vperm.slane %v564, 1
          %v570 = vadd.f32 %v560, %v566
          %v571 = vadd.f32 %v561, %v567
          %v572 = vadd.f32 %v562, %v566
          %v573 = vadd.f32 %v563, %v567
          %v574 = vmax.f32 %v570, 0.0
          %v575 = vmax.f32 %v571, 0.0
          %v576 = vmax.f32 %v572, 0.0
          %v577 = vmax.f32 %v573, 0.0
          %v578 = vpack.c.bf16 %v575, %v574
          %v579 = vpack.c.bf16 %v577, %v576
          %580 = vst [vmem:[%s255] sm:$0xff] %v578
          %581 = vst [vmem:[%s255 + $0x8] sm:$0xff] %v579
        $region44: #{coordinate_transformer_forward.12} parent=31 // pred_fallthru
          _
        %s582 = sand.u32 %s128, 1
        %s583 = sand.u32 %s128, 1
        %s584 = smul.addr %s583, 16
        %s585 = scalar_lea.vmem [#allocation5], %s584
        // Predicated region
        $region45: #{coordinate_transformer_forward.12} parent=31 // pred_check
          %p586 = pneg %p138
        $region46: #{coordinate_transformer_forward.12} parent=31 // pred_check_branch
          %588 = sbr.rel (%p586) target = $region48
        $region47: #{coordinate_transformer_forward.12} parent=31 // pred_region
          %s589 = smul.u32 2, %s22
          %s590 = smul.u32 2, %s23
          %s591 = smul.addr %s589, 8
          %s592 = sadd.s32 %s590, %s591
          %s593 = smul.addr %s592, 4
          %s594 = scalar_lea.vmem %s3, %s593
          // Predicated region
          $region49: #{coordinate_transformer_forward.12} parent=47 // pred_check
            _
          $region50: #{coordinate_transformer_forward.12} parent=47 // pred_check_branch
            %596 = sbr.rel (0) target = $region52
          $region51: #{coordinate_transformer_forward.12} parent=47 // pred_region
            // Predicated region
            $region53: #{coordinate_transformer_forward.12} parent=51 // pred_check
              _
            $region54: #{coordinate_transformer_forward.12} parent=51 // pred_check_branch
              %598 = sbr.rel (0) target = $region56
            $region55: #{coordinate_transformer_forward.12} parent=51 // pred_region
              // Predicated region
              $region68: #{coordinate_transformer_forward.12} parent=55 // pred_check
                _
              $region69: #{coordinate_transformer_forward.12} parent=55 // pred_check_branch
                %616 = sbr.rel (0) target = $region71
              $region70: #{coordinate_transformer_forward.12} parent=55 // pred_region
                loop: start=0, step=1, limit=1
                $region72: #{coordinate_transformer_forward.12} parent=70 // loop_pre_header
                  _
                $region73: #{coordinate_transformer_forward.12} parent=70 // loop_header
                  %s618 = sphi 0, %s622
                  %p619 = scmp.ge.s32.totalorder %s618, 1
                  %s623 = sphi %s585, %s585
                  %s624 = sphi %s594, %s594
                $region74: #{coordinate_transformer_forward.12} parent=70 // loop_header_branch
                  %621 = sbr.rel (%p619) target = $region78
                $region75: #{coordinate_transformer_forward.12} parent=70 // loop_body
                  %v625 = vld [vmem:[%s623] sm:$0xff]
                  %626 = vst [vmem:[%s624] sm:$0xff] %v625
                  %v627 = vld [vmem:[%s623 + $0x8] sm:$0xff]
                  %628 = vst [vmem:[%s624 + $0x20] sm:$0xff] %v627
                $region76: #{coordinate_transformer_forward.12} parent=70 // loop_footer
                  %s622 = sadd.s32 1, %s618
                $region77: #{coordinate_transformer_forward.12} parent=70 // loop_footer_branch
                  %617 = sbr.rel target = $region73
                $region78: #{coordinate_transformer_forward.12} parent=70 // loop_exit
                  _
              $region71: #{coordinate_transformer_forward.12} parent=55 // pred_fallthru
                _
              // Predicated region
              $region79: #{coordinate_transformer_forward.12} parent=55 // pred_check
                _
              $region80: #{coordinate_transformer_forward.12} parent=55 // pred_check_branch
                %630 = sbr.rel target = $region82
              $region81: #{coordinate_transformer_forward.12} parent=55 // pred_region
                _
              $region82: #{coordinate_transformer_forward.12} parent=55 // pred_fallthru
                _
            $region56: #{coordinate_transformer_forward.12} parent=51 // pred_fallthru
              _
            // Predicated region
            $region57: #{coordinate_transformer_forward.12} parent=51 // pred_check
              _
            $region58: #{coordinate_transformer_forward.12} parent=51 // pred_check_branch
              %600 = sbr.rel target = $region60
            $region59: #{coordinate_transformer_forward.12} parent=51 // pred_region
              %s602 = ssub.s32 256, 1
              loop: start=0, step=1, limit=1
              $region61: #{coordinate_transformer_forward.12} parent=59 // loop_pre_header
                _
              $region62: #{coordinate_transformer_forward.12} parent=59 // loop_header
                %s604 = sphi 0, %s608
                %p605 = scmp.ge.s32.totalorder %s604, 1
                %s609 = sphi %s585, %s585
                %s610 = sphi %s594, %s594
              $region63: #{coordinate_transformer_forward.12} parent=59 // loop_header_branch
                %607 = sbr.rel (%p605) target = $region67
              $region64: #{coordinate_transformer_forward.12} parent=59 // loop_body
                %v611 = vld [vmem:[%s609] sm:%s602]
                %612 = vst [vmem:[%s610] sm:%s602] %v611
                %v613 = vld [vmem:[%s609 + $0x8] sm:%s602]
                %614 = vst [vmem:[%s610 + $0x20] sm:%s602] %v613
              $region65: #{coordinate_transformer_forward.12} parent=59 // loop_footer
                %s608 = sadd.s32 1, %s604
              $region66: #{coordinate_transformer_forward.12} parent=59 // loop_footer_branch
                %603 = sbr.rel target = $region62
              $region67: #{coordinate_transformer_forward.12} parent=59 // loop_exit
                _
            $region60: #{coordinate_transformer_forward.12} parent=51 // pred_fallthru
              _
          $region52: #{coordinate_transformer_forward.12} parent=47 // pred_fallthru
            _
          %631 = vnop
        $region48: #{coordinate_transformer_forward.12} parent=31 // pred_fallthru
          _
      $region32: #{coordinate_transformer_forward.12} parent=5 // pred_fallthru
        _
      %p632 = scmp.le.s32.totalorder 2, %s12
      // Predicated region
      $region83: #{coordinate_transformer_forward.12} parent=5 // pred_check
        %p633 = pneg %p632
      $region84: #{coordinate_transformer_forward.12} parent=5 // pred_check_branch
        %635 = sbr.rel (%p633) target = $region86
      $region85: #{coordinate_transformer_forward.12} parent=5 // pred_region
        %s636 = ssub.s32 %s12, 2
        // Predicated region
        $region87: #{coordinate_transformer_forward.12} parent=85 // pred_check
          %p637 = pneg %p144
        $region88: #{coordinate_transformer_forward.12} parent=85 // pred_check_branch
          %639 = sbr.rel (%p637) target = $region90
        $region89: #{coordinate_transformer_forward.12} parent=85 // pred_region
          %s640 = sand.u32 %s129, 1
          %s641 = sand.u32 %s129, 1
          %s642 = smul.addr %s641, 16
          %s643 = scalar_lea.vmem [#allocation5], %s642
        $region90: #{coordinate_transformer_forward.12} parent=85 // pred_fallthru
          _
      $region86: #{coordinate_transformer_forward.12} parent=5 // pred_fallthru
        _
    $region6: #{coordinate_transformer_forward.12} parent=1 // loop_footer
      %s16 = sadd.s32 1, %s12
    $region7: #{coordinate_transformer_forward.12} parent=1 // loop_footer_branch
      %11 = sbr.rel target = $region3
    $region8: #{coordinate_transformer_forward.12} parent=1 // loop_exit
      _
    %644 = vsyncpa [#allocation4], 1
    %s645 = scalar_lea.sflag [#allocation4], 1
    %646 = vsyncpa %s645, 1

// kernel: coordinate_transformer_forward.9
$region0: #{coordinate_transformer_forward.9}
  #allocation0 [shape = 'u32[]', space=smem, size = 0x4, offset = 0x4, fixed_abs, tag = 'smem constant byte address 0x4 - core index']
  #allocation1 [shape = 'u32[72,128]{1,0:T(1,128)}', space=vmem, size = 0x9000, scoped, tag = 'internal scratch']
  #allocation2 [shape = 'f32[8,256]{1,0:T(8,128)}', space=vmem, size = 0x2000, scoped, tag = 'scratch operand']
  %s0 = inlined_call_operand.vmem [shape: bf16[16,256], index: 0, kind: input, shape index: {}]
  %s1 = inlined_call_operand.hbm [shape: bf16[256,256], index: 1, kind: input, shape index: {}]
  %s2 = inlined_call_operand.vmem [shape: f32[1,256], index: 2, kind: input, shape index: {}]
  %s3 = inlined_call_operand.vmem [shape: bf16[8,256], index: 3, kind: input, shape index: {}]
  %s4 = inlined_call_operand.vmem [shape: bf16[16,256], index: 4, kind: output, shape index: {}]
  %s5 = sld [smem:[#allocation0]]
  $region61: #{coordinate_transformer_forward.9} parent=0
    _
  %s7 = ssub.s32 1, %s5
  %s8 = scalar_select 0, %s7, %s5
  $region1: #{coordinate_transformer_forward.9} parent=0
    #allocation3 [shape = 'u8[131072]{0}', space=vmem, size = 0x20000, scoped, tag = 'input window, operand 1, single buffered']
    #allocation4 [shape = 's32[2]{0}', space=sflag, size = 0x8, scoped, tag = 'scoped memory for coordinate_transformer_forward.9']
    %9 = vsyncpa [#allocation4], 0
    loop: start=0, step=1, limit=4
    $region2: #{coordinate_transformer_forward.9} parent=1 // loop_pre_header
      _
    $region3: #{coordinate_transformer_forward.9} parent=1 // loop_header
      %s11 = sphi 0, %s15
      %p12 = scmp.ge.s32.totalorder %s11, 4
      %s18 = sphi 0, %s37
      %s19 = sphi 0, %s33
      %s20 = sphi 0, %s29
      %s21 = sphi 0, %s18
      %s22 = sphi 0, %s19
      %s23 = sphi 0, %s20
      %s24 = sphi 0, %s21
      %s25 = sphi 0, %s22
      %s26 = sphi 0, %s23
      %s42 = sphi 0, %s44
      %s45 = sphi 0, %s42
      %s46 = sphi 0, %s45
      %s62 = sphi 0, %s46
      %s70 = sphi 0, %s72
      %s73 = sphi 0, %s70
      %s74 = sphi 0, %s73
      %s90 = sphi 0, %s74
      %s96 = sphi 0, %s98
      %s99 = sphi 0, %s96
      %s100 = sphi 0, %s99
      %s116 = sphi 0, %s100
      %s122 = sphi 0, %s124
      %s125 = sphi 0, %s122
      %s126 = sphi 0, %s125
      %s142 = sphi 0, %s126
      %s150 = sphi 0, %s152
      %s153 = sphi 0, %s150
      %s154 = sphi 0, %s153
      %s170 = sphi 0, %s154
    $region4: #{coordinate_transformer_forward.9} parent=1 // loop_header_branch
      %14 = sbr.rel (%p12) target = $region8
    $region5: #{coordinate_transformer_forward.9} parent=1 // loop_body
      %s16 = ssub.s32 %s11, 1
      %s17 = ssub.s32 %s11, 2
      %s27 = sadd.s32 1, %s20
      %p28 = scmp.ge.s32.totalorder %s27, 1
      %s29 = scalar_select %p28, 0, %s27
      %s30 = sadd.s32 1, %s19
      %s31 = scalar_select %p28, %s30, %s19
      %p32 = scmp.ge.s32.totalorder %s31, 1
      %s33 = scalar_select %p32, 0, %s31
      %s34 = sadd.s32 1, %s18
      %s35 = scalar_select %p32, %s34, %s18
      %p36 = scmp.ge.s32.totalorder %s35, 2
      %s37 = scalar_select %p36, 0, %s35
      %s38 = ssub.s32 %s18, %s37
      %s39 = ssub.s32 %s20, %s29
      %s40 = sor.u32 %s38, %s39
      %p41 = scmp.eq.s32.totalorder %s40, 0
      %s43 = sadd.s32 %s42, 1
      %s44 = scalar_select %p41, %s42, %s43
      %p47 = pneg %p41
      %p48 = scmp.eq.s32.totalorder %s11, 1
      %p49 = por %p47, %p48
      %p50 = scmp.ne.s32.totalorder %s42, %s45
      %p51 = scmp.eq.s32.totalorder %s11, 0
      %p52 = por %p50, %p51
      %p53 = scmp.ne.s32.totalorder %s42, %s45
      %p54 = scmp.eq.s32.totalorder %s16, 1
      %p55 = por %p53, %p54
      %p56 = scmp.ne.s32.totalorder %s45, %s46
      %p57 = scmp.eq.s32.totalorder %s16, 0
      %p58 = por %p56, %p57
      %p59 = scmp.ne.s32.totalorder %s45, %s46
      %p60 = scmp.eq.s32.totalorder %s17, 1
      %p61 = por %p59, %p60
      %p63 = scmp.ne.s32.totalorder %s46, %s62
      %p64 = scmp.eq.s32.totalorder %s17, 0
      %p65 = por %p63, %p64
      %s66 = ssub.s32 %s20, %s29
      %s67 = ssub.s32 %s19, %s33
      %s68 = sor.u32 %s66, %s67
      %p69 = scmp.eq.s32.totalorder %s68, 0
      %s71 = sadd.s32 %s70, 1
      %s72 = scalar_select %p69, %s70, %s71
      %p75 = pneg %p69
      %p76 = scmp.eq.s32.totalorder %s11, 1
      %p77 = por %p75, %p76
      %p78 = scmp.ne.s32.totalorder %s70, %s73
      %p79 = scmp.eq.s32.totalorder %s11, 0
      %p80 = por %p78, %p79
      %p81 = scmp.ne.s32.totalorder %s70, %s73
      %p82 = scmp.eq.s32.totalorder %s16, 1
      %p83 = por %p81, %p82
      %p84 = scmp.ne.s32.totalorder %s73, %s74
      %p85 = scmp.eq.s32.totalorder %s16, 0
      %p86 = por %p84, %p85
      %p87 = scmp.ne.s32.totalorder %s73, %s74
      %p88 = scmp.eq.s32.totalorder %s17, 1
      %p89 = por %p87, %p88
      %p91 = scmp.ne.s32.totalorder %s74, %s90
      %p92 = scmp.eq.s32.totalorder %s17, 0
      %p93 = por %p91, %p92
      %s94 = ssub.s32 %s19, %s33
      %p95 = scmp.eq.s32.totalorder %s94, 0
      %s97 = sadd.s32 %s96, 1
      %s98 = scalar_select %p95, %s96, %s97
      %p101 = pneg %p95
      %p102 = scmp.eq.s32.totalorder %s11, 1
      %p103 = por %p101, %p102
      %p104 = scmp.ne.s32.totalorder %s96, %s99
      %p105 = scmp.eq.s32.totalorder %s11, 0
      %p106 = por %p104, %p105
      %p107 = scmp.ne.s32.totalorder %s96, %s99
      %p108 = scmp.eq.s32.totalorder %s16, 1
      %p109 = por %p107, %p108
      %p110 = scmp.ne.s32.totalorder %s99, %s100
      %p111 = scmp.eq.s32.totalorder %s16, 0
      %p112 = por %p110, %p111
      %p113 = scmp.ne.s32.totalorder %s99, %s100
      %p114 = scmp.eq.s32.totalorder %s17, 1
      %p115 = por %p113, %p114
      %p117 = scmp.ne.s32.totalorder %s100, %s116
      %p118 = scmp.eq.s32.totalorder %s17, 0
      %p119 = por %p117, %p118
      %s120 = ssub.s32 %s19, %s33
      %p121 = scmp.eq.s32.totalorder %s120, 0
      %s123 = sadd.s32 %s122, 1
      %s124 = scalar_select %p121, %s122, %s123
      %p127 = pneg %p121
      %p128 = scmp.eq.s32.totalorder %s11, 1
      %p129 = por %p127, %p128
      %p130 = scmp.ne.s32.totalorder %s122, %s125
      %p131 = scmp.eq.s32.totalorder %s11, 0
      %p132 = por %p130, %p131
      %p133 = scmp.ne.s32.totalorder %s122, %s125
      %p134 = scmp.eq.s32.totalorder %s16, 1
      %p135 = por %p133, %p134
      %p136 = scmp.ne.s32.totalorder %s125, %s126
      %p137 = scmp.eq.s32.totalorder %s16, 0
      %p138 = por %p136, %p137
      %p139 = scmp.ne.s32.totalorder %s125, %s126
      %p140 = scmp.eq.s32.totalorder %s17, 1
      %p141 = por %p139, %p140
      %p143 = scmp.ne.s32.totalorder %s126, %s142
      %p144 = scmp.eq.s32.totalorder %s17, 0
      %p145 = por %p143, %p144
      %s146 = ssub.s32 %s18, %s37
      %s147 = ssub.s32 %s19, %s33
      %s148 = sor.u32 %s146, %s147
      %p149 = scmp.eq.s32.totalorder %s148, 0
      %s151 = sadd.s32 %s150, 1
      %s152 = scalar_select %p149, %s150, %s151
      %p155 = pneg %p149
      %p156 = scmp.eq.s32.totalorder %s11, 1
      %p157 = por %p155, %p156
      %p158 = scmp.ne.s32.totalorder %s150, %s153
      %p159 = scmp.eq.s32.totalorder %s11, 0
      %p160 = por %p158, %p159
      %p161 = scmp.ne.s32.totalorder %s150, %s153
      %p162 = scmp.eq.s32.totalorder %s16, 1
      %p163 = por %p161, %p162
      %p164 = scmp.ne.s32.totalorder %s153, %s154
      %p165 = scmp.eq.s32.totalorder %s16, 0
      %p166 = por %p164, %p165
      %p167 = scmp.ne.s32.totalorder %s153, %s154
      %p168 = scmp.eq.s32.totalorder %s17, 1
      %p169 = por %p167, %p168
      %p171 = scmp.ne.s32.totalorder %s154, %s170
      %p172 = scmp.eq.s32.totalorder %s17, 0
      %p173 = por %p171, %p172
      %p174 = scmp.le.s32.totalorder 1, %s11
      %p175 = scmp.lt.s32.totalorder %s11, 3
      %p176 = pnand %p174, %p175
      %p177 = pneg %p176
      // Predicated region
      $region9: #{coordinate_transformer_forward.9} parent=5 // pred_check
        _
      $region10: #{coordinate_transformer_forward.9} parent=5 // pred_check_branch
        %179 = sbr.rel (%p176) target = $region12
      $region11: #{coordinate_transformer_forward.9} parent=5 // pred_region
        %s180 = ssub.s32 %s11, 1
        // Predicated region
        $region13: #{coordinate_transformer_forward.9} parent=11 // pred_check
          %p181 = pneg %p86
        $region14: #{coordinate_transformer_forward.9} parent=11 // pred_check_branch
          %183 = sbr.rel (%p181) target = $region16
        $region15: #{coordinate_transformer_forward.9} parent=11 // pred_region
          %s184 = smul.u32 32, %s23
          %s185 = smul.u32 2, %s22
          %187 = vsyncadd [#allocation4], 0
          %s188 = smul.addr %s184, 2
          %s189 = sadd.s32 %s185, %s188
          %s190 = smul.addr %s189, 4
          %s191 = scalar_lea.hbm %s1, %s190
          %s192 = sshll.u32 %s191, 4
          %s193 = int_to_ptr.hbm [resolvable:$true] %s192
          %s194 = sshll.u32 [#allocation3], 4
          %s195 = int_to_ptr.vmem [resolvable:$true] %s194
          %200 = dma.hbm_to_vmem [thread:$0]  %s193, 4096, %s195, [#allocation4], 128, 128, 8
        $region16: #{coordinate_transformer_forward.9} parent=11 // pred_fallthru
          _
        // Predicated region
        $region17: #{coordinate_transformer_forward.9} parent=11 // pred_check
          %p201 = pneg %p112
        $region18: #{coordinate_transformer_forward.9} parent=11 // pred_check_branch
          %203 = sbr.rel (%p201) target = $region20
        $region19: #{coordinate_transformer_forward.9} parent=11 // pred_region
          %s204 = smul.u32 2, %s22
          %p205 = scmp.lt.s32.totalorder %s204, 1
          %s206 = scalar_select %p205, %s204, 1
          %s207 = scalar_lea.vmem %s2, %s206
          %s208 = smul.u32 2, %s22
        $region20: #{coordinate_transformer_forward.9} parent=11 // pred_fallthru
          _
        // Predicated region
        $region21: #{coordinate_transformer_forward.9} parent=11 // pred_check
          %p209 = pneg %p138
        $region22: #{coordinate_transformer_forward.9} parent=11 // pred_check_branch
          %211 = sbr.rel (%p209) target = $region24
        $region23: #{coordinate_transformer_forward.9} parent=11 // pred_region
          %s212 = smul.u32 2, %s22
          %p213 = scmp.lt.s32.totalorder %s212, 1
          %s214 = scalar_select %p213, %s212, 1
          %s215 = smul.addr %s214, 4
          %s216 = scalar_lea.vmem %s3, %s215
          %s217 = smul.u32 2, %s22
        $region24: #{coordinate_transformer_forward.9} parent=11 // pred_fallthru
          _
      $region12: #{coordinate_transformer_forward.9} parent=5 // pred_fallthru
        _
      %p218 = scmp.lt.s32.totalorder %s11, 2
      // Predicated region
      $region25: #{coordinate_transformer_forward.9} parent=5 // pred_check
        %p219 = pneg %p218
      $region26: #{coordinate_transformer_forward.9} parent=5 // pred_check_branch
        %221 = sbr.rel (%p219) target = $region28
      $region27: #{coordinate_transformer_forward.9} parent=5 // pred_region
        // Predicated region
        $region29: #{coordinate_transformer_forward.9} parent=27 // pred_check
          %p222 = pneg %p52
        $region30: #{coordinate_transformer_forward.9} parent=27 // pred_check_branch
          %224 = sbr.rel (%p222) target = $region32
        $region31: #{coordinate_transformer_forward.9} parent=27 // pred_region
          %s225 = smul.u32 2, %s20
          %p226 = scmp.lt.s32.totalorder %s18, 1
          %s227 = scalar_select %p226, %s18, 1
          %p228 = scmp.lt.s32.totalorder %s225, 1
          %s229 = scalar_select %p228, %s225, 1
          %s230 = smul.addr %s227, 2
          %s231 = sadd.s32 %s229, %s230
          %s232 = smul.addr %s231, 4
          %s233 = scalar_lea.vmem %s0, %s232
          %s234 = smul.u32 2, %s20
        $region32: #{coordinate_transformer_forward.9} parent=27 // pred_fallthru
          _
      $region28: #{coordinate_transformer_forward.9} parent=5 // pred_fallthru
        _
      %p235 = scmp.le.s32.totalorder 1, %s11
      %p236 = scmp.lt.s32.totalorder %s11, 3
      %p237 = pnand %p235, %p236
      %p238 = pneg %p237
      // Predicated region
      $region33: #{coordinate_transformer_forward.9} parent=5 // pred_check
        _
      $region34: #{coordinate_transformer_forward.9} parent=5 // pred_check_branch
        %240 = sbr.rel (%p237) target = $region36
      $region35: #{coordinate_transformer_forward.9} parent=5 // pred_region
        %s241 = ssub.s32 %s11, 1
        // Predicated region
        $region37: #{coordinate_transformer_forward.9} parent=35 // pred_check
          %p242 = pneg %p86
        $region38: #{coordinate_transformer_forward.9} parent=35 // pred_check_branch
          %244 = sbr.rel (%p242) target = $region40
        $region39: #{coordinate_transformer_forward.9} parent=35 // pred_region
          %246 = dma.done [#allocation4], 4096
        $region40: #{coordinate_transformer_forward.9} parent=35 // pred_fallthru
          _
        %s247 = smul.u32 2, %s23
        %p248 = scmp.lt.s32.totalorder %s21, 1
        %s249 = scalar_select %p248, %s21, 1
        %p250 = scmp.lt.s32.totalorder %s247, 1
        %s251 = scalar_select %p250, %s247, 1
        %s252 = smul.addr %s249, 2
        %s253 = sadd.s32 %s251, %s252
        %s254 = smul.addr %s253, 4
        %s255 = scalar_lea.vmem %s0, %s254
        %p256 = pneg %p58
        %p257 = pneg %p55
        %p258 = pneg %p86
        %p259 = pneg %p83
        %s260 = smul.u32 2, %s22
        %p261 = scmp.lt.s32.totalorder %s260, 1
        %s262 = scalar_select %p261, %s260, 1
        %s263 = scalar_lea.vmem %s2, %s262
        %p264 = pneg %p112
        %p265 = pneg %p109
        %s266 = smul.u32 2, %s22
        %p267 = scmp.lt.s32.totalorder %s266, 1
        %s268 = scalar_select %p267, %s266, 1
        %s269 = smul.addr %s268, 4
        %s270 = scalar_lea.vmem %s3, %s269
        %p271 = pneg %p138
        %p272 = pneg %p135
        %p273 = pneg %p166
        %p274 = pneg %p163
        %s275 = smul.u32 2, %s22
        %p276 = scmp.lt.s32.totalorder %s21, 1
        %s277 = scalar_select %p276, %s21, 1
        %p278 = scmp.lt.s32.totalorder %s275, 1
        %s279 = scalar_select %p278, %s275, 1
        %s280 = smul.addr %s277, 2
        %s281 = sadd.s32 %s279, %s280
        %s282 = smul.addr %s281, 4
        %s283 = scalar_lea.vmem %s4, %s282
        %s284 = smul.u32 2, %s23
        %p285 = scmp.lt.s32.totalorder %s21, 1
        %s286 = scalar_select %p285, %s21, 1
        %p287 = scmp.lt.s32.totalorder %s284, 1
        %s288 = scalar_select %p287, %s284, 1
        %s289 = smul.addr %s286, 2
        %s290 = sadd.s32 %s288, %s289
        %s291 = smul.addr %s290, 4
        %s292 = scalar_lea.vmem %s0, %s291
        %s293 = smul.u32 2, %s23
        %s294 = smul.u32 32, %s23
        %s295 = smul.u32 2, %s22
        %s296 = smul.u32 2, %s22
        %p297 = scmp.lt.s32.totalorder %s296, 1
        %s298 = scalar_select %p297, %s296, 1
        %s299 = scalar_lea.vmem %s2, %s298
        %s300 = smul.u32 2, %s22
        %s301 = smul.u32 2, %s22
        %p302 = scmp.lt.s32.totalorder %s301, 1
        %s303 = scalar_select %p302, %s301, 1
        %s304 = smul.addr %s303, 4
        %s305 = scalar_lea.vmem %s3, %s304
        %s306 = smul.u32 2, %s22
        %s307 = smul.u32 2, %s22
        %p308 = scmp.lt.s32.totalorder %s21, 1
        %s309 = scalar_select %p308, %s21, 1
        %p310 = scmp.lt.s32.totalorder %s307, 1
        %s311 = scalar_select %p310, %s307, 1
        %s312 = smul.addr %s309, 2
        %s313 = sadd.s32 %s311, %s312
        %s314 = smul.addr %s313, 4
        %s315 = scalar_lea.vmem %s4, %s314
        %s316 = smul.u32 2, %s22
        %p317 = scmp.eq.s32.totalorder %s23, 0
        // Predicated region
        $region41: #{coordinate_transformer_forward.9} parent=35 // pred_check
          %p318 = pneg %p317
        $region42: #{coordinate_transformer_forward.9} parent=35 // pred_check_branch
          %320 = sbr.rel (%p318) target = $region44
        $region43: #{coordinate_transformer_forward.9} parent=35 // pred_region
          %321 = vst [vmem:[#allocation2] sm:$0xff] 0.0
          %322 = vst [vmem:[#allocation2 + $0x8] sm:$0xff] 0.0
        $region44: #{coordinate_transformer_forward.9} parent=35 // pred_fallthru
          _
        %v323 = vld [vmem:[#allocation2] sm:$0xff]
        %v324 = vld [vmem:[#allocation2 + $0x8] sm:$0xff]
        %v325 = vld [vmem:[%s292] sm:$0xff]
        %v326 = vld [vmem:[#allocation3] sm:$0xff]
        %v327 = vld [vmem:[#allocation3 + $0x8] sm:$0xff]
        %v328 = vld [vmem:[#allocation3 + $0x10] sm:$0xff]
        %v329 = vld [vmem:[#allocation3 + $0x18] sm:$0xff]
        %v330 = vld [vmem:[#allocation3 + $0x20] sm:$0xff]
        %v331 = vld [vmem:[#allocation3 + $0x28] sm:$0xff]
        %v332 = vld [vmem:[#allocation3 + $0x30] sm:$0xff]
        %v333 = vld [vmem:[#allocation3 + $0x38] sm:$0xff]
        %v334 = vld [vmem:[#allocation3 + $0x40] sm:$0xff]
        %v335 = vld [vmem:[#allocation3 + $0x48] sm:$0xff]
        %v336 = vld [vmem:[#allocation3 + $0x50] sm:$0xff]
        %v337 = vld [vmem:[#allocation3 + $0x58] sm:$0xff]
        %v338 = vld [vmem:[#allocation3 + $0x60] sm:$0xff]
        %v339 = vld [vmem:[#allocation3 + $0x68] sm:$0xff]
        %v340 = vld [vmem:[#allocation3 + $0x70] sm:$0xff]
        %v341 = vld [vmem:[#allocation3 + $0x78] sm:$0xff]
        %v342 = vld [vmem:[#allocation3 + $0x80] sm:$0xff]
        %v343 = vld [vmem:[#allocation3 + $0x88] sm:$0xff]
        %v344 = vld [vmem:[#allocation3 + $0x90] sm:$0xff]
        %v345 = vld [vmem:[#allocation3 + $0x98] sm:$0xff]
        %v346 = vld [vmem:[#allocation3 + $0xa0] sm:$0xff]
        %v347 = vld [vmem:[#allocation3 + $0xa8] sm:$0xff]
        %v348 = vld [vmem:[#allocation3 + $0xb0] sm:$0xff]
        %v349 = vld [vmem:[#allocation3 + $0xb8] sm:$0xff]
        %v350 = vld [vmem:[#allocation3 + $0xc0] sm:$0xff]
        %v351 = vld [vmem:[#allocation3 + $0xc8] sm:$0xff]
        %v352 = vld [vmem:[#allocation3 + $0xd0] sm:$0xff]
        %v353 = vld [vmem:[#allocation3 + $0xd8] sm:$0xff]
        %v354 = vld [vmem:[#allocation3 + $0xe0] sm:$0xff]
        %v355 = vld [vmem:[#allocation3 + $0xe8] sm:$0xff]
        %v356 = vld [vmem:[#allocation3 + $0xf0] sm:$0xff]
        %v357 = vld [vmem:[#allocation3 + $0xf8] sm:$0xff]
        %v359 = vunpack.c.l.b16 %v325
        %v360 = vunpack.c.h.b16 %v325
        %v361 = vpack.c.b16 %v359, %v359
        %v362 = vpack.c.b16 %v360, %v360
        %v397 = vunpack.c.l.b16 %v326
        %v398 = vunpack.c.h.b16 %v326
        %v399 = vunpack.c.l.b16 %v327
        %v400 = vunpack.c.h.b16 %v327
        %v401 = vunpack.c.l.b16 %v328
        %v402 = vunpack.c.h.b16 %v328
        %v403 = vunpack.c.l.b16 %v329
        %v404 = vunpack.c.h.b16 %v329
        %v405 = vunpack.c.l.b16 %v330
        %v406 = vunpack.c.h.b16 %v330
        %v407 = vunpack.c.l.b16 %v331
        %v408 = vunpack.c.h.b16 %v331
        %v409 = vunpack.c.l.b16 %v332
        %v410 = vunpack.c.h.b16 %v332
        %v411 = vunpack.c.l.b16 %v333
        %v412 = vunpack.c.h.b16 %v333
        %v413 = vunpack.c.l.b16 %v334
        %v414 = vunpack.c.h.b16 %v334
        %v415 = vunpack.c.l.b16 %v335
        %v416 = vunpack.c.h.b16 %v335
        %v417 = vunpack.c.l.b16 %v336
        %v418 = vunpack.c.h.b16 %v336
        %v419 = vunpack.c.l.b16 %v337
        %v420 = vunpack.c.h.b16 %v337
        %v421 = vunpack.c.l.b16 %v338
        %v422 = vunpack.c.h.b16 %v338
        %v423 = vunpack.c.l.b16 %v339
        %v424 = vunpack.c.h.b16 %v339
        %v425 = vunpack.c.l.b16 %v340
        %v426 = vunpack.c.h.b16 %v340
        %v427 = vunpack.c.l.b16 %v341
        %v428 = vunpack.c.h.b16 %v341
        %v429 = vunpack.c.l.b16 %v342
        %v430 = vunpack.c.h.b16 %v342
        %v431 = vunpack.c.l.b16 %v343
        %v432 = vunpack.c.h.b16 %v343
        %v433 = vunpack.c.l.b16 %v344
        %v434 = vunpack.c.h.b16 %v344
        %v435 = vunpack.c.l.b16 %v345
        %v436 = vunpack.c.h.b16 %v345
        %v437 = vunpack.c.l.b16 %v346
        %v438 = vunpack.c.h.b16 %v346
        %v439 = vunpack.c.l.b16 %v347
        %v440 = vunpack.c.h.b16 %v347
        %v441 = vunpack.c.l.b16 %v348
        %v442 = vunpack.c.h.b16 %v348
        %v443 = vunpack.c.l.b16 %v349
        %v444 = vunpack.c.h.b16 %v349
        %v445 = vunpack.c.l.b16 %v350
        %v446 = vunpack.c.h.b16 %v350
        %v447 = vunpack.c.l.b16 %v351
        %v448 = vunpack.c.h.b16 %v351
        %v449 = vunpack.c.l.b16 %v352
        %v450 = vunpack.c.h.b16 %v352
        %v451 = vunpack.c.l.b16 %v353
        %v452 = vunpack.c.h.b16 %v353
        %v453 = vunpack.c.l.b16 %v354
        %v454 = vunpack.c.h.b16 %v354
        %v455 = vunpack.c.l.b16 %v355
        %v456 = vunpack.c.h.b16 %v355
        %v457 = vunpack.c.l.b16 %v356
        %v458 = vunpack.c.h.b16 %v356
        %v459 = vunpack.c.l.b16 %v357
        %v460 = vunpack.c.h.b16 %v357
        %v461 = vpack.c.b16 %v399, %v397
        %v462 = vpack.c.b16 %v400, %v398
        %v463 = vpack.c.b16 %v403, %v401
        %v464 = vpack.c.b16 %v404, %v402
        %v465 = vpack.c.b16 %v407, %v405
        %v466 = vpack.c.b16 %v408, %v406
        %v467 = vpack.c.b16 %v411, %v409
        %v468 = vpack.c.b16 %v412, %v410
        %v469 = vpack.c.b16 %v415, %v413
        %v470 = vpack.c.b16 %v416, %v414
        %v471 = vpack.c.b16 %v419, %v417
        %v472 = vpack.c.b16 %v420, %v418
        %v473 = vpack.c.b16 %v423, %v421
        %v474 = vpack.c.b16 %v424, %v422
        %v475 = vpack.c.b16 %v427, %v425
        %v476 = vpack.c.b16 %v428, %v426
        %v477 = vpack.c.b16 %v431, %v429
        %v478 = vpack.c.b16 %v432, %v430
        %v479 = vpack.c.b16 %v435, %v433
        %v480 = vpack.c.b16 %v436, %v434
        %v481 = vpack.c.b16 %v439, %v437
        %v482 = vpack.c.b16 %v440, %v438
        %v483 = vpack.c.b16 %v443, %v441
        %v484 = vpack.c.b16 %v444, %v442
        %v485 = vpack.c.b16 %v447, %v445
        %v486 = vpack.c.b16 %v448, %v446
        %v487 = vpack.c.b16 %v451, %v449
        %v488 = vpack.c.b16 %v452, %v450
        %v489 = vpack.c.b16 %v455, %v453
        %v490 = vpack.c.b16 %v456, %v454
        %v491 = vpack.c.b16 %v459, %v457
        %v492 = vpack.c.b16 %v460, %v458
        %525 = vmatpush.bf16.msra.mxu0 %v475
        %526 = vmatpush.bf16.msra.mxu0 %v473
        %527 = vmatpush.bf16.msra.mxu0 %v471
        %528 = vmatpush.bf16.msra.mxu0 %v469
        %529 = vmatpush.bf16.msra.mxu0 %v467
        %530 = vmatpush.bf16.msra.mxu0 %v465
        %531 = vmatpush.bf16.msra.mxu0 %v463
        %532 = vmatpush.bf16.msra.mxu0 %v461
        %533 = vmatmul.bf16.gmra.mxu0 %v361
        %v534 = vpop.f32.mrf.mxu0
        %v535 = vadd.f32 0.0, %v534
        %v536 = vpop.f32.mrf.mxu0
        %537 = vdwg.mxu0
        %538 = vmatpush.bf16.msra.mxu0 %v491
        %539 = vmatpush.bf16.msra.mxu0 %v489
        %540 = vmatpush.bf16.msra.mxu0 %v487
        %541 = vmatpush.bf16.msra.mxu0 %v485
        %542 = vmatpush.bf16.msra.mxu0 %v483
        %543 = vmatpush.bf16.msra.mxu0 %v481
        %544 = vmatpush.bf16.msra.mxu0 %v479
        %545 = vmatpush.bf16.msra.mxu0 %v477
        %546 = vmatmul.bf16.gmra.mxu0 %v362
        %v547 = vpop.f32.mrf.mxu0
        %v548 = vadd.f32 %v535, %v547
        %v549 = vpop.f32.mrf.mxu0
        %550 = vdwg.mxu0
        %551 = vmatpush.bf16.msra.mxu0 %v476
        %552 = vmatpush.bf16.msra.mxu0 %v474
        %553 = vmatpush.bf16.msra.mxu0 %v472
        %554 = vmatpush.bf16.msra.mxu0 %v470
        %555 = vmatpush.bf16.msra.mxu0 %v468
        %556 = vmatpush.bf16.msra.mxu0 %v466
        %557 = vmatpush.bf16.msra.mxu0 %v464
        %558 = vmatpush.bf16.msra.mxu0 %v462
        %559 = vmatmul.bf16.gmra.mxu0 %v361
        %v560 = vpop.f32.mrf.mxu0
        %v561 = vadd.f32 0.0, %v560
        %v562 = vpop.f32.mrf.mxu0
        %563 = vdwg.mxu0
        %564 = vmatpush.bf16.msra.mxu0 %v492
        %565 = vmatpush.bf16.msra.mxu0 %v490
        %566 = vmatpush.bf16.msra.mxu0 %v488
        %567 = vmatpush.bf16.msra.mxu0 %v486
        %568 = vmatpush.bf16.msra.mxu0 %v484
        %569 = vmatpush.bf16.msra.mxu0 %v482
        %570 = vmatpush.bf16.msra.mxu0 %v480
        %571 = vmatpush.bf16.msra.mxu0 %v478
        %572 = vmatmul.bf16.gmra.mxu0 %v362
        %v573 = vpop.f32.mrf.mxu0
        %v574 = vadd.f32 %v561, %v573
        %v575 = vpop.f32.mrf.mxu0
        %576 = vdwg.mxu0
        %v577 = vadd.f32 %v323, %v548
        %v578 = vadd.f32 %v324, %v574
        %579 = vst [vmem:[#allocation2] sm:$0xff] %v577
        %580 = vst [vmem:[#allocation2 + $0x8] sm:$0xff] %v578
        // Predicated region
        $region45: #{coordinate_transformer_forward.9} parent=35 // pred_check
          %p581 = pneg %p317
        $region46: #{coordinate_transformer_forward.9} parent=35 // pred_check_branch
          %583 = sbr.rel (%p581) target = $region48
        $region47: #{coordinate_transformer_forward.9} parent=35 // pred_region
          %v584 = vld [vmem:[#allocation2] sm:$0xff]
          %v585 = vld [vmem:[#allocation2 + $0x8] sm:$0xff]
          %v586 = vld [vmem:[%s299] sm:$0x3]
          %v588 = vperm.slane %v586, 0
          %v589 = vperm.slane %v586, 1
          %v592 = vadd.f32 %v584, %v588
          %v593 = vadd.f32 %v585, %v589
          %v594 = vld [vmem:[%s305] sm:$0xff]
          %v595 = vunpack.c.l.bf16 %v594
          %v596 = vunpack.c.h.bf16 %v594
          %v597 = vadd.f32 %v592, %v595
          %v598 = vadd.f32 %v593, %v596
          %v599 = vpack.c.bf16 %v598, %v597
          %600 = vst [vmem:[%s315] sm:$0xff] %v599
        $region48: #{coordinate_transformer_forward.9} parent=35 // pred_fallthru
          _
        %s601 = smul.u32 2, %s22
        %p602 = scmp.lt.s32.totalorder %s21, 1
        %s603 = scalar_select %p602, %s21, 1
        %p604 = scmp.lt.s32.totalorder %s601, 1
        %s605 = scalar_select %p604, %s601, 1
        %s606 = smul.addr %s603, 2
        %s607 = sadd.s32 %s605, %s606
        %s608 = smul.addr %s607, 4
        %s609 = scalar_lea.vmem %s4, %s608
        // Predicated region
        $region49: #{coordinate_transformer_forward.9} parent=35 // pred_check
          %p610 = pneg %p163
        $region50: #{coordinate_transformer_forward.9} parent=35 // pred_check_branch
          %612 = sbr.rel (%p610) target = $region52
        $region51: #{coordinate_transformer_forward.9} parent=35 // pred_region
          %s613 = smul.u32 2, %s22
        $region52: #{coordinate_transformer_forward.9} parent=35 // pred_fallthru
          _
      $region36: #{coordinate_transformer_forward.9} parent=5 // pred_fallthru
        _
      %p614 = scmp.le.s32.totalorder 2, %s11
      // Predicated region
      $region53: #{coordinate_transformer_forward.9} parent=5 // pred_check
        %p615 = pneg %p614
      $region54: #{coordinate_transformer_forward.9} parent=5 // pred_check_branch
        %617 = sbr.rel (%p615) target = $region56
      $region55: #{coordinate_transformer_forward.9} parent=5 // pred_region
        %s618 = ssub.s32 %s11, 2
        // Predicated region
        $region57: #{coordinate_transformer_forward.9} parent=55 // pred_check
          %p619 = pneg %p169
        $region58: #{coordinate_transformer_forward.9} parent=55 // pred_check_branch
          %621 = sbr.rel (%p619) target = $region60
        $region59: #{coordinate_transformer_forward.9} parent=55 // pred_region
          %s622 = smul.u32 2, %s25
          %p623 = scmp.lt.s32.totalorder %s24, 1
          %s624 = scalar_select %p623, %s24, 1
          %p625 = scmp.lt.s32.totalorder %s622, 1
          %s626 = scalar_select %p625, %s622, 1
          %s627 = smul.addr %s624, 2
          %s628 = sadd.s32 %s626, %s627
          %s629 = smul.addr %s628, 4
          %s630 = scalar_lea.vmem %s4, %s629
        $region60: #{coordinate_transformer_forward.9} parent=55 // pred_fallthru
          _
      $region56: #{coordinate_transformer_forward.9} parent=5 // pred_fallthru
        _
    $region6: #{coordinate_transformer_forward.9} parent=1 // loop_footer
      %s15 = sadd.s32 1, %s11
    $region7: #{coordinate_transformer_forward.9} parent=1 // loop_footer_branch
      %10 = sbr.rel target = $region3
    $region8: #{coordinate_transformer_forward.9} parent=1 // loop_exit
      _
    %631 = vsyncpa [#allocation4], 1
    %s632 = scalar_lea.sflag [#allocation4], 1
    %633 = vsyncpa %s632, 1

// kernel: coordinate_transformer_forward.10
$region0: #{coordinate_transformer_forward.10}
  #allocation0 [shape = 'u32[]', space=smem, size = 0x4, offset = 0x4, fixed_abs, tag = 'smem constant byte address 0x4 - core index']
  #allocation1 [shape = 'u32[72,128]{1,0:T(1,128)}', space=vmem, size = 0x9000, scoped, tag = 'internal scratch']
  #allocation2 [shape = 'f32[16,256]{1,0:T(8,128)}', space=vmem, size = 0x4000, scoped, tag = 'scratch operand']
  %s0 = inlined_call_operand.vmem [shape: bf16[16,256], index: 0, kind: input, shape index: {}]
  %s1 = inlined_call_operand.hbm [shape: bf16[256,768], index: 1, kind: input, shape index: {}]
  %s2 = inlined_call_operand.vmem [shape: f32[1,768], index: 2, kind: input, shape index: {}]
  %s3 = inlined_call_operand.vmem [shape: bf16[16,768], index: 3, kind: output, shape index: {}]
  %s4 = sld [smem:[#allocation0]]
  $region91: #{coordinate_transformer_forward.10} parent=0
    _
  %s6 = ssub.s32 1, %s4
  %s7 = scalar_select 0, %s6, %s4
  $region1: #{coordinate_transformer_forward.10} parent=0
    #allocation3 [shape = 'u8[262144]{0}', space=vmem, size = 0x40000, scoped, tag = 'input window, operand 1']
    #allocation4 [shape = 's32[2]{0}', space=sflag, size = 0x8, scoped, tag = 'scoped memory for coordinate_transformer_forward.10']
    #allocation5 [shape = 'u8[16384]{0}', space=vmem, size = 0x4000, scoped, tag = 'output window, operand 0']
    %8 = vsyncpa [#allocation4], 0
    %s9 = scalar_lea.sflag [#allocation4], 1
    %10 = vsyncpa %s9, 0
    loop: start=0, step=1, limit=5
    $region2: #{coordinate_transformer_forward.10} parent=1 // loop_pre_header
      _
    $region3: #{coordinate_transformer_forward.10} parent=1 // loop_header
      %s12 = sphi 0, %s16
      %p13 = scmp.ge.s32.totalorder %s12, 5
      %s19 = sphi 0, %s38
      %s20 = sphi 0, %s34
      %s21 = sphi 0, %s30
      %s22 = sphi 0, %s19
      %s23 = sphi 0, %s20
      %s24 = sphi 0, %s21
      %s25 = sphi 0, %s22
      %s26 = sphi 0, %s23
      %s27 = sphi 0, %s24
      %s43 = sphi 0, %s45
      %s46 = sphi 0, %s43
      %s47 = sphi 0, %s46
      %s63 = sphi 0, %s47
      %s71 = sphi 0, %s73
      %s74 = sphi 0, %s71
      %s75 = sphi 0, %s74
      %s91 = sphi 0, %s75
      %s97 = sphi 0, %s99
      %s100 = sphi 0, %s97
      %s101 = sphi 0, %s100
      %s117 = sphi 0, %s101
      %s125 = sphi 0, %s127
      %s128 = sphi 0, %s125
      %s129 = sphi 0, %s128
      %s145 = sphi 0, %s129
    $region4: #{coordinate_transformer_forward.10} parent=1 // loop_header_branch
      %15 = sbr.rel (%p13) target = $region8
    $region5: #{coordinate_transformer_forward.10} parent=1 // loop_body
      %s17 = ssub.s32 %s12, 1
      %s18 = ssub.s32 %s12, 2
      %s28 = sadd.s32 1, %s21
      %p29 = scmp.ge.s32.totalorder %s28, 1
      %s30 = scalar_select %p29, 0, %s28
      %s31 = sadd.s32 1, %s20
      %s32 = scalar_select %p29, %s31, %s20
      %p33 = scmp.ge.s32.totalorder %s32, 3
      %s34 = scalar_select %p33, 0, %s32
      %s35 = sadd.s32 1, %s19
      %s36 = scalar_select %p33, %s35, %s19
      %p37 = scmp.ge.s32.totalorder %s36, 1
      %s38 = scalar_select %p37, 0, %s36
      %s39 = ssub.s32 %s19, %s38
      %s40 = ssub.s32 %s21, %s30
      %s41 = sor.u32 %s39, %s40
      %p42 = scmp.eq.s32.totalorder %s41, 0
      %s44 = sadd.s32 %s43, 1
      %s45 = scalar_select %p42, %s43, %s44
      %p48 = pneg %p42
      %p49 = scmp.eq.s32.totalorder %s12, 2
      %p50 = por %p48, %p49
      %p51 = scmp.ne.s32.totalorder %s43, %s46
      %p52 = scmp.eq.s32.totalorder %s12, 0
      %p53 = por %p51, %p52
      %p54 = scmp.ne.s32.totalorder %s43, %s46
      %p55 = scmp.eq.s32.totalorder %s17, 2
      %p56 = por %p54, %p55
      %p57 = scmp.ne.s32.totalorder %s46, %s47
      %p58 = scmp.eq.s32.totalorder %s17, 0
      %p59 = por %p57, %p58
      %p60 = scmp.ne.s32.totalorder %s46, %s47
      %p61 = scmp.eq.s32.totalorder %s18, 2
      %p62 = por %p60, %p61
      %p64 = scmp.ne.s32.totalorder %s47, %s63
      %p65 = scmp.eq.s32.totalorder %s18, 0
      %p66 = por %p64, %p65
      %s67 = ssub.s32 %s21, %s30
      %s68 = ssub.s32 %s20, %s34
      %s69 = sor.u32 %s67, %s68
      %p70 = scmp.eq.s32.totalorder %s69, 0
      %s72 = sadd.s32 %s71, 1
      %s73 = scalar_select %p70, %s71, %s72
      %p76 = pneg %p70
      %p77 = scmp.eq.s32.totalorder %s12, 2
      %p78 = por %p76, %p77
      %p79 = scmp.ne.s32.totalorder %s71, %s74
      %p80 = scmp.eq.s32.totalorder %s12, 0
      %p81 = por %p79, %p80
      %p82 = scmp.ne.s32.totalorder %s71, %s74
      %p83 = scmp.eq.s32.totalorder %s17, 2
      %p84 = por %p82, %p83
      %p85 = scmp.ne.s32.totalorder %s74, %s75
      %p86 = scmp.eq.s32.totalorder %s17, 0
      %p87 = por %p85, %p86
      %p88 = scmp.ne.s32.totalorder %s74, %s75
      %p89 = scmp.eq.s32.totalorder %s18, 2
      %p90 = por %p88, %p89
      %p92 = scmp.ne.s32.totalorder %s75, %s91
      %p93 = scmp.eq.s32.totalorder %s18, 0
      %p94 = por %p92, %p93
      %s95 = ssub.s32 %s20, %s34
      %p96 = scmp.eq.s32.totalorder %s95, 0
      %s98 = sadd.s32 %s97, 1
      %s99 = scalar_select %p96, %s97, %s98
      %p102 = pneg %p96
      %p103 = scmp.eq.s32.totalorder %s12, 2
      %p104 = por %p102, %p103
      %p105 = scmp.ne.s32.totalorder %s97, %s100
      %p106 = scmp.eq.s32.totalorder %s12, 0
      %p107 = por %p105, %p106
      %p108 = scmp.ne.s32.totalorder %s97, %s100
      %p109 = scmp.eq.s32.totalorder %s17, 2
      %p110 = por %p108, %p109
      %p111 = scmp.ne.s32.totalorder %s100, %s101
      %p112 = scmp.eq.s32.totalorder %s17, 0
      %p113 = por %p111, %p112
      %p114 = scmp.ne.s32.totalorder %s100, %s101
      %p115 = scmp.eq.s32.totalorder %s18, 2
      %p116 = por %p114, %p115
      %p118 = scmp.ne.s32.totalorder %s101, %s117
      %p119 = scmp.eq.s32.totalorder %s18, 0
      %p120 = por %p118, %p119
      %s121 = ssub.s32 %s19, %s38
      %s122 = ssub.s32 %s20, %s34
      %s123 = sor.u32 %s121, %s122
      %p124 = scmp.eq.s32.totalorder %s123, 0
      %s126 = sadd.s32 %s125, 1
      %s127 = scalar_select %p124, %s125, %s126
      %p130 = pneg %p124
      %p131 = scmp.eq.s32.totalorder %s12, 2
      %p132 = por %p130, %p131
      %p133 = scmp.ne.s32.totalorder %s125, %s128
      %p134 = scmp.eq.s32.totalorder %s12, 0
      %p135 = por %p133, %p134
      %p136 = scmp.ne.s32.totalorder %s125, %s128
      %p137 = scmp.eq.s32.totalorder %s17, 2
      %p138 = por %p136, %p137
      %p139 = scmp.ne.s32.totalorder %s128, %s129
      %p140 = scmp.eq.s32.totalorder %s17, 0
      %p141 = por %p139, %p140
      %p142 = scmp.ne.s32.totalorder %s128, %s129
      %p143 = scmp.eq.s32.totalorder %s18, 2
      %p144 = por %p142, %p143
      %p146 = scmp.ne.s32.totalorder %s129, %s145
      %p147 = scmp.eq.s32.totalorder %s18, 0
      %p148 = por %p146, %p147
      %p149 = scmp.le.s32.totalorder 1, %s12
      %p150 = scmp.lt.s32.totalorder %s12, 4
      %p151 = pnand %p149, %p150
      %p152 = pneg %p151
      // Predicated region
      $region9: #{coordinate_transformer_forward.10} parent=5 // pred_check
        _
      $region10: #{coordinate_transformer_forward.10} parent=5 // pred_check_branch
        %154 = sbr.rel (%p151) target = $region12
      $region11: #{coordinate_transformer_forward.10} parent=5 // pred_region
        %s155 = ssub.s32 %s12, 1
        // Predicated region
        $region13: #{coordinate_transformer_forward.10} parent=11 // pred_check
          %p156 = pneg %p59
        $region14: #{coordinate_transformer_forward.10} parent=11 // pred_check_branch
          %158 = sbr.rel (%p156) target = $region16
        $region15: #{coordinate_transformer_forward.10} parent=11 // pred_region
          %s159 = smul.u32 2, %s22
          %s160 = smul.u32 2, %s24
          %p161 = scmp.lt.s32.totalorder %s159, 1
          %s162 = scalar_select %p161, %s159, 1
          %p163 = scmp.lt.s32.totalorder %s160, 1
          %s164 = scalar_select %p163, %s160, 1
          %s165 = smul.addr %s162, 2
          %s166 = sadd.s32 %s164, %s165
          %s167 = smul.addr %s166, 4
          %s168 = scalar_lea.vmem %s0, %s167
          %s169 = smul.u32 2, %s22
          %s170 = smul.u32 2, %s24
        $region16: #{coordinate_transformer_forward.10} parent=11 // pred_fallthru
          _
      $region12: #{coordinate_transformer_forward.10} parent=5 // pred_fallthru
        _
      %p171 = scmp.lt.s32.totalorder %s12, 3
      // Predicated region
      $region17: #{coordinate_transformer_forward.10} parent=5 // pred_check
        %p172 = pneg %p171
      $region18: #{coordinate_transformer_forward.10} parent=5 // pred_check_branch
        %174 = sbr.rel (%p172) target = $region20
      $region19: #{coordinate_transformer_forward.10} parent=5 // pred_region
        // Predicated region
        $region21: #{coordinate_transformer_forward.10} parent=19 // pred_check
          %p175 = pneg %p81
        $region22: #{coordinate_transformer_forward.10} parent=19 // pred_check_branch
          %177 = sbr.rel (%p175) target = $region24
        $region23: #{coordinate_transformer_forward.10} parent=19 // pred_region
          %s178 = sand.u32 %s71, 1
          %s179 = scalar_lea.sflag [#allocation4], %s178
          %s180 = sand.u32 %s71, 1
          %s181 = smul.addr %s180, 256
          %s182 = scalar_lea.vmem [#allocation3], %s181
          %s183 = smul.u32 32, %s21
          %s184 = smul.u32 2, %s20
          %186 = vsyncadd %s179, 0
          %s187 = smul.addr %s183, 6
          %s188 = sadd.s32 %s184, %s187
          %s189 = smul.addr %s188, 4
          %s190 = scalar_lea.hbm %s1, %s189
          %s191 = sshll.u32 %s190, 4
          %s192 = int_to_ptr.hbm [resolvable:$true] %s191
          %s193 = sshll.u32 %s182, 4
          %s194 = int_to_ptr.vmem [resolvable:$true] %s193
          %199 = dma.hbm_to_vmem [thread:$0]  %s192, 4096, %s194, %s179, 384, 128, 8
        $region24: #{coordinate_transformer_forward.10} parent=19 // pred_fallthru
          _
        // Predicated region
        $region25: #{coordinate_transformer_forward.10} parent=19 // pred_check
          %p200 = pneg %p107
        $region26: #{coordinate_transformer_forward.10} parent=19 // pred_check_branch
          %202 = sbr.rel (%p200) target = $region28
        $region27: #{coordinate_transformer_forward.10} parent=19 // pred_region
          %s203 = smul.u32 2, %s20
          %p204 = scmp.lt.s32.totalorder %s203, 5
          %s205 = scalar_select %p204, %s203, 5
          %s206 = scalar_lea.vmem %s2, %s205
          %s207 = smul.u32 2, %s20
        $region28: #{coordinate_transformer_forward.10} parent=19 // pred_fallthru
          _
      $region20: #{coordinate_transformer_forward.10} parent=5 // pred_fallthru
        _
      %p208 = scmp.le.s32.totalorder 1, %s12
      %p209 = scmp.lt.s32.totalorder %s12, 4
      %p210 = pnand %p208, %p209
      %p211 = pneg %p210
      // Predicated region
      $region29: #{coordinate_transformer_forward.10} parent=5 // pred_check
        _
      $region30: #{coordinate_transformer_forward.10} parent=5 // pred_check_branch
        %213 = sbr.rel (%p210) target = $region32
      $region31: #{coordinate_transformer_forward.10} parent=5 // pred_region
        %s214 = ssub.s32 %s12, 1
        %s215 = sand.u32 %s74, 1
        %s216 = scalar_lea.sflag [#allocation4], %s215
        %s217 = sand.u32 %s74, 1
        %s218 = smul.addr %s217, 256
        %s219 = scalar_lea.vmem [#allocation3], %s218
        // Predicated region
        $region33: #{coordinate_transformer_forward.10} parent=31 // pred_check
          %p220 = pneg %p87
        $region34: #{coordinate_transformer_forward.10} parent=31 // pred_check_branch
          %222 = sbr.rel (%p220) target = $region36
        $region35: #{coordinate_transformer_forward.10} parent=31 // pred_region
          %224 = dma.done %s216, 4096
        $region36: #{coordinate_transformer_forward.10} parent=31 // pred_fallthru
          _
        %s225 = smul.u32 2, %s22
        %s226 = smul.u32 2, %s24
        %p227 = scmp.lt.s32.totalorder %s225, 1
        %s228 = scalar_select %p227, %s225, 1
        %p229 = scmp.lt.s32.totalorder %s226, 1
        %s230 = scalar_select %p229, %s226, 1
        %s231 = smul.addr %s228, 2
        %s232 = sadd.s32 %s230, %s231
        %s233 = smul.addr %s232, 4
        %s234 = scalar_lea.vmem %s0, %s233
        %p235 = pneg %p59
        %p236 = pneg %p56
        %s237 = sand.u32 %s74, 1
        %s238 = scalar_lea.sflag [#allocation4], %s237
        %s239 = sand.u32 %s74, 1
        %s240 = smul.addr %s239, 256
        %s241 = scalar_lea.vmem [#allocation3], %s240
        %p242 = pneg %p87
        %p243 = pneg %p84
        %s244 = smul.u32 2, %s23
        %p245 = scmp.lt.s32.totalorder %s244, 5
        %s246 = scalar_select %p245, %s244, 5
        %s247 = scalar_lea.vmem %s2, %s246
        %p248 = pneg %p113
        %p249 = pneg %p110
        %p250 = pneg %p141
        %p251 = pneg %p138
        %s252 = sand.u32 %s128, 1
        %s253 = sand.u32 %s128, 1
        %s254 = smul.addr %s253, 16
        %s255 = scalar_lea.vmem [#allocation5], %s254
        %s256 = smul.u32 2, %s22
        %s257 = smul.u32 2, %s24
        %p258 = scmp.lt.s32.totalorder %s256, 1
        %s259 = scalar_select %p258, %s256, 1
        %p260 = scmp.lt.s32.totalorder %s257, 1
        %s261 = scalar_select %p260, %s257, 1
        %s262 = smul.addr %s259, 2
        %s263 = sadd.s32 %s261, %s262
        %s264 = smul.addr %s263, 4
        %s265 = scalar_lea.vmem %s0, %s264
        %s266 = smul.u32 2, %s22
        %s267 = smul.u32 2, %s24
        %s268 = smul.u32 32, %s24
        %s269 = smul.u32 2, %s23
        %s270 = smul.u32 2, %s23
        %p271 = scmp.lt.s32.totalorder %s270, 5
        %s272 = scalar_select %p271, %s270, 5
        %s273 = scalar_lea.vmem %s2, %s272
        %s274 = smul.u32 2, %s23
        %s275 = smul.u32 2, %s22
        %s276 = smul.u32 2, %s23
        %p277 = scmp.eq.s32.totalorder %s24, 0
        // Predicated region
        $region37: #{coordinate_transformer_forward.10} parent=31 // pred_check
          %p278 = pneg %p277
        $region38: #{coordinate_transformer_forward.10} parent=31 // pred_check_branch
          %280 = sbr.rel (%p278) target = $region40
        $region39: #{coordinate_transformer_forward.10} parent=31 // pred_region
          %281 = vst [vmem:[#allocation2] sm:$0xff] 0.0
          %282 = vst [vmem:[#allocation2 + $0x8] sm:$0xff] 0.0
          %283 = vst [vmem:[#allocation2 + $0x10] sm:$0xff] 0.0
          %284 = vst [vmem:[#allocation2 + $0x18] sm:$0xff] 0.0
        $region40: #{coordinate_transformer_forward.10} parent=31 // pred_fallthru
          _
        %v285 = vld [vmem:[#allocation2] sm:$0xff]
        %v286 = vld [vmem:[#allocation2 + $0x8] sm:$0xff]
        %v287 = vld [vmem:[#allocation2 + $0x10] sm:$0xff]
        %v288 = vld [vmem:[#allocation2 + $0x18] sm:$0xff]
        %v289 = vld [vmem:[%s265] sm:$0xff]
        %v290 = vld [vmem:[%s265 + $0x8] sm:$0xff]
        %v291 = vld [vmem:[%s219] sm:$0xff]
        %v292 = vld [vmem:[%s219 + $0x8] sm:$0xff]
        %v293 = vld [vmem:[%s219 + $0x10] sm:$0xff]
        %v294 = vld [vmem:[%s219 + $0x18] sm:$0xff]
        %v295 = vld [vmem:[%s219 + $0x20] sm:$0xff]
        %v296 = vld [vmem:[%s219 + $0x28] sm:$0xff]
        %v297 = vld [vmem:[%s219 + $0x30] sm:$0xff]
        %v298 = vld [vmem:[%s219 + $0x38] sm:$0xff]
        %v299 = vld [vmem:[%s219 + $0x40] sm:$0xff]
        %v300 = vld [vmem:[%s219 + $0x48] sm:$0xff]
        %v301 = vld [vmem:[%s219 + $0x50] sm:$0xff]
        %v302 = vld [vmem:[%s219 + $0x58] sm:$0xff]
        %v303 = vld [vmem:[%s219 + $0x60] sm:$0xff]
        %v304 = vld [vmem:[%s219 + $0x68] sm:$0xff]
        %v305 = vld [vmem:[%s219 + $0x70] sm:$0xff]
        %v306 = vld [vmem:[%s219 + $0x78] sm:$0xff]
        %v307 = vld [vmem:[%s219 + $0x80] sm:$0xff]
        %v308 = vld [vmem:[%s219 + $0x88] sm:$0xff]
        %v309 = vld [vmem:[%s219 + $0x90] sm:$0xff]
        %v310 = vld [vmem:[%s219 + $0x98] sm:$0xff]
        %v311 = vld [vmem:[%s219 + $0xa0] sm:$0xff]
        %v312 = vld [vmem:[%s219 + $0xa8] sm:$0xff]
        %v313 = vld [vmem:[%s219 + $0xb0] sm:$0xff]
        %v314 = vld [vmem:[%s219 + $0xb8] sm:$0xff]
        %v315 = vld [vmem:[%s219 + $0xc0] sm:$0xff]
        %v316 = vld [vmem:[%s219 + $0xc8] sm:$0xff]
        %v317 = vld [vmem:[%s219 + $0xd0] sm:$0xff]
        %v318 = vld [vmem:[%s219 + $0xd8] sm:$0xff]
        %v319 = vld [vmem:[%s219 + $0xe0] sm:$0xff]
        %v320 = vld [vmem:[%s219 + $0xe8] sm:$0xff]
        %v321 = vld [vmem:[%s219 + $0xf0] sm:$0xff]
        %v322 = vld [vmem:[%s219 + $0xf8] sm:$0xff]
        %v325 = vunpack.c.l.b16 %v289
        %v326 = vunpack.c.h.b16 %v289
        %v327 = vunpack.c.l.b16 %v290
        %v328 = vunpack.c.h.b16 %v290
        %v329 = vpack.c.b16 %v327, %v325
        %v330 = vpack.c.b16 %v328, %v326
        %v365 = vunpack.c.l.b16 %v291
        %v366 = vunpack.c.h.b16 %v291
        %v367 = vunpack.c.l.b16 %v292
        %v368 = vunpack.c.h.b16 %v292
        %v369 = vunpack.c.l.b16 %v293
        %v370 = vunpack.c.h.b16 %v293
        %v371 = vunpack.c.l.b16 %v294
        %v372 = vunpack.c.h.b16 %v294
        %v373 = vunpack.c.l.b16 %v295
        %v374 = vunpack.c.h.b16 %v295
        %v375 = vunpack.c.l.b16 %v296
        %v376 = vunpack.c.h.b16 %v296
        %v377 = vunpack.c.l.b16 %v297
        %v378 = vunpack.c.h.b16 %v297
        %v379 = vunpack.c.l.b16 %v298
        %v380 = vunpack.c.h.b16 %v298
        %v381 = vunpack.c.l.b16 %v299
        %v382 = vunpack.c.h.b16 %v299
        %v383 = vunpack.c.l.b16 %v300
        %v384 = vunpack.c.h.b16 %v300
        %v385 = vunpack.c.l.b16 %v301
        %v386 = vunpack.c.h.b16 %v301
        %v387 = vunpack.c.l.b16 %v302
        %v388 = vunpack.c.h.b16 %v302
        %v389 = vunpack.c.l.b16 %v303
        %v390 = vunpack.c.h.b16 %v303
        %v391 = vunpack.c.l.b16 %v304
        %v392 = vunpack.c.h.b16 %v304
        %v393 = vunpack.c.l.b16 %v305
        %v394 = vunpack.c.h.b16 %v305
        %v395 = vunpack.c.l.b16 %v306
        %v396 = vunpack.c.h.b16 %v306
        %v397 = vunpack.c.l.b16 %v307
        %v398 = vunpack.c.h.b16 %v307
        %v399 = vunpack.c.l.b16 %v308
        %v400 = vunpack.c.h.b16 %v308
        %v401 = vunpack.c.l.b16 %v309
        %v402 = vunpack.c.h.b16 %v309
        %v403 = vunpack.c.l.b16 %v310
        %v404 = vunpack.c.h.b16 %v310
        %v405 = vunpack.c.l.b16 %v311
        %v406 = vunpack.c.h.b16 %v311
        %v407 = vunpack.c.l.b16 %v312
        %v408 = vunpack.c.h.b16 %v312
        %v409 = vunpack.c.l.b16 %v313
        %v410 = vunpack.c.h.b16 %v313
        %v411 = vunpack.c.l.b16 %v314
        %v412 = vunpack.c.h.b16 %v314
        %v413 = vunpack.c.l.b16 %v315
        %v414 = vunpack.c.h.b16 %v315
        %v415 = vunpack.c.l.b16 %v316
        %v416 = vunpack.c.h.b16 %v316
        %v417 = vunpack.c.l.b16 %v317
        %v418 = vunpack.c.h.b16 %v317
        %v419 = vunpack.c.l.b16 %v318
        %v420 = vunpack.c.h.b16 %v318
        %v421 = vunpack.c.l.b16 %v319
        %v422 = vunpack.c.h.b16 %v319
        %v423 = vunpack.c.l.b16 %v320
        %v424 = vunpack.c.h.b16 %v320
        %v425 = vunpack.c.l.b16 %v321
        %v426 = vunpack.c.h.b16 %v321
        %v427 = vunpack.c.l.b16 %v322
        %v428 = vunpack.c.h.b16 %v322
        %v429 = vpack.c.b16 %v367, %v365
        %v430 = vpack.c.b16 %v368, %v366
        %v431 = vpack.c.b16 %v371, %v369
        %v432 = vpack.c.b16 %v372, %v370
        %v433 = vpack.c.b16 %v375, %v373
        %v434 = vpack.c.b16 %v376, %v374
        %v435 = vpack.c.b16 %v379, %v377
        %v436 = vpack.c.b16 %v380, %v378
        %v437 = vpack.c.b16 %v383, %v381
        %v438 = vpack.c.b16 %v384, %v382
        %v439 = vpack.c.b16 %v387, %v385
        %v440 = vpack.c.b16 %v388, %v386
        %v441 = vpack.c.b16 %v391, %v389
        %v442 = vpack.c.b16 %v392, %v390
        %v443 = vpack.c.b16 %v395, %v393
        %v444 = vpack.c.b16 %v396, %v394
        %v445 = vpack.c.b16 %v399, %v397
        %v446 = vpack.c.b16 %v400, %v398
        %v447 = vpack.c.b16 %v403, %v401
        %v448 = vpack.c.b16 %v404, %v402
        %v449 = vpack.c.b16 %v407, %v405
        %v450 = vpack.c.b16 %v408, %v406
        %v451 = vpack.c.b16 %v411, %v409
        %v452 = vpack.c.b16 %v412, %v410
        %v453 = vpack.c.b16 %v415, %v413
        %v454 = vpack.c.b16 %v416, %v414
        %v455 = vpack.c.b16 %v419, %v417
        %v456 = vpack.c.b16 %v420, %v418
        %v457 = vpack.c.b16 %v423, %v421
        %v458 = vpack.c.b16 %v424, %v422
        %v459 = vpack.c.b16 %v427, %v425
        %v460 = vpack.c.b16 %v428, %v426
        %493 = vmatpush.bf16.msra.mxu0 %v443
        %494 = vmatpush.bf16.msra.mxu0 %v441
        %495 = vmatpush.bf16.msra.mxu0 %v439
        %496 = vmatpush.bf16.msra.mxu0 %v437
        %497 = vmatpush.bf16.msra.mxu0 %v435
        %498 = vmatpush.bf16.msra.mxu0 %v433
        %499 = vmatpush.bf16.msra.mxu0 %v431
        %500 = vmatpush.bf16.msra.mxu0 %v429
        %501 = vmatmul.bf16.gmra.mxu0 %v329
        %v502 = vpop.f32.mrf.mxu0
        %v503 = vadd.f32 0.0, %v502
        %v504 = vpop.f32.mrf.mxu0
        %v505 = vadd.f32 0.0, %v504
        %506 = vdwg.mxu0
        %507 = vmatpush.bf16.msra.mxu0 %v459
        %508 = vmatpush.bf16.msra.mxu0 %v457
        %509 = vmatpush.bf16.msra.mxu0 %v455
        %510 = vmatpush.bf16.msra.mxu0 %v453
        %511 = vmatpush.bf16.msra.mxu0 %v451
        %512 = vmatpush.bf16.msra.mxu0 %v449
        %513 = vmatpush.bf16.msra.mxu0 %v447
        %514 = vmatpush.bf16.msra.mxu0 %v445
        %515 = vmatmul.bf16.gmra.mxu0 %v330
        %v516 = vpop.f32.mrf.mxu0
        %v517 = vadd.f32 %v503, %v516
        %v518 = vpop.f32.mrf.mxu0
        %v519 = vadd.f32 %v505, %v518
        %520 = vdwg.mxu0
        %521 = vmatpush.bf16.msra.mxu0 %v444
        %522 = vmatpush.bf16.msra.mxu0 %v442
        %523 = vmatpush.bf16.msra.mxu0 %v440
        %524 = vmatpush.bf16.msra.mxu0 %v438
        %525 = vmatpush.bf16.msra.mxu0 %v436
        %526 = vmatpush.bf16.msra.mxu0 %v434
        %527 = vmatpush.bf16.msra.mxu0 %v432
        %528 = vmatpush.bf16.msra.mxu0 %v430
        %529 = vmatmul.bf16.gmra.mxu0 %v329
        %v530 = vpop.f32.mrf.mxu0
        %v531 = vadd.f32 0.0, %v530
        %v532 = vpop.f32.mrf.mxu0
        %v533 = vadd.f32 0.0, %v532
        %534 = vdwg.mxu0
        %535 = vmatpush.bf16.msra.mxu0 %v460
        %536 = vmatpush.bf16.msra.mxu0 %v458
        %537 = vmatpush.bf16.msra.mxu0 %v456
        %538 = vmatpush.bf16.msra.mxu0 %v454
        %539 = vmatpush.bf16.msra.mxu0 %v452
        %540 = vmatpush.bf16.msra.mxu0 %v450
        %541 = vmatpush.bf16.msra.mxu0 %v448
        %542 = vmatpush.bf16.msra.mxu0 %v446
        %543 = vmatmul.bf16.gmra.mxu0 %v330
        %v544 = vpop.f32.mrf.mxu0
        %v545 = vadd.f32 %v531, %v544
        %v546 = vpop.f32.mrf.mxu0
        %v547 = vadd.f32 %v533, %v546
        %548 = vdwg.mxu0
        %v549 = vadd.f32 %v285, %v517
        %v550 = vadd.f32 %v286, %v545
        %v551 = vadd.f32 %v287, %v519
        %v552 = vadd.f32 %v288, %v547
        %553 = vst [vmem:[#allocation2] sm:$0xff] %v549
        %554 = vst [vmem:[#allocation2 + $0x8] sm:$0xff] %v550
        %555 = vst [vmem:[#allocation2 + $0x10] sm:$0xff] %v551
        %556 = vst [vmem:[#allocation2 + $0x18] sm:$0xff] %v552
        // Predicated region
        $region41: #{coordinate_transformer_forward.10} parent=31 // pred_check
          %p557 = pneg %p277
        $region42: #{coordinate_transformer_forward.10} parent=31 // pred_check_branch
          %559 = sbr.rel (%p557) target = $region44
        $region43: #{coordinate_transformer_forward.10} parent=31 // pred_region
          %v560 = vld [vmem:[#allocation2] sm:$0xff]
          %v561 = vld [vmem:[#allocation2 + $0x8] sm:$0xff]
          %v562 = vld [vmem:[#allocation2 + $0x10] sm:$0xff]
          %v563 = vld [vmem:[#allocation2 + $0x18] sm:$0xff]
          %v564 = vld [vmem:[%s273] sm:$0x3]
          %v566 = vperm.slane %v564, 0
          %v567 = vperm.slane %v564, 1
          %v570 = vadd.f32 %v560, %v566
          %v571 = vadd.f32 %v561, %v567
          %v572 = vadd.f32 %v562, %v566
          %v573 = vadd.f32 %v563, %v567
          %v574 = vpack.c.bf16 %v571, %v570
          %v575 = vpack.c.bf16 %v573, %v572
          %576 = vst [vmem:[%s255] sm:$0xff] %v574
          %577 = vst [vmem:[%s255 + $0x8] sm:$0xff] %v575
        $region44: #{coordinate_transformer_forward.10} parent=31 // pred_fallthru
          _
        %s578 = sand.u32 %s128, 1
        %s579 = sand.u32 %s128, 1
        %s580 = smul.addr %s579, 16
        %s581 = scalar_lea.vmem [#allocation5], %s580
        // Predicated region
        $region45: #{coordinate_transformer_forward.10} parent=31 // pred_check
          %p582 = pneg %p138
        $region46: #{coordinate_transformer_forward.10} parent=31 // pred_check_branch
          %584 = sbr.rel (%p582) target = $region48
        $region47: #{coordinate_transformer_forward.10} parent=31 // pred_region
          %s585 = smul.u32 2, %s22
          %s586 = smul.u32 2, %s23
          %s587 = smul.addr %s585, 6
          %s588 = sadd.s32 %s586, %s587
          %s589 = smul.addr %s588, 4
          %s590 = scalar_lea.vmem %s3, %s589
          // Predicated region
          $region49: #{coordinate_transformer_forward.10} parent=47 // pred_check
            _
          $region50: #{coordinate_transformer_forward.10} parent=47 // pred_check_branch
            %592 = sbr.rel (0) target = $region52
          $region51: #{coordinate_transformer_forward.10} parent=47 // pred_region
            // Predicated region
            $region53: #{coordinate_transformer_forward.10} parent=51 // pred_check
              _
            $region54: #{coordinate_transformer_forward.10} parent=51 // pred_check_branch
              %594 = sbr.rel (0) target = $region56
            $region55: #{coordinate_transformer_forward.10} parent=51 // pred_region
              // Predicated region
              $region68: #{coordinate_transformer_forward.10} parent=55 // pred_check
                _
              $region69: #{coordinate_transformer_forward.10} parent=55 // pred_check_branch
                %612 = sbr.rel (0) target = $region71
              $region70: #{coordinate_transformer_forward.10} parent=55 // pred_region
                loop: start=0, step=1, limit=1
                $region72: #{coordinate_transformer_forward.10} parent=70 // loop_pre_header
                  _
                $region73: #{coordinate_transformer_forward.10} parent=70 // loop_header
                  %s614 = sphi 0, %s618
                  %p615 = scmp.ge.s32.totalorder %s614, 1
                  %s619 = sphi %s581, %s581
                  %s620 = sphi %s590, %s590
                $region74: #{coordinate_transformer_forward.10} parent=70 // loop_header_branch
                  %617 = sbr.rel (%p615) target = $region78
                $region75: #{coordinate_transformer_forward.10} parent=70 // loop_body
                  %v621 = vld [vmem:[%s619] sm:$0xff]
                  %622 = vst [vmem:[%s620] sm:$0xff] %v621
                  %v623 = vld [vmem:[%s619 + $0x8] sm:$0xff]
                  %624 = vst [vmem:[%s620 + $0x18] sm:$0xff] %v623
                $region76: #{coordinate_transformer_forward.10} parent=70 // loop_footer
                  %s618 = sadd.s32 1, %s614
                $region77: #{coordinate_transformer_forward.10} parent=70 // loop_footer_branch
                  %613 = sbr.rel target = $region73
                $region78: #{coordinate_transformer_forward.10} parent=70 // loop_exit
                  _
              $region71: #{coordinate_transformer_forward.10} parent=55 // pred_fallthru
                _
              // Predicated region
              $region79: #{coordinate_transformer_forward.10} parent=55 // pred_check
                _
              $region80: #{coordinate_transformer_forward.10} parent=55 // pred_check_branch
                %626 = sbr.rel target = $region82
              $region81: #{coordinate_transformer_forward.10} parent=55 // pred_region
                _
              $region82: #{coordinate_transformer_forward.10} parent=55 // pred_fallthru
                _
            $region56: #{coordinate_transformer_forward.10} parent=51 // pred_fallthru
              _
            // Predicated region
            $region57: #{coordinate_transformer_forward.10} parent=51 // pred_check
              _
            $region58: #{coordinate_transformer_forward.10} parent=51 // pred_check_branch
              %596 = sbr.rel target = $region60
            $region59: #{coordinate_transformer_forward.10} parent=51 // pred_region
              %s598 = ssub.s32 256, 1
              loop: start=0, step=1, limit=1
              $region61: #{coordinate_transformer_forward.10} parent=59 // loop_pre_header
                _
              $region62: #{coordinate_transformer_forward.10} parent=59 // loop_header
                %s600 = sphi 0, %s604
                %p601 = scmp.ge.s32.totalorder %s600, 1
                %s605 = sphi %s581, %s581
                %s606 = sphi %s590, %s590
              $region63: #{coordinate_transformer_forward.10} parent=59 // loop_header_branch
                %603 = sbr.rel (%p601) target = $region67
              $region64: #{coordinate_transformer_forward.10} parent=59 // loop_body
                %v607 = vld [vmem:[%s605] sm:%s598]
                %608 = vst [vmem:[%s606] sm:%s598] %v607
                %v609 = vld [vmem:[%s605 + $0x8] sm:%s598]
                %610 = vst [vmem:[%s606 + $0x18] sm:%s598] %v609
              $region65: #{coordinate_transformer_forward.10} parent=59 // loop_footer
                %s604 = sadd.s32 1, %s600
              $region66: #{coordinate_transformer_forward.10} parent=59 // loop_footer_branch
                %599 = sbr.rel target = $region62
              $region67: #{coordinate_transformer_forward.10} parent=59 // loop_exit
                _
            $region60: #{coordinate_transformer_forward.10} parent=51 // pred_fallthru
              _
          $region52: #{coordinate_transformer_forward.10} parent=47 // pred_fallthru
            _
          %627 = vnop
        $region48: #{coordinate_transformer_forward.10} parent=31 // pred_fallthru
          _
      $region32: #{coordinate_transformer_forward.10} parent=5 // pred_fallthru
        _
      %p628 = scmp.le.s32.totalorder 2, %s12
      // Predicated region
      $region83: #{coordinate_transformer_forward.10} parent=5 // pred_check
        %p629 = pneg %p628
      $region84: #{coordinate_transformer_forward.10} parent=5 // pred_check_branch
        %631 = sbr.rel (%p629) target = $region86
      $region85: #{coordinate_transformer_forward.10} parent=5 // pred_region
        %s632 = ssub.s32 %s12, 2
        // Predicated region
        $region87: #{coordinate_transformer_forward.10} parent=85 // pred_check
          %p633 = pneg %p144
        $region88: #{coordinate_transformer_forward.10} parent=85 // pred_check_branch
          %635 = sbr.rel (%p633) target = $region90
        $region89: #{coordinate_transformer_forward.10} parent=85 // pred_region
          %s636 = sand.u32 %s129, 1
          %s637 = sand.u32 %s129, 1
          %s638 = smul.addr %s637, 16
          %s639 = scalar_lea.vmem [#allocation5], %s638
        $region90: #{coordinate_transformer_forward.10} parent=85 // pred_fallthru
          _
      $region86: #{coordinate_transformer_forward.10} parent=5 // pred_fallthru
        _
    $region6: #{coordinate_transformer_forward.10} parent=1 // loop_footer
      %s16 = sadd.s32 1, %s12
    $region7: #{coordinate_transformer_forward.10} parent=1 // loop_footer_branch
      %11 = sbr.rel target = $region3
    $region8: #{coordinate_transformer_forward.10} parent=1 // loop_exit
      _
    %640 = vsyncpa [#allocation4], 1
    %s641 = scalar_lea.sflag [#allocation4], 1
    %642 = vsyncpa %s641, 1

// kernel: coordinate_transformer_forward.13
$region0: #{coordinate_transformer_forward.13}
  #allocation0 [shape = 'u32[]', space=smem, size = 0x4, offset = 0x4, fixed_abs, tag = 'smem constant byte address 0x4 - core index']
  #allocation1 [shape = 'u32[72,128]{1,0:T(1,128)}', space=vmem, size = 0x9000, scoped, tag = 'internal scratch']
  #allocation2 [shape = 'f32[16,256]{1,0:T(8,128)}', space=vmem, size = 0x4000, scoped, tag = 'scratch operand']
  %s0 = inlined_call_operand.vmem [shape: bf16[16,1024], index: 0, kind: input, shape index: {}]
  %s1 = inlined_call_operand.hbm [shape: bf16[1024,256], index: 1, kind: input, shape index: {}]
  %s2 = inlined_call_operand.vmem [shape: f32[1,256], index: 2, kind: input, shape index: {}]
  %s3 = inlined_call_operand.vmem [shape: bf16[16,256], index: 3, kind: input, shape index: {}]
  %s4 = inlined_call_operand.vmem [shape: f32[1,256], index: 4, kind: input, shape index: {}]
  %s5 = inlined_call_operand.vmem [shape: f32[1,256], index: 5, kind: input, shape index: {}]
  %s6 = inlined_call_operand.vmem [shape: bf16[16,256], index: 6, kind: output, shape index: {}]
  %s7 = sld [smem:[#allocation0]]
  $region92: #{coordinate_transformer_forward.13} parent=0
    _
  %s9 = ssub.s32 1, %s7
  %s10 = scalar_select 0, %s9, %s7
  $region1: #{coordinate_transformer_forward.13} parent=0
    #allocation3 [shape = 'u8[32768]{0}', space=vmem, size = 0x8000, scoped, tag = 'input window, operand 0']
    #allocation4 [shape = 'u8[524288]{0}', space=vmem, size = 0x80000, scoped, tag = 'input window, operand 1']
    #allocation5 [shape = 's32[2]{0}', space=sflag, size = 0x8, scoped, tag = 'scoped memory for coordinate_transformer_forward.13']
    %11 = vsyncpa [#allocation5], 0
    %s12 = scalar_lea.sflag [#allocation5], 1
    %13 = vsyncpa %s12, 0
    loop: start=0, step=1, limit=4
    $region2: #{coordinate_transformer_forward.13} parent=1 // loop_pre_header
      _
    $region3: #{coordinate_transformer_forward.13} parent=1 // loop_header
      %s15 = sphi 0, %s19
      %p16 = scmp.ge.s32.totalorder %s15, 4
      %s22 = sphi 0, %s34
      %s23 = sphi 0, %s30
      %s24 = sphi 0, %s22
      %s25 = sphi 0, %s23
      %s26 = sphi 0, %s24
      %s27 = sphi 0, %s25
      %s39 = sphi 0, %s41
      %s42 = sphi 0, %s39
      %s43 = sphi 0, %s42
      %s59 = sphi 0, %s43
      %s65 = sphi 0, %s67
      %s68 = sphi 0, %s65
      %s69 = sphi 0, %s68
      %s85 = sphi 0, %s69
      %s89 = sphi 0, %s89
      %s91 = sphi 0, %s89
      %s92 = sphi 0, %s91
      %s106 = sphi 0, %s92
      %s112 = sphi 0, %s114
      %s115 = sphi 0, %s112
      %s116 = sphi 0, %s115
      %s132 = sphi 0, %s116
      %s136 = sphi 0, %s136
      %s138 = sphi 0, %s136
      %s139 = sphi 0, %s138
      %s153 = sphi 0, %s139
      %s157 = sphi 0, %s157
      %s159 = sphi 0, %s157
      %s160 = sphi 0, %s159
      %s174 = sphi 0, %s160
      %s180 = sphi 0, %s182
      %s183 = sphi 0, %s180
      %s184 = sphi 0, %s183
      %s200 = sphi 0, %s184
    $region4: #{coordinate_transformer_forward.13} parent=1 // loop_header_branch
      %18 = sbr.rel (%p16) target = $region8
    $region5: #{coordinate_transformer_forward.13} parent=1 // loop_body
      %s20 = ssub.s32 %s15, 1
      %s21 = ssub.s32 %s15, 2
      %s28 = sadd.s32 1, %s23
      %p29 = scmp.ge.s32.totalorder %s28, 2
      %s30 = scalar_select %p29, 0, %s28
      %s31 = sadd.s32 1, %s22
      %s32 = scalar_select %p29, %s31, %s22
      %p33 = scmp.ge.s32.totalorder %s32, 1
      %s34 = scalar_select %p33, 0, %s32
      %s35 = ssub.s32 %s22, %s34
      %s36 = ssub.s32 %s23, %s30
      %s37 = sor.u32 %s35, %s36
      %p38 = scmp.eq.s32.totalorder %s37, 0
      %s40 = sadd.s32 %s39, 1
      %s41 = scalar_select %p38, %s39, %s40
      %p44 = pneg %p38
      %p45 = scmp.eq.s32.totalorder %s15, 1
      %p46 = por %p44, %p45
      %p47 = scmp.ne.s32.totalorder %s39, %s42
      %p48 = scmp.eq.s32.totalorder %s15, 0
      %p49 = por %p47, %p48
      %p50 = scmp.ne.s32.totalorder %s39, %s42
      %p51 = scmp.eq.s32.totalorder %s20, 1
      %p52 = por %p50, %p51
      %p53 = scmp.ne.s32.totalorder %s42, %s43
      %p54 = scmp.eq.s32.totalorder %s20, 0
      %p55 = por %p53, %p54
      %p56 = scmp.ne.s32.totalorder %s42, %s43
      %p57 = scmp.eq.s32.totalorder %s21, 1
      %p58 = por %p56, %p57
      %p60 = scmp.ne.s32.totalorder %s43, %s59
      %p61 = scmp.eq.s32.totalorder %s21, 0
      %p62 = por %p60, %p61
      %s63 = ssub.s32 %s23, %s30
      %p64 = scmp.eq.s32.totalorder %s63, 0
      %s66 = sadd.s32 %s65, 1
      %s67 = scalar_select %p64, %s65, %s66
      %p70 = pneg %p64
      %p71 = scmp.eq.s32.totalorder %s15, 1
      %p72 = por %p70, %p71
      %p73 = scmp.ne.s32.totalorder %s65, %s68
      %p74 = scmp.eq.s32.totalorder %s15, 0
      %p75 = por %p73, %p74
      %p76 = scmp.ne.s32.totalorder %s65, %s68
      %p77 = scmp.eq.s32.totalorder %s20, 1
      %p78 = por %p76, %p77
      %p79 = scmp.ne.s32.totalorder %s68, %s69
      %p80 = scmp.eq.s32.totalorder %s20, 0
      %p81 = por %p79, %p80
      %p82 = scmp.ne.s32.totalorder %s68, %s69
      %p83 = scmp.eq.s32.totalorder %s21, 1
      %p84 = por %p82, %p83
      %p86 = scmp.ne.s32.totalorder %s69, %s85
      %p87 = scmp.eq.s32.totalorder %s21, 0
      %p88 = por %p86, %p87
      %s90 = sadd.s32 %s89, 1
      %p93 = scmp.eq.s32.totalorder %s15, 1
      %p94 = scmp.ne.s32.totalorder %s89, %s91
      %p95 = scmp.eq.s32.totalorder %s15, 0
      %p96 = por %p94, %p95
      %p97 = scmp.ne.s32.totalorder %s89, %s91
      %p98 = scmp.eq.s32.totalorder %s20, 1
      %p99 = por %p97, %p98
      %p100 = scmp.ne.s32.totalorder %s91, %s92
      %p101 = scmp.eq.s32.totalorder %s20, 0
      %p102 = por %p100, %p101
      %p103 = scmp.ne.s32.totalorder %s91, %s92
      %p104 = scmp.eq.s32.totalorder %s21, 1
      %p105 = por %p103, %p104
      %p107 = scmp.ne.s32.totalorder %s92, %s106
      %p108 = scmp.eq.s32.totalorder %s21, 0
      %p109 = por %p107, %p108
      %s110 = ssub.s32 %s22, %s34
      %p111 = scmp.eq.s32.totalorder %s110, 0
      %s113 = sadd.s32 %s112, 1
      %s114 = scalar_select %p111, %s112, %s113
      %p117 = pneg %p111
      %p118 = scmp.eq.s32.totalorder %s15, 1
      %p119 = por %p117, %p118
      %p120 = scmp.ne.s32.totalorder %s112, %s115
      %p121 = scmp.eq.s32.totalorder %s15, 0
      %p122 = por %p120, %p121
      %p123 = scmp.ne.s32.totalorder %s112, %s115
      %p124 = scmp.eq.s32.totalorder %s20, 1
      %p125 = por %p123, %p124
      %p126 = scmp.ne.s32.totalorder %s115, %s116
      %p127 = scmp.eq.s32.totalorder %s20, 0
      %p128 = por %p126, %p127
      %p129 = scmp.ne.s32.totalorder %s115, %s116
      %p130 = scmp.eq.s32.totalorder %s21, 1
      %p131 = por %p129, %p130
      %p133 = scmp.ne.s32.totalorder %s116, %s132
      %p134 = scmp.eq.s32.totalorder %s21, 0
      %p135 = por %p133, %p134
      %s137 = sadd.s32 %s136, 1
      %p140 = scmp.eq.s32.totalorder %s15, 1
      %p141 = scmp.ne.s32.totalorder %s136, %s138
      %p142 = scmp.eq.s32.totalorder %s15, 0
      %p143 = por %p141, %p142
      %p144 = scmp.ne.s32.totalorder %s136, %s138
      %p145 = scmp.eq.s32.totalorder %s20, 1
      %p146 = por %p144, %p145
      %p147 = scmp.ne.s32.totalorder %s138, %s139
      %p148 = scmp.eq.s32.totalorder %s20, 0
      %p149 = por %p147, %p148
      %p150 = scmp.ne.s32.totalorder %s138, %s139
      %p151 = scmp.eq.s32.totalorder %s21, 1
      %p152 = por %p150, %p151
      %p154 = scmp.ne.s32.totalorder %s139, %s153
      %p155 = scmp.eq.s32.totalorder %s21, 0
      %p156 = por %p154, %p155
      %s158 = sadd.s32 %s157, 1
      %p161 = scmp.eq.s32.totalorder %s15, 1
      %p162 = scmp.ne.s32.totalorder %s157, %s159
      %p163 = scmp.eq.s32.totalorder %s15, 0
      %p164 = por %p162, %p163
      %p165 = scmp.ne.s32.totalorder %s157, %s159
      %p166 = scmp.eq.s32.totalorder %s20, 1
      %p167 = por %p165, %p166
      %p168 = scmp.ne.s32.totalorder %s159, %s160
      %p169 = scmp.eq.s32.totalorder %s20, 0
      %p170 = por %p168, %p169
      %p171 = scmp.ne.s32.totalorder %s159, %s160
      %p172 = scmp.eq.s32.totalorder %s21, 1
      %p173 = por %p171, %p172
      %p175 = scmp.ne.s32.totalorder %s160, %s174
      %p176 = scmp.eq.s32.totalorder %s21, 0
      %p177 = por %p175, %p176
      %s178 = ssub.s32 %s22, %s34
      %p179 = scmp.eq.s32.totalorder %s178, 0
      %s181 = sadd.s32 %s180, 1
      %s182 = scalar_select %p179, %s180, %s181
      %p185 = pneg %p179
      %p186 = scmp.eq.s32.totalorder %s15, 1
      %p187 = por %p185, %p186
      %p188 = scmp.ne.s32.totalorder %s180, %s183
      %p189 = scmp.eq.s32.totalorder %s15, 0
      %p190 = por %p188, %p189
      %p191 = scmp.ne.s32.totalorder %s180, %s183
      %p192 = scmp.eq.s32.totalorder %s20, 1
      %p193 = por %p191, %p192
      %p194 = scmp.ne.s32.totalorder %s183, %s184
      %p195 = scmp.eq.s32.totalorder %s20, 0
      %p196 = por %p194, %p195
      %p197 = scmp.ne.s32.totalorder %s183, %s184
      %p198 = scmp.eq.s32.totalorder %s21, 1
      %p199 = por %p197, %p198
      %p201 = scmp.ne.s32.totalorder %s184, %s200
      %p202 = scmp.eq.s32.totalorder %s21, 0
      %p203 = por %p201, %p202
      %p204 = scmp.le.s32.totalorder 1, %s15
      %p205 = scmp.lt.s32.totalorder %s15, 3
      %p206 = pnand %p204, %p205
      %p207 = pneg %p206
      // Predicated region
      $region9: #{coordinate_transformer_forward.13} parent=5 // pred_check
        _
      $region10: #{coordinate_transformer_forward.13} parent=5 // pred_check_branch
        %209 = sbr.rel (%p206) target = $region12
      $region11: #{coordinate_transformer_forward.13} parent=5 // pred_region
        %s210 = ssub.s32 %s15, 1
        // Predicated region
        $region13: #{coordinate_transformer_forward.13} parent=11 // pred_check
          %p211 = pneg %p102
        $region14: #{coordinate_transformer_forward.13} parent=11 // pred_check_branch
          %213 = sbr.rel (%p211) target = $region16
        $region15: #{coordinate_transformer_forward.13} parent=11 // pred_region
          _
        $region16: #{coordinate_transformer_forward.13} parent=11 // pred_fallthru
          _
        // Predicated region
        $region17: #{coordinate_transformer_forward.13} parent=11 // pred_check
          %p214 = pneg %p128
        $region18: #{coordinate_transformer_forward.13} parent=11 // pred_check_branch
          %216 = sbr.rel (%p214) target = $region20
        $region19: #{coordinate_transformer_forward.13} parent=11 // pred_region
          %s217 = smul.u32 2, %s24
          %p218 = scmp.lt.s32.totalorder %s217, 1
          %s219 = scalar_select %p218, %s217, 1
          %s220 = smul.addr %s219, 2
          %s221 = smul.addr %s220, 4
          %s222 = scalar_lea.vmem %s3, %s221
          %s223 = smul.u32 2, %s24
        $region20: #{coordinate_transformer_forward.13} parent=11 // pred_fallthru
          _
        // Predicated region
        $region21: #{coordinate_transformer_forward.13} parent=11 // pred_check
          %p224 = pneg %p149
        $region22: #{coordinate_transformer_forward.13} parent=11 // pred_check_branch
          %226 = sbr.rel (%p224) target = $region24
        $region23: #{coordinate_transformer_forward.13} parent=11 // pred_region
          _
        $region24: #{coordinate_transformer_forward.13} parent=11 // pred_fallthru
          _
        // Predicated region
        $region25: #{coordinate_transformer_forward.13} parent=11 // pred_check
          %p227 = pneg %p170
        $region26: #{coordinate_transformer_forward.13} parent=11 // pred_check_branch
          %229 = sbr.rel (%p227) target = $region28
        $region27: #{coordinate_transformer_forward.13} parent=11 // pred_region
          _
        $region28: #{coordinate_transformer_forward.13} parent=11 // pred_fallthru
          _
      $region12: #{coordinate_transformer_forward.13} parent=5 // pred_fallthru
        _
      %p230 = scmp.lt.s32.totalorder %s15, 2
      // Predicated region
      $region29: #{coordinate_transformer_forward.13} parent=5 // pred_check
        %p231 = pneg %p230
      $region30: #{coordinate_transformer_forward.13} parent=5 // pred_check_branch
        %233 = sbr.rel (%p231) target = $region32
      $region31: #{coordinate_transformer_forward.13} parent=5 // pred_region
        // Predicated region
        $region33: #{coordinate_transformer_forward.13} parent=31 // pred_check
          %p234 = pneg %p49
        $region34: #{coordinate_transformer_forward.13} parent=31 // pred_check_branch
          %236 = sbr.rel (%p234) target = $region36
        $region35: #{coordinate_transformer_forward.13} parent=31 // pred_region
          %s237 = sand.u32 %s39, 1
          %s238 = sand.u32 %s39, 1
          %s239 = smul.addr %s238, 32
          %s240 = scalar_lea.vmem [#allocation3], %s239
          %s241 = smul.u32 2, %s22
          %s242 = smul.u32 4, %s23
          %s243 = smul.addr %s241, 8
          %s244 = sadd.s32 %s242, %s243
          %s245 = smul.addr %s244, 4
          %s246 = scalar_lea.vmem %s0, %s245
          // Predicated region
          $region37: #{coordinate_transformer_forward.13} parent=35 // pred_check
            _
          $region38: #{coordinate_transformer_forward.13} parent=35 // pred_check_branch
            %248 = sbr.rel (0) target = $region40
          $region39: #{coordinate_transformer_forward.13} parent=35 // pred_region
            // Predicated region
            $region41: #{coordinate_transformer_forward.13} parent=39 // pred_check
              _
            $region42: #{coordinate_transformer_forward.13} parent=39 // pred_check_branch
              %250 = sbr.rel (0) target = $region44
            $region43: #{coordinate_transformer_forward.13} parent=39 // pred_region
              loop: start=0, step=1, limit=1
              $region45: #{coordinate_transformer_forward.13} parent=43 // loop_pre_header
                _
              $region46: #{coordinate_transformer_forward.13} parent=43 // loop_header
                %s252 = sphi 0, %s256
                %p253 = scmp.ge.s32.totalorder %s252, 1
                %s257 = sphi %s246, %s246
                %s258 = sphi %s240, %s240
              $region47: #{coordinate_transformer_forward.13} parent=43 // loop_header_branch
                %255 = sbr.rel (%p253) target = $region51
              $region48: #{coordinate_transformer_forward.13} parent=43 // loop_body
                %v259 = vld [vmem:[%s257] sm:$0xff]
                %260 = vst [vmem:[%s258] sm:$0xff] %v259
                %v261 = vld [vmem:[%s257 + $0x8] sm:$0xff]
                %262 = vst [vmem:[%s258 + $0x8] sm:$0xff] %v261
                %v263 = vld [vmem:[%s257 + $0x20] sm:$0xff]
                %264 = vst [vmem:[%s258 + $0x10] sm:$0xff] %v263
                %v265 = vld [vmem:[%s257 + $0x28] sm:$0xff]
                %266 = vst [vmem:[%s258 + $0x18] sm:$0xff] %v265
              $region49: #{coordinate_transformer_forward.13} parent=43 // loop_footer
                %s256 = sadd.s32 1, %s252
              $region50: #{coordinate_transformer_forward.13} parent=43 // loop_footer_branch
                %251 = sbr.rel target = $region46
              $region51: #{coordinate_transformer_forward.13} parent=43 // loop_exit
                _
            $region44: #{coordinate_transformer_forward.13} parent=39 // pred_fallthru
              _
            // Predicated region
            $region52: #{coordinate_transformer_forward.13} parent=39 // pred_check
              _
            $region53: #{coordinate_transformer_forward.13} parent=39 // pred_check_branch
              %268 = sbr.rel target = $region55
            $region54: #{coordinate_transformer_forward.13} parent=39 // pred_region
              _
            $region55: #{coordinate_transformer_forward.13} parent=39 // pred_fallthru
              _
          $region40: #{coordinate_transformer_forward.13} parent=35 // pred_fallthru
            _
          %269 = vnop
        $region36: #{coordinate_transformer_forward.13} parent=31 // pred_fallthru
          _
        // Predicated region
        $region56: #{coordinate_transformer_forward.13} parent=31 // pred_check
          %p270 = pneg %p75
        $region57: #{coordinate_transformer_forward.13} parent=31 // pred_check_branch
          %272 = sbr.rel (%p270) target = $region59
        $region58: #{coordinate_transformer_forward.13} parent=31 // pred_region
          %s273 = sand.u32 %s65, 1
          %s274 = scalar_lea.sflag [#allocation5], %s273
          %s275 = sand.u32 %s65, 1
          %s276 = smul.addr %s275, 512
          %s277 = scalar_lea.vmem [#allocation4], %s276
          %s278 = smul.u32 64, %s23
          %280 = vsyncadd %s274, 0
          %s281 = smul.addr %s278, 2
          %s282 = smul.addr %s281, 4
          %s283 = scalar_lea.hbm %s1, %s282
          %s284 = sshll.u32 %s283, 4
          %s285 = int_to_ptr.hbm [resolvable:$true] %s284
          %s286 = sshll.u32 %s277, 4
          %s287 = int_to_ptr.vmem [resolvable:$true] %s286
          %292 = dma.hbm_to_vmem [thread:$0]  %s285, 8192, %s287, %s274, 128, 128, 8
        $region59: #{coordinate_transformer_forward.13} parent=31 // pred_fallthru
          _
      $region32: #{coordinate_transformer_forward.13} parent=5 // pred_fallthru
        _
      %p293 = scmp.le.s32.totalorder 1, %s15
      %p294 = scmp.lt.s32.totalorder %s15, 3
      %p295 = pnand %p293, %p294
      %p296 = pneg %p295
      // Predicated region
      $region60: #{coordinate_transformer_forward.13} parent=5 // pred_check
        _
      $region61: #{coordinate_transformer_forward.13} parent=5 // pred_check_branch
        %298 = sbr.rel (%p295) target = $region63
      $region62: #{coordinate_transformer_forward.13} parent=5 // pred_region
        %s299 = ssub.s32 %s15, 1
        %s300 = sand.u32 %s42, 1
        %s301 = sand.u32 %s42, 1
        %s302 = smul.addr %s301, 32
        %s303 = scalar_lea.vmem [#allocation3], %s302
        // Predicated region
        $region64: #{coordinate_transformer_forward.13} parent=62 // pred_check
          %p304 = pneg %p55
        $region65: #{coordinate_transformer_forward.13} parent=62 // pred_check_branch
          %306 = sbr.rel (%p304) target = $region67
        $region66: #{coordinate_transformer_forward.13} parent=62 // pred_region
          _
        $region67: #{coordinate_transformer_forward.13} parent=62 // pred_fallthru
          _
        %s307 = sand.u32 %s68, 1
        %s308 = scalar_lea.sflag [#allocation5], %s307
        %s309 = sand.u32 %s68, 1
        %s310 = smul.addr %s309, 512
        %s311 = scalar_lea.vmem [#allocation4], %s310
        // Predicated region
        $region68: #{coordinate_transformer_forward.13} parent=62 // pred_check
          %p312 = pneg %p81
        $region69: #{coordinate_transformer_forward.13} parent=62 // pred_check_branch
          %314 = sbr.rel (%p312) target = $region71
        $region70: #{coordinate_transformer_forward.13} parent=62 // pred_region
          %316 = dma.done %s308, 8192
        $region71: #{coordinate_transformer_forward.13} parent=62 // pred_fallthru
          _
        %s317 = sand.u32 %s42, 1
        %s318 = sand.u32 %s42, 1
        %s319 = smul.addr %s318, 32
        %s320 = scalar_lea.vmem [#allocation3], %s319
        %p321 = pneg %p55
        %p322 = pneg %p52
        %s323 = sand.u32 %s68, 1
        %s324 = scalar_lea.sflag [#allocation5], %s323
        %s325 = sand.u32 %s68, 1
        %s326 = smul.addr %s325, 512
        %s327 = scalar_lea.vmem [#allocation4], %s326
        %p328 = pneg %p81
        %p329 = pneg %p78
        %p330 = pneg %p102
        %p331 = pneg %p99
        %s332 = smul.u32 2, %s24
        %p333 = scmp.lt.s32.totalorder %s332, 1
        %s334 = scalar_select %p333, %s332, 1
        %s335 = smul.addr %s334, 2
        %s336 = smul.addr %s335, 4
        %s337 = scalar_lea.vmem %s3, %s336
        %p338 = pneg %p128
        %p339 = pneg %p125
        %p340 = pneg %p149
        %p341 = pneg %p146
        %p342 = pneg %p170
        %p343 = pneg %p167
        %p344 = pneg %p196
        %p345 = pneg %p193
        %s346 = smul.u32 2, %s24
        %p347 = scmp.lt.s32.totalorder %s346, 1
        %s348 = scalar_select %p347, %s346, 1
        %s349 = smul.addr %s348, 2
        %s350 = smul.addr %s349, 4
        %s351 = scalar_lea.vmem %s6, %s350
        %s352 = smul.u32 2, %s24
        %s353 = smul.u32 4, %s25
        %s354 = smul.u32 64, %s25
        %s355 = smul.u32 2, %s24
        %p356 = scmp.lt.s32.totalorder %s355, 1
        %s357 = scalar_select %p356, %s355, 1
        %s358 = smul.addr %s357, 2
        %s359 = smul.addr %s358, 4
        %s360 = scalar_lea.vmem %s3, %s359
        %s361 = smul.u32 2, %s24
        %s362 = smul.u32 2, %s24
        %p363 = scmp.lt.s32.totalorder %s362, 1
        %s364 = scalar_select %p363, %s362, 1
        %s365 = smul.addr %s364, 2
        %s366 = smul.addr %s365, 4
        %s367 = scalar_lea.vmem %s6, %s366
        %s368 = smul.u32 2, %s24
        %p369 = scmp.eq.s32.totalorder %s25, 0
        // Predicated region
        $region72: #{coordinate_transformer_forward.13} parent=62 // pred_check
          %p370 = pneg %p369
        $region73: #{coordinate_transformer_forward.13} parent=62 // pred_check_branch
          %372 = sbr.rel (%p370) target = $region75
        $region74: #{coordinate_transformer_forward.13} parent=62 // pred_region
          %373 = vst [vmem:[#allocation2] sm:$0xff] 0.0
          %374 = vst [vmem:[#allocation2 + $0x8] sm:$0xff] 0.0
          %375 = vst [vmem:[#allocation2 + $0x10] sm:$0xff] 0.0
          %376 = vst [vmem:[#allocation2 + $0x18] sm:$0xff] 0.0
        $region75: #{coordinate_transformer_forward.13} parent=62 // pred_fallthru
          _
        %v377 = vld [vmem:[#allocation2] sm:$0xff]
        %v378 = vld [vmem:[#allocation2 + $0x8] sm:$0xff]
        %v379 = vld [vmem:[#allocation2 + $0x10] sm:$0xff]
        %v380 = vld [vmem:[#allocation2 + $0x18] sm:$0xff]
        %v381 = vld [vmem:[%s303] sm:$0xff]
        %v382 = vld [vmem:[%s303 + $0x8] sm:$0xff]
        %v383 = vld [vmem:[%s303 + $0x10] sm:$0xff]
        %v384 = vld [vmem:[%s303 + $0x18] sm:$0xff]
        %v385 = vld [vmem:[%s311] sm:$0xff]
        %v386 = vld [vmem:[%s311 + $0x8] sm:$0xff]
        %v387 = vld [vmem:[%s311 + $0x10] sm:$0xff]
        %v388 = vld [vmem:[%s311 + $0x18] sm:$0xff]
        %v389 = vld [vmem:[%s311 + $0x20] sm:$0xff]
        %v390 = vld [vmem:[%s311 + $0x28] sm:$0xff]
        %v391 = vld [vmem:[%s311 + $0x30] sm:$0xff]
        %v392 = vld [vmem:[%s311 + $0x38] sm:$0xff]
        %v393 = vld [vmem:[%s311 + $0x40] sm:$0xff]
        %v394 = vld [vmem:[%s311 + $0x48] sm:$0xff]
        %v395 = vld [vmem:[%s311 + $0x50] sm:$0xff]
        %v396 = vld [vmem:[%s311 + $0x58] sm:$0xff]
        %v397 = vld [vmem:[%s311 + $0x60] sm:$0xff]
        %v398 = vld [vmem:[%s311 + $0x68] sm:$0xff]
        %v399 = vld [vmem:[%s311 + $0x70] sm:$0xff]
        %v400 = vld [vmem:[%s311 + $0x78] sm:$0xff]
        %v401 = vld [vmem:[%s311 + $0x80] sm:$0xff]
        %v402 = vld [vmem:[%s311 + $0x88] sm:$0xff]
        %v403 = vld [vmem:[%s311 + $0x90] sm:$0xff]
        %v404 = vld [vmem:[%s311 + $0x98] sm:$0xff]
        %v405 = vld [vmem:[%s311 + $0xa0] sm:$0xff]
        %v406 = vld [vmem:[%s311 + $0xa8] sm:$0xff]
        %v407 = vld [vmem:[%s311 + $0xb0] sm:$0xff]
        %v408 = vld [vmem:[%s311 + $0xb8] sm:$0xff]
        %v409 = vld [vmem:[%s311 + $0xc0] sm:$0xff]
        %v410 = vld [vmem:[%s311 + $0xc8] sm:$0xff]
        %v411 = vld [vmem:[%s311 + $0xd0] sm:$0xff]
        %v412 = vld [vmem:[%s311 + $0xd8] sm:$0xff]
        %v413 = vld [vmem:[%s311 + $0xe0] sm:$0xff]
        %v414 = vld [vmem:[%s311 + $0xe8] sm:$0xff]
        %v415 = vld [vmem:[%s311 + $0xf0] sm:$0xff]
        %v416 = vld [vmem:[%s311 + $0xf8] sm:$0xff]
        %v417 = vld [vmem:[%s311 + $0x100] sm:$0xff]
        %v418 = vld [vmem:[%s311 + $0x108] sm:$0xff]
        %v419 = vld [vmem:[%s311 + $0x110] sm:$0xff]
        %v420 = vld [vmem:[%s311 + $0x118] sm:$0xff]
        %v421 = vld [vmem:[%s311 + $0x120] sm:$0xff]
        %v422 = vld [vmem:[%s311 + $0x128] sm:$0xff]
        %v423 = vld [vmem:[%s311 + $0x130] sm:$0xff]
        %v424 = vld [vmem:[%s311 + $0x138] sm:$0xff]
        %v425 = vld [vmem:[%s311 + $0x140] sm:$0xff]
        %v426 = vld [vmem:[%s311 + $0x148] sm:$0xff]
        %v427 = vld [vmem:[%s311 + $0x150] sm:$0xff]
        %v428 = vld [vmem:[%s311 + $0x158] sm:$0xff]
        %v429 = vld [vmem:[%s311 + $0x160] sm:$0xff]
        %v430 = vld [vmem:[%s311 + $0x168] sm:$0xff]
        %v431 = vld [vmem:[%s311 + $0x170] sm:$0xff]
        %v432 = vld [vmem:[%s311 + $0x178] sm:$0xff]
        %v433 = vld [vmem:[%s311 + $0x180] sm:$0xff]
        %v434 = vld [vmem:[%s311 + $0x188] sm:$0xff]
        %v435 = vld [vmem:[%s311 + $0x190] sm:$0xff]
        %v436 = vld [vmem:[%s311 + $0x198] sm:$0xff]
        %v437 = vld [vmem:[%s311 + $0x1a0] sm:$0xff]
        %v438 = vld [vmem:[%s311 + $0x1a8] sm:$0xff]
        %v439 = vld [vmem:[%s311 + $0x1b0] sm:$0xff]
        %v440 = vld [vmem:[%s311 + $0x1b8] sm:$0xff]
        %v441 = vld [vmem:[%s311 + $0x1c0] sm:$0xff]
        %v442 = vld [vmem:[%s311 + $0x1c8] sm:$0xff]
        %v443 = vld [vmem:[%s311 + $0x1d0] sm:$0xff]
        %v444 = vld [vmem:[%s311 + $0x1d8] sm:$0xff]
        %v445 = vld [vmem:[%s311 + $0x1e0] sm:$0xff]
        %v446 = vld [vmem:[%s311 + $0x1e8] sm:$0xff]
        %v447 = vld [vmem:[%s311 + $0x1f0] sm:$0xff]
        %v448 = vld [vmem:[%s311 + $0x1f8] sm:$0xff]
        %v453 = vunpack.c.l.b16 %v381
        %v454 = vunpack.c.h.b16 %v381
        %v455 = vunpack.c.l.b16 %v382
        %v456 = vunpack.c.h.b16 %v382
        %v457 = vunpack.c.l.b16 %v383
        %v458 = vunpack.c.h.b16 %v383
        %v459 = vunpack.c.l.b16 %v384
        %v460 = vunpack.c.h.b16 %v384
        %v461 = vpack.c.b16 %v457, %v453
        %v462 = vpack.c.b16 %v458, %v454
        %v463 = vpack.c.b16 %v459, %v455
        %v464 = vpack.c.b16 %v460, %v456
        %v533 = vunpack.c.l.b16 %v385
        %v534 = vunpack.c.h.b16 %v385
        %v535 = vunpack.c.l.b16 %v386
        %v536 = vunpack.c.h.b16 %v386
        %v537 = vunpack.c.l.b16 %v387
        %v538 = vunpack.c.h.b16 %v387
        %v539 = vunpack.c.l.b16 %v388
        %v540 = vunpack.c.h.b16 %v388
        %v541 = vunpack.c.l.b16 %v389
        %v542 = vunpack.c.h.b16 %v389
        %v543 = vunpack.c.l.b16 %v390
        %v544 = vunpack.c.h.b16 %v390
        %v545 = vunpack.c.l.b16 %v391
        %v546 = vunpack.c.h.b16 %v391
        %v547 = vunpack.c.l.b16 %v392
        %v548 = vunpack.c.h.b16 %v392
        %v549 = vunpack.c.l.b16 %v393
        %v550 = vunpack.c.h.b16 %v393
        %v551 = vunpack.c.l.b16 %v394
        %v552 = vunpack.c.h.b16 %v394
        %v553 = vunpack.c.l.b16 %v395
        %v554 = vunpack.c.h.b16 %v395
        %v555 = vunpack.c.l.b16 %v396
        %v556 = vunpack.c.h.b16 %v396
        %v557 = vunpack.c.l.b16 %v397
        %v558 = vunpack.c.h.b16 %v397
        %v559 = vunpack.c.l.b16 %v398
        %v560 = vunpack.c.h.b16 %v398
        %v561 = vunpack.c.l.b16 %v399
        %v562 = vunpack.c.h.b16 %v399
        %v563 = vunpack.c.l.b16 %v400
        %v564 = vunpack.c.h.b16 %v400
        %v565 = vunpack.c.l.b16 %v401
        %v566 = vunpack.c.h.b16 %v401
        %v567 = vunpack.c.l.b16 %v402
        %v568 = vunpack.c.h.b16 %v402
        %v569 = vunpack.c.l.b16 %v403
        %v570 = vunpack.c.h.b16 %v403
        %v571 = vunpack.c.l.b16 %v404
        %v572 = vunpack.c.h.b16 %v404
        %v573 = vunpack.c.l.b16 %v405
        %v574 = vunpack.c.h.b16 %v405
        %v575 = vunpack.c.l.b16 %v406
        %v576 = vunpack.c.h.b16 %v406
        %v577 = vunpack.c.l.b16 %v407
        %v578 = vunpack.c.h.b16 %v407
        %v579 = vunpack.c.l.b16 %v408
        %v580 = vunpack.c.h.b16 %v408
        %v581 = vunpack.c.l.b16 %v409
        %v582 = vunpack.c.h.b16 %v409
        %v583 = vunpack.c.l.b16 %v410
        %v584 = vunpack.c.h.b16 %v410
        %v585 = vunpack.c.l.b16 %v411
        %v586 = vunpack.c.h.b16 %v411
        %v587 = vunpack.c.l.b16 %v412
        %v588 = vunpack.c.h.b16 %v412
        %v589 = vunpack.c.l.b16 %v413
        %v590 = vunpack.c.h.b16 %v413
        %v591 = vunpack.c.l.b16 %v414
        %v592 = vunpack.c.h.b16 %v414
        %v593 = vunpack.c.l.b16 %v415
        %v594 = vunpack.c.h.b16 %v415
        %v595 = vunpack.c.l.b16 %v416
        %v596 = vunpack.c.h.b16 %v416
        %v597 = vunpack.c.l.b16 %v417
        %v598 = vunpack.c.h.b16 %v417
        %v599 = vunpack.c.l.b16 %v418
        %v600 = vunpack.c.h.b16 %v418
        %v601 = vunpack.c.l.b16 %v419
        %v602 = vunpack.c.h.b16 %v419
        %v603 = vunpack.c.l.b16 %v420
        %v604 = vunpack.c.h.b16 %v420
        %v605 = vunpack.c.l.b16 %v421
        %v606 = vunpack.c.h.b16 %v421
        %v607 = vunpack.c.l.b16 %v422
        %v608 = vunpack.c.h.b16 %v422
        %v609 = vunpack.c.l.b16 %v423
        %v610 = vunpack.c.h.b16 %v423
        %v611 = vunpack.c.l.b16 %v424
        %v612 = vunpack.c.h.b16 %v424
        %v613 = vunpack.c.l.b16 %v425
        %v614 = vunpack.c.h.b16 %v425
        %v615 = vunpack.c.l.b16 %v426
        %v616 = vunpack.c.h.b16 %v426
        %v617 = vunpack.c.l.b16 %v427
        %v618 = vunpack.c.h.b16 %v427
        %v619 = vunpack.c.l.b16 %v428
        %v620 = vunpack.c.h.b16 %v428
        %v621 = vunpack.c.l.b16 %v429
        %v622 = vunpack.c.h.b16 %v429
        %v623 = vunpack.c.l.b16 %v430
        %v624 = vunpack.c.h.b16 %v430
        %v625 = vunpack.c.l.b16 %v431
        %v626 = vunpack.c.h.b16 %v431
        %v627 = vunpack.c.l.b16 %v432
        %v628 = vunpack.c.h.b16 %v432
        %v629 = vunpack.c.l.b16 %v433
        %v630 = vunpack.c.h.b16 %v433
        %v631 = vunpack.c.l.b16 %v434
        %v632 = vunpack.c.h.b16 %v434
        %v633 = vunpack.c.l.b16 %v435
        %v634 = vunpack.c.h.b16 %v435
        %v635 = vunpack.c.l.b16 %v436
        %v636 = vunpack.c.h.b16 %v436
        %v637 = vunpack.c.l.b16 %v437
        %v638 = vunpack.c.h.b16 %v437
        %v639 = vunpack.c.l.b16 %v438
        %v640 = vunpack.c.h.b16 %v438
        %v641 = vunpack.c.l.b16 %v439
        %v642 = vunpack.c.h.b16 %v439
        %v643 = vunpack.c.l.b16 %v440
        %v644 = vunpack.c.h.b16 %v440
        %v645 = vunpack.c.l.b16 %v441
        %v646 = vunpack.c.h.b16 %v441
        %v647 = vunpack.c.l.b16 %v442
        %v648 = vunpack.c.h.b16 %v442
        %v649 = vunpack.c.l.b16 %v443
        %v650 = vunpack.c.h.b16 %v443
        %v651 = vunpack.c.l.b16 %v444
        %v652 = vunpack.c.h.b16 %v444
        %v653 = vunpack.c.l.b16 %v445
        %v654 = vunpack.c.h.b16 %v445
        %v655 = vunpack.c.l.b16 %v446
        %v656 = vunpack.c.h.b16 %v446
        %v657 = vunpack.c.l.b16 %v447
        %v658 = vunpack.c.h.b16 %v447
        %v659 = vunpack.c.l.b16 %v448
        %v660 = vunpack.c.h.b16 %v448
        %v661 = vpack.c.b16 %v535, %v533
        %v662 = vpack.c.b16 %v536, %v534
        %v663 = vpack.c.b16 %v539, %v537
        %v664 = vpack.c.b16 %v540, %v538
        %v665 = vpack.c.b16 %v543, %v541
        %v666 = vpack.c.b16 %v544, %v542
        %v667 = vpack.c.b16 %v547, %v545
        %v668 = vpack.c.b16 %v548, %v546
        %v669 = vpack.c.b16 %v551, %v549
        %v670 = vpack.c.b16 %v552, %v550
        %v671 = vpack.c.b16 %v555, %v553
        %v672 = vpack.c.b16 %v556, %v554
        %v673 = vpack.c.b16 %v559, %v557
        %v674 = vpack.c.b16 %v560, %v558
        %v675 = vpack.c.b16 %v563, %v561
        %v676 = vpack.c.b16 %v564, %v562
        %v677 = vpack.c.b16 %v567, %v565
        %v678 = vpack.c.b16 %v568, %v566
        %v679 = vpack.c.b16 %v571, %v569
        %v680 = vpack.c.b16 %v572, %v570
        %v681 = vpack.c.b16 %v575, %v573
        %v682 = vpack.c.b16 %v576, %v574
        %v683 = vpack.c.b16 %v579, %v577
        %v684 = vpack.c.b16 %v580, %v578
        %v685 = vpack.c.b16 %v583, %v581
        %v686 = vpack.c.b16 %v584, %v582
        %v687 = vpack.c.b16 %v587, %v585
        %v688 = vpack.c.b16 %v588, %v586
        %v689 = vpack.c.b16 %v591, %v589
        %v690 = vpack.c.b16 %v592, %v590
        %v691 = vpack.c.b16 %v595, %v593
        %v692 = vpack.c.b16 %v596, %v594
        %v693 = vpack.c.b16 %v599, %v597
        %v694 = vpack.c.b16 %v600, %v598
        %v695 = vpack.c.b16 %v603, %v601
        %v696 = vpack.c.b16 %v604, %v602
        %v697 = vpack.c.b16 %v607, %v605
        %v698 = vpack.c.b16 %v608, %v606
        %v699 = vpack.c.b16 %v611, %v609
        %v700 = vpack.c.b16 %v612, %v610
        %v701 = vpack.c.b16 %v615, %v613
        %v702 = vpack.c.b16 %v616, %v614
        %v703 = vpack.c.b16 %v619, %v617
        %v704 = vpack.c.b16 %v620, %v618
        %v705 = vpack.c.b16 %v623, %v621
        %v706 = vpack.c.b16 %v624, %v622
        %v707 = vpack.c.b16 %v627, %v625
        %v708 = vpack.c.b16 %v628, %v626
        %v709 = vpack.c.b16 %v631, %v629
        %v710 = vpack.c.b16 %v632, %v630
        %v711 = vpack.c.b16 %v635, %v633
        %v712 = vpack.c.b16 %v636, %v634
        %v713 = vpack.c.b16 %v639, %v637
        %v714 = vpack.c.b16 %v640, %v638
        %v715 = vpack.c.b16 %v643, %v641
        %v716 = vpack.c.b16 %v644, %v642
        %v717 = vpack.c.b16 %v647, %v645
        %v718 = vpack.c.b16 %v648, %v646
        %v719 = vpack.c.b16 %v651, %v649
        %v720 = vpack.c.b16 %v652, %v650
        %v721 = vpack.c.b16 %v655, %v653
        %v722 = vpack.c.b16 %v656, %v654
        %v723 = vpack.c.b16 %v659, %v657
        %v724 = vpack.c.b16 %v660, %v658
        %789 = vmatpush.bf16.msra.mxu0 %v675
        %790 = vmatpush.bf16.msra.mxu0 %v673
        %791 = vmatpush.bf16.msra.mxu0 %v671
        %792 = vmatpush.bf16.msra.mxu0 %v669
        %793 = vmatpush.bf16.msra.mxu0 %v667
        %794 = vmatpush.bf16.msra.mxu0 %v665
        %795 = vmatpush.bf16.msra.mxu0 %v663
        %796 = vmatpush.bf16.msra.mxu0 %v661
        %797 = vmatmul.bf16.gmra.mxu0 %v461
        %v798 = vpop.f32.mrf.mxu0
        %v799 = vadd.f32 0.0, %v798
        %v800 = vpop.f32.mrf.mxu0
        %v801 = vadd.f32 0.0, %v800
        %802 = vdwg.mxu0
        %803 = vmatpush.bf16.msra.mxu0 %v691
        %804 = vmatpush.bf16.msra.mxu0 %v689
        %805 = vmatpush.bf16.msra.mxu0 %v687
        %806 = vmatpush.bf16.msra.mxu0 %v685
        %807 = vmatpush.bf16.msra.mxu0 %v683
        %808 = vmatpush.bf16.msra.mxu0 %v681
        %809 = vmatpush.bf16.msra.mxu0 %v679
        %810 = vmatpush.bf16.msra.mxu0 %v677
        %811 = vmatmul.bf16.gmra.mxu0 %v462
        %v812 = vpop.f32.mrf.mxu0
        %v813 = vadd.f32 %v799, %v812
        %v814 = vpop.f32.mrf.mxu0
        %v815 = vadd.f32 %v801, %v814
        %816 = vdwg.mxu0
        %817 = vmatpush.bf16.msra.mxu0 %v707
        %818 = vmatpush.bf16.msra.mxu0 %v705
        %819 = vmatpush.bf16.msra.mxu0 %v703
        %820 = vmatpush.bf16.msra.mxu0 %v701
        %821 = vmatpush.bf16.msra.mxu0 %v699
        %822 = vmatpush.bf16.msra.mxu0 %v697
        %823 = vmatpush.bf16.msra.mxu0 %v695
        %824 = vmatpush.bf16.msra.mxu0 %v693
        %825 = vmatmul.bf16.gmra.mxu0 %v463
        %v826 = vpop.f32.mrf.mxu0
        %v827 = vadd.f32 %v813, %v826
        %v828 = vpop.f32.mrf.mxu0
        %v829 = vadd.f32 %v815, %v828
        %830 = vdwg.mxu0
        %831 = vmatpush.bf16.msra.mxu0 %v723
        %832 = vmatpush.bf16.msra.mxu0 %v721
        %833 = vmatpush.bf16.msra.mxu0 %v719
        %834 = vmatpush.bf16.msra.mxu0 %v717
        %835 = vmatpush.bf16.msra.mxu0 %v715
        %836 = vmatpush.bf16.msra.mxu0 %v713
        %837 = vmatpush.bf16.msra.mxu0 %v711
        %838 = vmatpush.bf16.msra.mxu0 %v709
        %839 = vmatmul.bf16.gmra.mxu0 %v464
        %v840 = vpop.f32.mrf.mxu0
        %v841 = vadd.f32 %v827, %v840
        %v842 = vpop.f32.mrf.mxu0
        %v843 = vadd.f32 %v829, %v842
        %844 = vdwg.mxu0
        %845 = vmatpush.bf16.msra.mxu0 %v676
        %846 = vmatpush.bf16.msra.mxu0 %v674
        %847 = vmatpush.bf16.msra.mxu0 %v672
        %848 = vmatpush.bf16.msra.mxu0 %v670
        %849 = vmatpush.bf16.msra.mxu0 %v668
        %850 = vmatpush.bf16.msra.mxu0 %v666
        %851 = vmatpush.bf16.msra.mxu0 %v664
        %852 = vmatpush.bf16.msra.mxu0 %v662
        %853 = vmatmul.bf16.gmra.mxu0 %v461
        %v854 = vpop.f32.mrf.mxu0
        %v855 = vadd.f32 0.0, %v854
        %v856 = vpop.f32.mrf.mxu0
        %v857 = vadd.f32 0.0, %v856
        %858 = vdwg.mxu0
        %859 = vmatpush.bf16.msra.mxu0 %v692
        %860 = vmatpush.bf16.msra.mxu0 %v690
        %861 = vmatpush.bf16.msra.mxu0 %v688
        %862 = vmatpush.bf16.msra.mxu0 %v686
        %863 = vmatpush.bf16.msra.mxu0 %v684
        %864 = vmatpush.bf16.msra.mxu0 %v682
        %865 = vmatpush.bf16.msra.mxu0 %v680
        %866 = vmatpush.bf16.msra.mxu0 %v678
        %867 = vmatmul.bf16.gmra.mxu0 %v462
        %v868 = vpop.f32.mrf.mxu0
        %v869 = vadd.f32 %v855, %v868
        %v870 = vpop.f32.mrf.mxu0
        %v871 = vadd.f32 %v857, %v870
        %872 = vdwg.mxu0
        %873 = vmatpush.bf16.msra.mxu0 %v708
        %874 = vmatpush.bf16.msra.mxu0 %v706
        %875 = vmatpush.bf16.msra.mxu0 %v704
        %876 = vmatpush.bf16.msra.mxu0 %v702
        %877 = vmatpush.bf16.msra.mxu0 %v700
        %878 = vmatpush.bf16.msra.mxu0 %v698
        %879 = vmatpush.bf16.msra.mxu0 %v696
        %880 = vmatpush.bf16.msra.mxu0 %v694
        %881 = vmatmul.bf16.gmra.mxu0 %v463
        %v882 = vpop.f32.mrf.mxu0
        %v883 = vadd.f32 %v869, %v882
        %v884 = vpop.f32.mrf.mxu0
        %v885 = vadd.f32 %v871, %v884
        %886 = vdwg.mxu0
        %887 = vmatpush.bf16.msra.mxu0 %v724
        %888 = vmatpush.bf16.msra.mxu0 %v722
        %889 = vmatpush.bf16.msra.mxu0 %v720
        %890 = vmatpush.bf16.msra.mxu0 %v718
        %891 = vmatpush.bf16.msra.mxu0 %v716
        %892 = vmatpush.bf16.msra.mxu0 %v714
        %893 = vmatpush.bf16.msra.mxu0 %v712
        %894 = vmatpush.bf16.msra.mxu0 %v710
        %895 = vmatmul.bf16.gmra.mxu0 %v464
        %v896 = vpop.f32.mrf.mxu0
        %v897 = vadd.f32 %v883, %v896
        %v898 = vpop.f32.mrf.mxu0
        %v899 = vadd.f32 %v885, %v898
        %900 = vdwg.mxu0
        %v901 = vadd.f32 %v377, %v841
        %v902 = vadd.f32 %v378, %v897
        %v903 = vadd.f32 %v379, %v843
        %v904 = vadd.f32 %v380, %v899
        %905 = vst [vmem:[#allocation2] sm:$0xff] %v901
        %906 = vst [vmem:[#allocation2 + $0x8] sm:$0xff] %v902
        %907 = vst [vmem:[#allocation2 + $0x10] sm:$0xff] %v903
        %908 = vst [vmem:[#allocation2 + $0x18] sm:$0xff] %v904
        %p909 = scmp.eq.s32.totalorder %s25, 1
        // Predicated region
        $region76: #{coordinate_transformer_forward.13} parent=62 // pred_check
          %p910 = pneg %p909
        $region77: #{coordinate_transformer_forward.13} parent=62 // pred_check_branch
          %912 = sbr.rel (%p910) target = $region79
        $region78: #{coordinate_transformer_forward.13} parent=62 // pred_region
          %v913 = vld [vmem:[#allocation2] sm:$0xff]
          %v914 = vld [vmem:[#allocation2 + $0x8] sm:$0xff]
          %v915 = vld [vmem:[#allocation2 + $0x10] sm:$0xff]
          %v916 = vld [vmem:[#allocation2 + $0x18] sm:$0xff]
          %v917 = vld [vmem:[%s2] sm:$0x3]
          %v919 = vperm.slane %v917, 0
          %v920 = vperm.slane %v917, 1
          %v923 = vadd.f32 %v913, %v919
          %v924 = vadd.f32 %v914, %v920
          %v925 = vadd.f32 %v915, %v919
          %v926 = vadd.f32 %v916, %v920
          %v927 = vld [vmem:[%s360] sm:$0xff]
          %v928 = vld [vmem:[%s360 + $0x8] sm:$0xff]
          %v929 = vunpack.c.l.bf16 %v927
          %v930 = vunpack.c.h.bf16 %v927
          %v931 = vunpack.c.l.bf16 %v928
          %v932 = vunpack.c.h.bf16 %v928
          %v933 = vadd.f32 %v923, %v929
          %v934 = vadd.f32 %v924, %v930
          %v935 = vadd.f32 %v925, %v931
          %v936 = vadd.f32 %v926, %v932
          %v937 = vadd.f32 %v933, %v934
          %938 = vadd.xlane.f32.xlu0 %v937
          %v939 = vpop.xlane.xlu0 %938
          %v940 = vadd.f32 %v935, %v936
          %941 = vadd.xlane.f32.xlu0 %v940
          %v942 = vpop.xlane.xlu0 %941
          %v943 = vrcp.pop 256.0
          %v944 = vmul.f32 256.0, %v943
          %v945 = vsub.f32 1.0, %v944
          %v946 = vmul.f32 %v943, %v945
          %v947 = vadd.f32 %v943, %v946
          %vm948 = vweird.f32 %v943
          %v949 = vsel %vm948, %v943, %v947
          %v950 = vmul.f32 %v939, %v949
          %v951 = vmul.f32 %v942, %v949
          %v952 = vsub.f32 %v933, %v950
          %v953 = vsub.f32 %v934, %v950
          %v954 = vsub.f32 %v935, %v951
          %v955 = vsub.f32 %v936, %v951
          %v956 = vmul.f32 %v952, %v952
          %v957 = vmul.f32 %v953, %v953
          %v958 = vmul.f32 %v954, %v954
          %v959 = vmul.f32 %v955, %v955
          %v960 = vadd.f32 %v956, %v957
          %961 = vadd.xlane.f32.xlu0 %v960
          %v962 = vpop.xlane.xlu0 %961
          %v963 = vadd.f32 %v958, %v959
          %964 = vadd.xlane.f32.xlu0 %v963
          %v965 = vpop.xlane.xlu0 %964
          %v966 = vmul.f32 %v962, %v949
          %v967 = vmul.f32 %v965, %v949
          %v968 = vadd.f32 %v966, 1e-05
          %v969 = vadd.f32 %v967, 1e-05
          %v970 = vrsqrt.pop %v968
          %v971 = vmul.f32 %v970, %v968
          %v972 = vmul.f32 %v971, %v970
          %v973 = vmul.f32 0.5, %v972
          %v974 = vsub.f32 1.5, %v973
          %v975 = vmul.f32 %v970, %v974
          %vm976 = vweird.f32 %v968
          %vm977 = vweird.f32 %v970
          %vm978 = vmor %vm976, %vm977
          %v979 = vsel %vm978, %v970, %v975
          %v980 = vrsqrt.pop %v969
          %v981 = vmul.f32 %v980, %v969
          %v982 = vmul.f32 %v981, %v980
          %v983 = vmul.f32 0.5, %v982
          %v984 = vsub.f32 1.5, %v983
          %v985 = vmul.f32 %v980, %v984
          %vm986 = vweird.f32 %v969
          %vm987 = vweird.f32 %v980
          %vm988 = vmor %vm986, %vm987
          %v989 = vsel %vm988, %v980, %v985
          %v990 = vmul.f32 %v952, %v979
          %v991 = vmul.f32 %v953, %v979
          %v992 = vmul.f32 %v954, %v989
          %v993 = vmul.f32 %v955, %v989
          %v994 = vld [vmem:[%s4] sm:$0x3]
          %v996 = vperm.slane %v994, 0
          %v997 = vperm.slane %v994, 1
          %v1000 = vmul.f32 %v990, %v996
          %v1001 = vmul.f32 %v991, %v997
          %v1002 = vmul.f32 %v992, %v996
          %v1003 = vmul.f32 %v993, %v997
          %v1004 = vld [vmem:[%s5] sm:$0x3]
          %v1006 = vperm.slane %v1004, 0
          %v1007 = vperm.slane %v1004, 1
          %v1010 = vadd.f32 %v1000, %v1006
          %v1011 = vadd.f32 %v1001, %v1007
          %v1012 = vadd.f32 %v1002, %v1006
          %v1013 = vadd.f32 %v1003, %v1007
          %v1014 = vpack.c.bf16 %v1011, %v1010
          %v1015 = vpack.c.bf16 %v1013, %v1012
          %1016 = vst [vmem:[%s367] sm:$0xff] %v1014
          %1017 = vst [vmem:[%s367 + $0x8] sm:$0xff] %v1015
        $region79: #{coordinate_transformer_forward.13} parent=62 // pred_fallthru
          _
        %s1018 = smul.u32 2, %s24
        %p1019 = scmp.lt.s32.totalorder %s1018, 1
        %s1020 = scalar_select %p1019, %s1018, 1
        %s1021 = smul.addr %s1020, 2
        %s1022 = smul.addr %s1021, 4
        %s1023 = scalar_lea.vmem %s6, %s1022
        // Predicated region
        $region80: #{coordinate_transformer_forward.13} parent=62 // pred_check
          %p1024 = pneg %p193
        $region81: #{coordinate_transformer_forward.13} parent=62 // pred_check_branch
          %1026 = sbr.rel (%p1024) target = $region83
        $region82: #{coordinate_transformer_forward.13} parent=62 // pred_region
          %s1027 = smul.u32 2, %s24
        $region83: #{coordinate_transformer_forward.13} parent=62 // pred_fallthru
          _
        // Predicated region
        $region84: #{coordinate_transformer_forward.13} parent=62 // pred_check
          %p1028 = pneg %p193
        $region85: #{coordinate_transformer_forward.13} parent=62 // pred_check_branch
          %1030 = sbr.rel (%p1028) target = $region87
        $region86: #{coordinate_transformer_forward.13} parent=62 // pred_region
          %s1031 = smul.u32 2, %s24
          %p1032 = scmp.lt.s32.totalorder %s1031, 1
          %s1033 = scalar_select %p1032, %s1031, 1
          %s1034 = smul.addr %s1033, 2
          %s1035 = smul.addr %s1034, 4
          %s1036 = scalar_lea.vmem %s6, %s1035
        $region87: #{coordinate_transformer_forward.13} parent=62 // pred_fallthru
          _
      $region63: #{coordinate_transformer_forward.13} parent=5 // pred_fallthru
        _
      %p1037 = scmp.le.s32.totalorder 2, %s15
      // Predicated region
      $region88: #{coordinate_transformer_forward.13} parent=5 // pred_check
        %p1038 = pneg %p1037
      $region89: #{coordinate_transformer_forward.13} parent=5 // pred_check_branch
        %1040 = sbr.rel (%p1038) target = $region91
      $region90: #{coordinate_transformer_forward.13} parent=5 // pred_region
        %s1041 = ssub.s32 %s15, 2
      $region91: #{coordinate_transformer_forward.13} parent=5 // pred_fallthru
        _
    $region6: #{coordinate_transformer_forward.13} parent=1 // loop_footer
      %s19 = sadd.s32 1, %s15
    $region7: #{coordinate_transformer_forward.13} parent=1 // loop_footer_branch
      %14 = sbr.rel target = $region3
    $region8: #{coordinate_transformer_forward.13} parent=1 // loop_exit
      _
    %1042 = vsyncpa [#allocation5], 1
    %s1043 = scalar_lea.sflag [#allocation5], 1
    %1044 = vsyncpa %s1043, 1

</llo_original>
